<compile_context>
chip_gen: v6e
topology: v6e:2x2x1
jax: 0.10.0
libtpu: 0.0.40
codegen_flags: <defaults>
</compile_context>

<pallas_src>
import functools

import jax
import jax.numpy as jnp
import numpy as np
from jax.experimental import pallas as pl
from jax.experimental.pallas import tpu as pltpu

# Small, module-consistent sizes.
Z_SIZE = 32       # z_size
HIDDEN = 32       # hidden_n
FEATS = 12        # feature_len (output_feature_size)
SEQ = 8           # max_seq_length
BATCH = 4
B_PAD = 8         # batch padded to full sublane height
EPS = 1e-5        # BatchNorm eps (PyTorch default)


def _sigmoid(x):
    # tanh-form sigmoid: single EUP op, no exp + divide.
    return 0.5 * (jnp.tanh(0.5 * x) + 1.0)


def decoder_kernel(enc_ref, h1_ref, h2_ref, h3_ref,
                   bn_ref,                      # (4, 1, Z): gamma, beta, mean, var
                   w_in_ref, b_in_ref,          # (Z, H), (1, H)
                   w_ih0_ref, b_ih0_ref,        # (H, 3H), (1, 3H)   layer 0, input gates
                   w_hh0_ref, b_hh0_ref,        # (H, 3H), (1, 3H)   layer 0, hidden gates
                   wf_ref, bf_ref,              # (2, 2H, 4H), (2, 1, 4H)  fused layers 1,2
                   w_out_ref, b_out_ref,        # (H, F), (1, F)
                   out_ref, h1o_ref, h2o_ref, h3o_ref,
                   stash_ref,                   # VMEM scratch (SEQ*Bp, H)
                   *, seq_len, hidden_n):
    H = hidden_n
    gamma, beta, mean, var = bn_ref[0], bn_ref[1], bn_ref[2], bn_ref[3]

    # BatchNorm1d (eval) + Linear + ReLU -> time-invariant embedding.
    x = enc_ref[...]
    xn = (x - mean) * jax.lax.rsqrt(var + EPS) * gamma + beta
    emb = jnp.dot(xn, w_in_ref[...], preferred_element_type=jnp.float32) + b_in_ref[...]
    emb = jnp.maximum(emb, 0.0)

    # Hoisted layer-0 input-gate GEMM (emb is the same for every t).
    gi0 = jnp.dot(emb, w_ih0_ref[...],
                  preferred_element_type=jnp.float32) + b_ih0_ref[...]

    h0 = h1_ref[...]
    h1 = h2_ref[...]
    h2 = h3_ref[...]

    def gru0(h_prev):
        # layer 0: only the hidden-gate GEMM is per-step.
        gh = jnp.dot(h_prev, w_hh0_ref[...],
                     preferred_element_type=jnp.float32) + b_hh0_ref[...]
        r = _sigmoid(gi0[:, :H] + gh[:, :H])
        z = _sigmoid(gi0[:, H:2 * H] + gh[:, H:2 * H])
        n = jnp.tanh(gi0[:, 2 * H:3 * H] + r * gh[:, 2 * H:3 * H])
        return (1.0 - z) * n + z * h_prev

    def gru_fused(x_t, h_prev, l):
        # single (B,2H)@(2H,4H) matmul; columns [r | z | n_x | n_h].
        xh = jnp.concatenate([x_t, h_prev], axis=-1)
        g = jnp.dot(xh, wf_ref[l], preferred_element_type=jnp.float32) + bf_ref[l]
        r = _sigmoid(g[:, :H])
        z = _sigmoid(g[:, H:2 * H])
        n = jnp.tanh(g[:, 2 * H:3 * H] + r * g[:, 3 * H:4 * H])
        return (1.0 - z) * n + z * h_prev

    # Sequential recurrence over time; short static trip-count -> unrolled.
    Bp = h1_ref.shape[0]
    for t in range(seq_len):
        h0 = gru0(h0)
        h1 = gru_fused(h0, h1, 0)
        h2 = gru_fused(h1, h2, 1)
        stash_ref[t * Bp:(t + 1) * Bp, :] = h2

    # Batched output projection + softmax + one lane-dense store.
    h_all = stash_ref[...]                                   # (SEQ*Bp, H)
    logits = jnp.dot(h_all, w_out_ref[...],
                     preferred_element_type=jnp.float32) + b_out_ref[...]
    m = jnp.max(logits, axis=-1, keepdims=True)
    e = jnp.exp(logits - m)
    out_ref[...] = e / jnp.sum(e, axis=-1, keepdims=True)    # (SEQ*Bp, F)

    h1o_ref[...] = h0
    h2o_ref[...] = h1
    h3o_ref[...] = h2


def _fuse_gru_weights(w_ih, w_hh, b_ih, b_hh):
    """(H,3H)x2 / (1,3H)x2 -> (2H,4H) / (1,4H) with columns [r | z | n_x | n_h]."""
    H = w_ih.shape[0]
    zero = jnp.zeros((H, H), w_ih.dtype)
    top = jnp.concatenate([w_ih[:, :2 * H], w_ih[:, 2 * H:], zero], axis=1)
    bot = jnp.concatenate([w_hh[:, :2 * H], zero, w_hh[:, 2 * H:]], axis=1)
    wf = jnp.concatenate([top, bot], axis=0)
    bf = jnp.concatenate([b_ih[:, :2 * H] + b_hh[:, :2 * H],
                          b_ih[:, 2 * H:], b_hh[:, 2 * H:]], axis=1)
    return wf, bf


def decoder_forward(encoded, h1, h2, h3, params):
    """encoded: (B, Z); h1/h2/h3: (1, B, H) as in PyTorch GRU hidden layout."""
    B = encoded.shape[0]
    assert B <= B_PAD
    pad = B_PAD - B
    enc_p = jnp.pad(encoded, ((0, pad), (0, 0)))
    h1_p = jnp.pad(h1[0], ((0, pad), (0, 0)))
    h2_p = jnp.pad(h2[0], ((0, pad), (0, 0)))
    h3_p = jnp.pad(h3[0], ((0, pad), (0, 0)))

    wf1, bf1 = _fuse_gru_weights(params["w_ih"][1], params["w_hh"][1],
                                 params["b_ih"][1], params["b_hh"][1])
    wf2, bf2 = _fuse_gru_weights(params["w_ih"][2], params["w_hh"][2],
                                 params["b_ih"][2], params["b_hh"][2])
    wf = jnp.stack([wf1, wf2], axis=0)     # (2, 2H, 4H)
    bf = jnp.stack([bf1, bf2], axis=0)     # (2, 1, 4H)

    kernel = functools.partial(decoder_kernel, seq_len=SEQ, hidden_n=HIDDEN)
    vmem = pl.BlockSpec(memory_space=pltpu.MemorySpace.VMEM)

    inputs = (enc_p, h1_p, h2_p, h3_p,
              params["bn"],
              params["w_in"], params["b_in"],
              params["w_ih"][0], params["b_ih"][0],
              params["w_hh"][0], params["b_hh"][0],
              wf, bf,
              params["w_out"], params["b_out"])

    out_shape = (jax.ShapeDtypeStruct((SEQ * B_PAD, FEATS), jnp.float32),
                 jax.ShapeDtypeStruct((B_PAD, HIDDEN), jnp.float32),
                 jax.ShapeDtypeStruct((B_PAD, HIDDEN), jnp.float32),
                 jax.ShapeDtypeStruct((B_PAD, HIDDEN), jnp.float32))

    # Gridless single invocation: the whole working set is a few tens of KiB.
    # (On v7x the second TensorCore stays idle; add a batch grid with
    # dimension_semantics=("parallel",) only if B grows large.)
    out_flat, nh1, nh2, nh3 = pl.pallas_call(
        kernel,
        out_shape=out_shape,
        in_specs=[vmem] * len(inputs),
        out_specs=(vmem, vmem, vmem, vmem),
        scratch_shapes=[pltpu.VMEM((SEQ * B_PAD, HIDDEN), jnp.float32)],
    )(*inputs)

    out = out_flat.reshape(SEQ, B_PAD, FEATS).transpose(1, 0, 2)[:B]
    return out, nh1[:B][None], nh2[:B][None], nh3[:B][None]


def make_params(key):
    ks = jax.random.split(key, 12)
    k_bn, k_win, k_bin, k_wih, k_whh, k_bih, k_bhh, k_wout, k_bout, k_g, k_m, k_v = ks
    s = 0.1
    gamma = 1.0 + s * jax.random.normal(k_g, (1, Z_SIZE), jnp.float32)
    beta = s * jax.random.normal(k_bn, (1, Z_SIZE), jnp.float32)
    mean = s * jax.random.normal(k_m, (1, Z_SIZE), jnp.float32)
    var = 0.5 + jnp.abs(jax.random.normal(k_v, (1, Z_SIZE), jnp.float32)) * 0.5
    return {
        "bn": jnp.stack([gamma, beta, mean, var], axis=0),           # (4,1,Z)
        "w_in": s * jax.random.normal(k_win, (Z_SIZE, HIDDEN), jnp.float32),
        "b_in": s * jax.random.normal(k_bin, (1, HIDDEN), jnp.float32),
        "w_ih": s * jax.random.normal(k_wih, (3, HIDDEN, 3 * HIDDEN), jnp.float32),
        "w_hh": s * jax.random.normal(k_whh, (3, HIDDEN, 3 * HIDDEN), jnp.float32),
        "b_ih": s * jax.random.normal(k_bih, (3, 1, 3 * HIDDEN), jnp.float32),
        "b_hh": s * jax.random.normal(k_bhh, (3, 1, 3 * HIDDEN), jnp.float32),
        "w_out": s * jax.random.normal(k_wout, (HIDDEN, FEATS), jnp.float32),
        "b_out": s * jax.random.normal(k_bout, (1, FEATS), jnp.float32),
    }


def reference_forward(encoded, h1, h2, h3, p):
    gamma, beta, mean, var = p["bn"][0], p["bn"][1], p["bn"][2], p["bn"][3]
    xn = (encoded - mean) / jnp.sqrt(var + EPS) * gamma + beta
    emb = jnp.maximum(xn @ p["w_in"] + p["b_in"], 0.0)
    hs = [h1[0], h2[0], h3[0]]

    def gru(x, h, l):
        gi = x @ p["w_ih"][l] + p["b_ih"][l]
        gh = h @ p["w_hh"][l] + p["b_hh"][l]
        H = HIDDEN
        r = jax.nn.sigmoid(gi[:, :H] + gh[:, :H])
        z = jax.nn.sigmoid(gi[:, H:2 * H] + gh[:, H:2 * H])
        n = jnp.tanh(gi[:, 2 * H:] + r * gh[:, 2 * H:])
        return (1.0 - z) * n + z * h

    outs = []
    for _ in range(SEQ):
        hs[0] = gru(emb, hs[0], 0)
        hs[1] = gru(hs[0], hs[1], 1)
        hs[2] = gru(hs[1], hs[2], 2)
        logits = hs[2] @ p["w_out"] + p["b_out"]
        outs.append(jax.nn.softmax(logits, axis=-1))
    out = jnp.stack(outs, axis=1)
    return out, hs[0][None], hs[1][None], hs[2][None]


if __name__ == "__main__":
    key = jax.random.PRNGKey(0)
    k_enc, k_params = jax.random.split(key)
    params = make_params(k_params)

    encoded = jax.random.normal(k_enc, (BATCH, Z_SIZE), jnp.float32)
    h1 = jnp.zeros((1, BATCH, HIDDEN), jnp.float32)
    h2 = jnp.zeros((1, BATCH, HIDDEN), jnp.float32)
    h3 = jnp.zeros((1, BATCH, HIDDEN), jnp.float32)

    out, nh1, nh2, nh3 = decoder_forward(encoded, h1, h2, h3, params)
    jax.block_until_ready((out, nh1, nh2, nh3))

    ref_out, ref_h1, ref_h2, ref_h3 = reference_forward(encoded, h1, h2, h3, params)
    # Slightly looser than before: tanh-form sigmoid and the fused-GEMM
    # summation order shift results by O(1e-6) vs. the exact reference.
    np.testing.assert_allclose(np.asarray(out), np.asarray(ref_out), rtol=2e-4, atol=2e-5)
    np.testing.assert_allclose(np.asarray(nh1), np.asarray(ref_h1), rtol=2e-4, atol=2e-5)
    np.testing.assert_allclose(np.asarray(nh2), np.asarray(ref_h2), rtol=2e-4, atol=2e-5)
    np.testing.assert_allclose(np.asarray(nh3), np.asarray(ref_h3), rtol=2e-4, atol=2e-5)

    print("KERNEL_OK")
</pallas_src>

<mosaic_0001>
module attributes {stable_mosaic.version = 11 : i64} {
  func.func @decoder_kernel(%arg0: memref<8x32xf32, #tpu.memory_space<vmem>>, %arg1: memref<8x32xf32, #tpu.memory_space<vmem>>, %arg2: memref<8x32xf32, #tpu.memory_space<vmem>>, %arg3: memref<8x32xf32, #tpu.memory_space<vmem>>, %arg4: memref<4x1x32xf32, #tpu.memory_space<vmem>>, %arg5: memref<32x32xf32, #tpu.memory_space<vmem>>, %arg6: memref<1x32xf32, #tpu.memory_space<vmem>>, %arg7: memref<32x96xf32, #tpu.memory_space<vmem>>, %arg8: memref<1x96xf32, #tpu.memory_space<vmem>>, %arg9: memref<32x96xf32, #tpu.memory_space<vmem>>, %arg10: memref<1x96xf32, #tpu.memory_space<vmem>>, %arg11: memref<2x64x128xf32, #tpu.memory_space<vmem>>, %arg12: memref<2x1x128xf32, #tpu.memory_space<vmem>>, %arg13: memref<32x12xf32, #tpu.memory_space<vmem>>, %arg14: memref<1x12xf32, #tpu.memory_space<vmem>>, %arg15: memref<64x12xf32, #tpu.memory_space<vmem>>, %arg16: memref<8x32xf32, #tpu.memory_space<vmem>>, %arg17: memref<8x32xf32, #tpu.memory_space<vmem>>, %arg18: memref<8x32xf32, #tpu.memory_space<vmem>>, %arg19: memref<64x32xf32, #tpu.memory_space<vmem>>) attributes {dimension_semantics = [], scalar_prefetch = 0 : i64, scratch_operands = 1 : i64, tpu.core_type = #tpu.core_type<tc>} {
    %c0 = arith.constant 0 : index
    %c0_0 = arith.constant 0 : index
    %c0_1 = arith.constant 0 : index
    %0 = vector.load %arg4[%c0, %c0_0, %c0_1] : memref<4x1x32xf32, #tpu.memory_space<vmem>>, vector<1x1x32xf32>
    %1 = vector.shape_cast %0 : vector<1x1x32xf32> to vector<1x32xf32>
    %c1 = arith.constant 1 : index
    %c0_2 = arith.constant 0 : index
    %c0_3 = arith.constant 0 : index
    %2 = vector.load %arg4[%c1, %c0_2, %c0_3] : memref<4x1x32xf32, #tpu.memory_space<vmem>>, vector<1x1x32xf32>
    %3 = vector.shape_cast %2 : vector<1x1x32xf32> to vector<1x32xf32>
    %c2 = arith.constant 2 : index
    %c0_4 = arith.constant 0 : index
    %c0_5 = arith.constant 0 : index
    %4 = vector.load %arg4[%c2, %c0_4, %c0_5] : memref<4x1x32xf32, #tpu.memory_space<vmem>>, vector<1x1x32xf32>
    %5 = vector.shape_cast %4 : vector<1x1x32xf32> to vector<1x32xf32>
    %c3 = arith.constant 3 : index
    %c0_6 = arith.constant 0 : index
    %c0_7 = arith.constant 0 : index
    %6 = vector.load %arg4[%c3, %c0_6, %c0_7] : memref<4x1x32xf32, #tpu.memory_space<vmem>>, vector<1x1x32xf32>
    %7 = vector.shape_cast %6 : vector<1x1x32xf32> to vector<1x32xf32>
    %c0_8 = arith.constant 0 : index
    %c0_9 = arith.constant 0 : index
    %8 = vector.load %arg0[%c0_8, %c0_9] : memref<8x32xf32, #tpu.memory_space<vmem>>, vector<8x32xf32>
    %9 = vector.broadcast %5 : vector<1x32xf32> to vector<8x32xf32>
    %10 = arith.subf %8, %9 : vector<8x32xf32>
    %cst = arith.constant 9.99999974E-6 : f32
    %11 = vector.broadcast %cst : f32 to vector<1x32xf32>
    %12 = arith.addf %7, %11 : vector<1x32xf32>
    %13 = math.rsqrt %12 : vector<1x32xf32>
    %14 = vector.broadcast %13 : vector<1x32xf32> to vector<8x32xf32>
    %15 = arith.mulf %10, %14 : vector<8x32xf32>
    %16 = vector.broadcast %1 : vector<1x32xf32> to vector<8x32xf32>
    %17 = arith.mulf %15, %16 : vector<8x32xf32>
    %18 = vector.broadcast %3 : vector<1x32xf32> to vector<8x32xf32>
    %19 = arith.addf %17, %18 : vector<8x32xf32>
    %c0_10 = arith.constant 0 : index
    %c0_11 = arith.constant 0 : index
    %20 = vector.load %arg5[%c0_10, %c0_11] : memref<32x32xf32, #tpu.memory_space<vmem>>, vector<32x32xf32>
    %cst_12 = arith.constant dense<0.000000e+00> : vector<8x32xf32>
    %21 = tpu.matmul %19, %20, %cst_12 {dimension_numbers = #tpu.dot_dimension_numbers<[1], [0], [0], [1], [0, 0, 1, 1], [], []>} : vector<8x32xf32>, vector<32x32xf32>, vector<8x32xf32> -> vector<8x32xf32>
    %c0_13 = arith.constant 0 : index
    %c0_14 = arith.constant 0 : index
    %22 = vector.load %arg6[%c0_13, %c0_14] : memref<1x32xf32, #tpu.memory_space<vmem>>, vector<1x32xf32>
    %23 = vector.broadcast %22 : vector<1x32xf32> to vector<8x32xf32>
    %24 = arith.addf %21, %23 : vector<8x32xf32>
    %cst_15 = arith.constant 0.000000e+00 : f32
    %25 = vector.broadcast %cst_15 : f32 to vector<8x32xf32>
    %26 = arith.maximumf %24, %25 : vector<8x32xf32>
    %c0_16 = arith.constant 0 : index
    %c0_17 = arith.constant 0 : index
    %27 = vector.load %arg7[%c0_16, %c0_17] : memref<32x96xf32, #tpu.memory_space<vmem>>, vector<32x96xf32>
    %cst_18 = arith.constant dense<0.000000e+00> : vector<8x96xf32>
    %28 = tpu.matmul %26, %27, %cst_18 {dimension_numbers = #tpu.dot_dimension_numbers<[1], [0], [0], [1], [0, 0, 1, 1], [], []>} : vector<8x32xf32>, vector<32x96xf32>, vector<8x96xf32> -> vector<8x96xf32>
    %c0_19 = arith.constant 0 : index
    %c0_20 = arith.constant 0 : index
    %29 = vector.load %arg8[%c0_19, %c0_20] : memref<1x96xf32, #tpu.memory_space<vmem>>, vector<1x96xf32>
    %30 = vector.broadcast %29 : vector<1x96xf32> to vector<8x96xf32>
    %31 = arith.addf %28, %30 : vector<8x96xf32>
    %c0_21 = arith.constant 0 : index
    %c0_22 = arith.constant 0 : index
    %32 = vector.load %arg1[%c0_21, %c0_22] : memref<8x32xf32, #tpu.memory_space<vmem>>, vector<8x32xf32>
    %c0_23 = arith.constant 0 : index
    %c0_24 = arith.constant 0 : index
    %33 = vector.load %arg2[%c0_23, %c0_24] : memref<8x32xf32, #tpu.memory_space<vmem>>, vector<8x32xf32>
    %c0_25 = arith.constant 0 : index
    %c0_26 = arith.constant 0 : index
    %34 = vector.load %arg3[%c0_25, %c0_26] : memref<8x32xf32, #tpu.memory_space<vmem>>, vector<8x32xf32>
    %c0_27 = arith.constant 0 : index
    %c0_28 = arith.constant 0 : index
    %35 = vector.load %arg9[%c0_27, %c0_28] : memref<32x96xf32, #tpu.memory_space<vmem>>, vector<32x96xf32>
    %cst_29 = arith.constant dense<0.000000e+00> : vector<8x96xf32>
    %36 = tpu.matmul %32, %35, %cst_29 {dimension_numbers = #tpu.dot_dimension_numbers<[1], [0], [0], [1], [0, 0, 1, 1], [], []>} : vector<8x32xf32>, vector<32x96xf32>, vector<8x96xf32> -> vector<8x96xf32>
    %c0_30 = arith.constant 0 : index
    %c0_31 = arith.constant 0 : index
    %37 = vector.load %arg10[%c0_30, %c0_31] : memref<1x96xf32, #tpu.memory_space<vmem>>, vector<1x96xf32>
    %38 = vector.broadcast %37 : vector<1x96xf32> to vector<8x96xf32>
    %39 = arith.addf %36, %38 : vector<8x96xf32>
    %40 = vector.extract_strided_slice %31 {offsets = [0, 0], sizes = [8, 32], strides = [1, 1]} : vector<8x96xf32> to vector<8x32xf32>
    %41 = vector.extract_strided_slice %39 {offsets = [0, 0], sizes = [8, 32], strides = [1, 1]} : vector<8x96xf32> to vector<8x32xf32>
    %42 = arith.addf %40, %41 : vector<8x32xf32>
    %cst_32 = arith.constant 5.000000e-01 : f32
    %43 = vector.broadcast %cst_32 : f32 to vector<8x32xf32>
    %44 = arith.mulf %43, %42 : vector<8x32xf32>
    %45 = math.tanh %44 : vector<8x32xf32>
    %cst_33 = arith.constant 1.000000e+00 : f32
    %46 = vector.broadcast %cst_33 : f32 to vector<8x32xf32>
    %47 = arith.addf %45, %46 : vector<8x32xf32>
    %cst_34 = arith.constant 5.000000e-01 : f32
    %48 = vector.broadcast %cst_34 : f32 to vector<8x32xf32>
    %49 = arith.mulf %48, %47 : vector<8x32xf32>
    %50 = vector.extract_strided_slice %31 {offsets = [0, 32], sizes = [8, 32], strides = [1, 1]} : vector<8x96xf32> to vector<8x32xf32>
    %51 = vector.extract_strided_slice %39 {offsets = [0, 32], sizes = [8, 32], strides = [1, 1]} : vector<8x96xf32> to vector<8x32xf32>
    %52 = arith.addf %50, %51 : vector<8x32xf32>
    %cst_35 = arith.constant 5.000000e-01 : f32
    %53 = vector.broadcast %cst_35 : f32 to vector<8x32xf32>
    %54 = arith.mulf %53, %52 : vector<8x32xf32>
    %55 = math.tanh %54 : vector<8x32xf32>
    %cst_36 = arith.constant 1.000000e+00 : f32
    %56 = vector.broadcast %cst_36 : f32 to vector<8x32xf32>
    %57 = arith.addf %55, %56 : vector<8x32xf32>
    %cst_37 = arith.constant 5.000000e-01 : f32
    %58 = vector.broadcast %cst_37 : f32 to vector<8x32xf32>
    %59 = arith.mulf %58, %57 : vector<8x32xf32>
    %60 = vector.extract_strided_slice %31 {offsets = [0, 64], sizes = [8, 32], strides = [1, 1]} : vector<8x96xf32> to vector<8x32xf32>
    %61 = vector.extract_strided_slice %39 {offsets = [0, 64], sizes = [8, 32], strides = [1, 1]} : vector<8x96xf32> to vector<8x32xf32>
    %62 = arith.mulf %49, %61 : vector<8x32xf32>
    %63 = arith.addf %60, %62 : vector<8x32xf32>
    %64 = math.tanh %63 : vector<8x32xf32>
    %cst_38 = arith.constant 1.000000e+00 : f32
    %65 = vector.broadcast %cst_38 : f32 to vector<8x32xf32>
    %66 = arith.subf %65, %59 : vector<8x32xf32>
    %67 = arith.mulf %66, %64 : vector<8x32xf32>
    %68 = arith.mulf %59, %32 : vector<8x32xf32>
    %69 = arith.addf %67, %68 : vector<8x32xf32>
    %70 = tpu.concatenate %69, %33 in 1 : vector<8x32xf32>, vector<8x32xf32> -> vector<8x64xf32>
    %c0_39 = arith.constant 0 : index
    %c0_40 = arith.constant 0 : index
    %c0_41 = arith.constant 0 : index
    %71 = vector.load %arg11[%c0_39, %c0_40, %c0_41] : memref<2x64x128xf32, #tpu.memory_space<vmem>>, vector<1x64x128xf32>
    %72 = vector.shape_cast %71 : vector<1x64x128xf32> to vector<64x128xf32>
    %cst_42 = arith.constant dense<0.000000e+00> : vector<8x128xf32>
    %73 = tpu.matmul %70, %72, %cst_42 {dimension_numbers = #tpu.dot_dimension_numbers<[1], [0], [0], [1], [0, 0, 1, 1], [], []>} : vector<8x64xf32>, vector<64x128xf32>, vector<8x128xf32> -> vector<8x128xf32>
    %c0_43 = arith.constant 0 : index
    %c0_44 = arith.constant 0 : index
    %c0_45 = arith.constant 0 : index
    %74 = vector.load %arg12[%c0_43, %c0_44, %c0_45] : memref<2x1x128xf32, #tpu.memory_space<vmem>>, vector<1x1x128xf32>
    %75 = vector.shape_cast %74 : vector<1x1x128xf32> to vector<1x128xf32>
    %76 = vector.broadcast %75 : vector<1x128xf32> to vector<8x128xf32>
    %77 = arith.addf %73, %76 : vector<8x128xf32>
    %78 = vector.extract_strided_slice %77 {offsets = [0, 0], sizes = [8, 32], strides = [1, 1]} : vector<8x128xf32> to vector<8x32xf32>
    %cst_46 = arith.constant 5.000000e-01 : f32
    %79 = vector.broadcast %cst_46 : f32 to vector<8x32xf32>
    %80 = arith.mulf %79, %78 : vector<8x32xf32>
    %81 = math.tanh %80 : vector<8x32xf32>
    %cst_47 = arith.constant 1.000000e+00 : f32
    %82 = vector.broadcast %cst_47 : f32 to vector<8x32xf32>
    %83 = arith.addf %81, %82 : vector<8x32xf32>
    %cst_48 = arith.constant 5.000000e-01 : f32
    %84 = vector.broadcast %cst_48 : f32 to vector<8x32xf32>
    %85 = arith.mulf %84, %83 : vector<8x32xf32>
    %86 = vector.extract_strided_slice %77 {offsets = [0, 32], sizes = [8, 32], strides = [1, 1]} : vector<8x128xf32> to vector<8x32xf32>
    %cst_49 = arith.constant 5.000000e-01 : f32
    %87 = vector.broadcast %cst_49 : f32 to vector<8x32xf32>
    %88 = arith.mulf %87, %86 : vector<8x32xf32>
    %89 = math.tanh %88 : vector<8x32xf32>
    %cst_50 = arith.constant 1.000000e+00 : f32
    %90 = vector.broadcast %cst_50 : f32 to vector<8x32xf32>
    %91 = arith.addf %89, %90 : vector<8x32xf32>
    %cst_51 = arith.constant 5.000000e-01 : f32
    %92 = vector.broadcast %cst_51 : f32 to vector<8x32xf32>
    %93 = arith.mulf %92, %91 : vector<8x32xf32>
    %94 = vector.extract_strided_slice %77 {offsets = [0, 64], sizes = [8, 32], strides = [1, 1]} : vector<8x128xf32> to vector<8x32xf32>
    %95 = vector.extract_strided_slice %77 {offsets = [0, 96], sizes = [8, 32], strides = [1, 1]} : vector<8x128xf32> to vector<8x32xf32>
    %96 = arith.mulf %85, %95 : vector<8x32xf32>
    %97 = arith.addf %94, %96 : vector<8x32xf32>
    %98 = math.tanh %97 : vector<8x32xf32>
    %cst_52 = arith.constant 1.000000e+00 : f32
    %99 = vector.broadcast %cst_52 : f32 to vector<8x32xf32>
    %100 = arith.subf %99, %93 : vector<8x32xf32>
    %101 = arith.mulf %100, %98 : vector<8x32xf32>
    %102 = arith.mulf %93, %33 : vector<8x32xf32>
    %103 = arith.addf %101, %102 : vector<8x32xf32>
    %104 = tpu.concatenate %103, %34 in 1 : vector<8x32xf32>, vector<8x32xf32> -> vector<8x64xf32>
    %c1_53 = arith.constant 1 : index
    %c0_54 = arith.constant 0 : index
    %c0_55 = arith.constant 0 : index
    %105 = vector.load %arg11[%c1_53, %c0_54, %c0_55] : memref<2x64x128xf32, #tpu.memory_space<vmem>>, vector<1x64x128xf32>
    %106 = vector.shape_cast %105 : vector<1x64x128xf32> to vector<64x128xf32>
    %cst_56 = arith.constant dense<0.000000e+00> : vector<8x128xf32>
    %107 = tpu.matmul %104, %106, %cst_56 {dimension_numbers = #tpu.dot_dimension_numbers<[1], [0], [0], [1], [0, 0, 1, 1], [], []>} : vector<8x64xf32>, vector<64x128xf32>, vector<8x128xf32> -> vector<8x128xf32>
    %c1_57 = arith.constant 1 : index
    %c0_58 = arith.constant 0 : index
    %c0_59 = arith.constant 0 : index
    %108 = vector.load %arg12[%c1_57, %c0_58, %c0_59] : memref<2x1x128xf32, #tpu.memory_space<vmem>>, vector<1x1x128xf32>
    %109 = vector.shape_cast %108 : vector<1x1x128xf32> to vector<1x128xf32>
    %110 = vector.broadcast %109 : vector<1x128xf32> to vector<8x128xf32>
    %111 = arith.addf %107, %110 : vector<8x128xf32>
    %112 = vector.extract_strided_slice %111 {offsets = [0, 0], sizes = [8, 32], strides = [1, 1]} : vector<8x128xf32> to vector<8x32xf32>
    %cst_60 = arith.constant 5.000000e-01 : f32
    %113 = vector.broadcast %cst_60 : f32 to vector<8x32xf32>
    %114 = arith.mulf %113, %112 : vector<8x32xf32>
    %115 = math.tanh %114 : vector<8x32xf32>
    %cst_61 = arith.constant 1.000000e+00 : f32
    %116 = vector.broadcast %cst_61 : f32 to vector<8x32xf32>
    %117 = arith.addf %115, %116 : vector<8x32xf32>
    %cst_62 = arith.constant 5.000000e-01 : f32
    %118 = vector.broadcast %cst_62 : f32 to vector<8x32xf32>
    %119 = arith.mulf %118, %117 : vector<8x32xf32>
    %120 = vector.extract_strided_slice %111 {offsets = [0, 32], sizes = [8, 32], strides = [1, 1]} : vector<8x128xf32> to vector<8x32xf32>
    %cst_63 = arith.constant 5.000000e-01 : f32
    %121 = vector.broadcast %cst_63 : f32 to vector<8x32xf32>
    %122 = arith.mulf %121, %120 : vector<8x32xf32>
    %123 = math.tanh %122 : vector<8x32xf32>
    %cst_64 = arith.constant 1.000000e+00 : f32
    %124 = vector.broadcast %cst_64 : f32 to vector<8x32xf32>
    %125 = arith.addf %123, %124 : vector<8x32xf32>
    %cst_65 = arith.constant 5.000000e-01 : f32
    %126 = vector.broadcast %cst_65 : f32 to vector<8x32xf32>
    %127 = arith.mulf %126, %125 : vector<8x32xf32>
    %128 = vector.extract_strided_slice %111 {offsets = [0, 64], sizes = [8, 32], strides = [1, 1]} : vector<8x128xf32> to vector<8x32xf32>
    %129 = vector.extract_strided_slice %111 {offsets = [0, 96], sizes = [8, 32], strides = [1, 1]} : vector<8x128xf32> to vector<8x32xf32>
    %130 = arith.mulf %119, %129 : vector<8x32xf32>
    %131 = arith.addf %128, %130 : vector<8x32xf32>
    %132 = math.tanh %131 : vector<8x32xf32>
    %cst_66 = arith.constant 1.000000e+00 : f32
    %133 = vector.broadcast %cst_66 : f32 to vector<8x32xf32>
    %134 = arith.subf %133, %127 : vector<8x32xf32>
    %135 = arith.mulf %134, %132 : vector<8x32xf32>
    %136 = arith.mulf %127, %34 : vector<8x32xf32>
    %137 = arith.addf %135, %136 : vector<8x32xf32>
    %c0_67 = arith.constant 0 : index
    %c0_68 = arith.constant 0 : index
    %138 = vector.load %arg19[%c0_67, %c0_68] : memref<64x32xf32, #tpu.memory_space<vmem>>, vector<8x32xf32>
    tpu.vector_store %arg19[%c0_67, %c0_68], %137 {strides = array<i32>} : memref<64x32xf32, #tpu.memory_space<vmem>>, vector<8x32xf32>,
    %c0_69 = arith.constant 0 : index
    %c0_70 = arith.constant 0 : index
    %139 = vector.load %arg9[%c0_69, %c0_70] : memref<32x96xf32, #tpu.memory_space<vmem>>, vector<32x96xf32>
    %cst_71 = arith.constant dense<0.000000e+00> : vector<8x96xf32>
    %140 = tpu.matmul %69, %139, %cst_71 {dimension_numbers = #tpu.dot_dimension_numbers<[1], [0], [0], [1], [0, 0, 1, 1], [], []>} : vector<8x32xf32>, vector<32x96xf32>, vector<8x96xf32> -> vector<8x96xf32>
    %c0_72 = arith.constant 0 : index
    %c0_73 = arith.constant 0 : index
    %141 = vector.load %arg10[%c0_72, %c0_73] : memref<1x96xf32, #tpu.memory_space<vmem>>, vector<1x96xf32>
    %142 = vector.broadcast %141 : vector<1x96xf32> to vector<8x96xf32>
    %143 = arith.addf %140, %142 : vector<8x96xf32>
    %144 = vector.extract_strided_slice %31 {offsets = [0, 0], sizes = [8, 32], strides = [1, 1]} : vector<8x96xf32> to vector<8x32xf32>
    %145 = vector.extract_strided_slice %143 {offsets = [0, 0], sizes = [8, 32], strides = [1, 1]} : vector<8x96xf32> to vector<8x32xf32>
    %146 = arith.addf %144, %145 : vector<8x32xf32>
    %cst_74 = arith.constant 5.000000e-01 : f32
    %147 = vector.broadcast %cst_74 : f32 to vector<8x32xf32>
    %148 = arith.mulf %147, %146 : vector<8x32xf32>
    %149 = math.tanh %148 : vector<8x32xf32>
    %cst_75 = arith.constant 1.000000e+00 : f32
    %150 = vector.broadcast %cst_75 : f32 to vector<8x32xf32>
    %151 = arith.addf %149, %150 : vector<8x32xf32>
    %cst_76 = arith.constant 5.000000e-01 : f32
    %152 = vector.broadcast %cst_76 : f32 to vector<8x32xf32>
    %153 = arith.mulf %152, %151 : vector<8x32xf32>
    %154 = vector.extract_strided_slice %31 {offsets = [0, 32], sizes = [8, 32], strides = [1, 1]} : vector<8x96xf32> to vector<8x32xf32>
    %155 = vector.extract_strided_slice %143 {offsets = [0, 32], sizes = [8, 32], strides = [1, 1]} : vector<8x96xf32> to vector<8x32xf32>
    %156 = arith.addf %154, %155 : vector<8x32xf32>
    %cst_77 = arith.constant 5.000000e-01 : f32
    %157 = vector.broadcast %cst_77 : f32 to vector<8x32xf32>
    %158 = arith.mulf %157, %156 : vector<8x32xf32>
    %159 = math.tanh %158 : vector<8x32xf32>
    %cst_78 = arith.constant 1.000000e+00 : f32
    %160 = vector.broadcast %cst_78 : f32 to vector<8x32xf32>
    %161 = arith.addf %159, %160 : vector<8x32xf32>
    %cst_79 = arith.constant 5.000000e-01 : f32
    %162 = vector.broadcast %cst_79 : f32 to vector<8x32xf32>
    %163 = arith.mulf %162, %161 : vector<8x32xf32>
    %164 = vector.extract_strided_slice %31 {offsets = [0, 64], sizes = [8, 32], strides = [1, 1]} : vector<8x96xf32> to vector<8x32xf32>
    %165 = vector.extract_strided_slice %143 {offsets = [0, 64], sizes = [8, 32], strides = [1, 1]} : vector<8x96xf32> to vector<8x32xf32>
    %166 = arith.mulf %153, %165 : vector<8x32xf32>
    %167 = arith.addf %164, %166 : vector<8x32xf32>
    %168 = math.tanh %167 : vector<8x32xf32>
    %cst_80 = arith.constant 1.000000e+00 : f32
    %169 = vector.broadcast %cst_80 : f32 to vector<8x32xf32>
    %170 = arith.subf %169, %163 : vector<8x32xf32>
    %171 = arith.mulf %170, %168 : vector<8x32xf32>
    %172 = arith.mulf %163, %69 : vector<8x32xf32>
    %173 = arith.addf %171, %172 : vector<8x32xf32>
    %174 = tpu.concatenate %173, %103 in 1 : vector<8x32xf32>, vector<8x32xf32> -> vector<8x64xf32>
    %c0_81 = arith.constant 0 : index
    %c0_82 = arith.constant 0 : index
    %c0_83 = arith.constant 0 : index
    %175 = vector.load %arg11[%c0_81, %c0_82, %c0_83] : memref<2x64x128xf32, #tpu.memory_space<vmem>>, vector<1x64x128xf32>
    %176 = vector.shape_cast %175 : vector<1x64x128xf32> to vector<64x128xf32>
    %cst_84 = arith.constant dense<0.000000e+00> : vector<8x128xf32>
    %177 = tpu.matmul %174, %176, %cst_84 {dimension_numbers = #tpu.dot_dimension_numbers<[1], [0], [0], [1], [0, 0, 1, 1], [], []>} : vector<8x64xf32>, vector<64x128xf32>, vector<8x128xf32> -> vector<8x128xf32>
    %c0_85 = arith.constant 0 : index
    %c0_86 = arith.constant 0 : index
    %c0_87 = arith.constant 0 : index
    %178 = vector.load %arg12[%c0_85, %c0_86, %c0_87] : memref<2x1x128xf32, #tpu.memory_space<vmem>>, vector<1x1x128xf32>
    %179 = vector.shape_cast %178 : vector<1x1x128xf32> to vector<1x128xf32>
    %180 = vector.broadcast %179 : vector<1x128xf32> to vector<8x128xf32>
    %181 = arith.addf %177, %180 : vector<8x128xf32>
    %182 = vector.extract_strided_slice %181 {offsets = [0, 0], sizes = [8, 32], strides = [1, 1]} : vector<8x128xf32> to vector<8x32xf32>
    %cst_88 = arith.constant 5.000000e-01 : f32
    %183 = vector.broadcast %cst_88 : f32 to vector<8x32xf32>
    %184 = arith.mulf %183, %182 : vector<8x32xf32>
    %185 = math.tanh %184 : vector<8x32xf32>
    %cst_89 = arith.constant 1.000000e+00 : f32
    %186 = vector.broadcast %cst_89 : f32 to vector<8x32xf32>
    %187 = arith.addf %185, %186 : vector<8x32xf32>
    %cst_90 = arith.constant 5.000000e-01 : f32
    %188 = vector.broadcast %cst_90 : f32 to vector<8x32xf32>
    %189 = arith.mulf %188, %187 : vector<8x32xf32>
    %190 = vector.extract_strided_slice %181 {offsets = [0, 32], sizes = [8, 32], strides = [1, 1]} : vector<8x128xf32> to vector<8x32xf32>
    %cst_91 = arith.constant 5.000000e-01 : f32
    %191 = vector.broadcast %cst_91 : f32 to vector<8x32xf32>
    %192 = arith.mulf %191, %190 : vector<8x32xf32>
    %193 = math.tanh %192 : vector<8x32xf32>
    %cst_92 = arith.constant 1.000000e+00 : f32
    %194 = vector.broadcast %cst_92 : f32 to vector<8x32xf32>
    %195 = arith.addf %193, %194 : vector<8x32xf32>
    %cst_93 = arith.constant 5.000000e-01 : f32
    %196 = vector.broadcast %cst_93 : f32 to vector<8x32xf32>
    %197 = arith.mulf %196, %195 : vector<8x32xf32>
    %198 = vector.extract_strided_slice %181 {offsets = [0, 64], sizes = [8, 32], strides = [1, 1]} : vector<8x128xf32> to vector<8x32xf32>
    %199 = vector.extract_strided_slice %181 {offsets = [0, 96], sizes = [8, 32], strides = [1, 1]} : vector<8x128xf32> to vector<8x32xf32>
    %200 = arith.mulf %189, %199 : vector<8x32xf32>
    %201 = arith.addf %198, %200 : vector<8x32xf32>
    %202 = math.tanh %201 : vector<8x32xf32>
    %cst_94 = arith.constant 1.000000e+00 : f32
    %203 = vector.broadcast %cst_94 : f32 to vector<8x32xf32>
    %204 = arith.subf %203, %197 : vector<8x32xf32>
    %205 = arith.mulf %204, %202 : vector<8x32xf32>
    %206 = arith.mulf %197, %103 : vector<8x32xf32>
    %207 = arith.addf %205, %206 : vector<8x32xf32>
    %208 = tpu.concatenate %207, %137 in 1 : vector<8x32xf32>, vector<8x32xf32> -> vector<8x64xf32>
    %c1_95 = arith.constant 1 : index
    %c0_96 = arith.constant 0 : index
    %c0_97 = arith.constant 0 : index
    %209 = vector.load %arg11[%c1_95, %c0_96, %c0_97] : memref<2x64x128xf32, #tpu.memory_space<vmem>>, vector<1x64x128xf32>
    %210 = vector.shape_cast %209 : vector<1x64x128xf32> to vector<64x128xf32>
    %cst_98 = arith.constant dense<0.000000e+00> : vector<8x128xf32>
    %211 = tpu.matmul %208, %210, %cst_98 {dimension_numbers = #tpu.dot_dimension_numbers<[1], [0], [0], [1], [0, 0, 1, 1], [], []>} : vector<8x64xf32>, vector<64x128xf32>, vector<8x128xf32> -> vector<8x128xf32>
    %c1_99 = arith.constant 1 : index
    %c0_100 = arith.constant 0 : index
    %c0_101 = arith.constant 0 : index
    %212 = vector.load %arg12[%c1_99, %c0_100, %c0_101] : memref<2x1x128xf32, #tpu.memory_space<vmem>>, vector<1x1x128xf32>
    %213 = vector.shape_cast %212 : vector<1x1x128xf32> to vector<1x128xf32>
    %214 = vector.broadcast %213 : vector<1x128xf32> to vector<8x128xf32>
    %215 = arith.addf %211, %214 : vector<8x128xf32>
    %216 = vector.extract_strided_slice %215 {offsets = [0, 0], sizes = [8, 32], strides = [1, 1]} : vector<8x128xf32> to vector<8x32xf32>
    %cst_102 = arith.constant 5.000000e-01 : f32
    %217 = vector.broadcast %cst_102 : f32 to vector<8x32xf32>
    %218 = arith.mulf %217, %216 : vector<8x32xf32>
    %219 = math.tanh %218 : vector<8x32xf32>
    %cst_103 = arith.constant 1.000000e+00 : f32
    %220 = vector.broadcast %cst_103 : f32 to vector<8x32xf32>
    %221 = arith.addf %219, %220 : vector<8x32xf32>
    %cst_104 = arith.constant 5.000000e-01 : f32
    %222 = vector.broadcast %cst_104 : f32 to vector<8x32xf32>
    %223 = arith.mulf %222, %221 : vector<8x32xf32>
    %224 = vector.extract_strided_slice %215 {offsets = [0, 32], sizes = [8, 32], strides = [1, 1]} : vector<8x128xf32> to vector<8x32xf32>
    %cst_105 = arith.constant 5.000000e-01 : f32
    %225 = vector.broadcast %cst_105 : f32 to vector<8x32xf32>
    %226 = arith.mulf %225, %224 : vector<8x32xf32>
    %227 = math.tanh %226 : vector<8x32xf32>
    %cst_106 = arith.constant 1.000000e+00 : f32
    %228 = vector.broadcast %cst_106 : f32 to vector<8x32xf32>
    %229 = arith.addf %227, %228 : vector<8x32xf32>
    %cst_107 = arith.constant 5.000000e-01 : f32
    %230 = vector.broadcast %cst_107 : f32 to vector<8x32xf32>
    %231 = arith.mulf %230, %229 : vector<8x32xf32>
    %232 = vector.extract_strided_slice %215 {offsets = [0, 64], sizes = [8, 32], strides = [1, 1]} : vector<8x128xf32> to vector<8x32xf32>
    %233 = vector.extract_strided_slice %215 {offsets = [0, 96], sizes = [8, 32], strides = [1, 1]} : vector<8x128xf32> to vector<8x32xf32>
    %234 = arith.mulf %223, %233 : vector<8x32xf32>
    %235 = arith.addf %232, %234 : vector<8x32xf32>
    %236 = math.tanh %235 : vector<8x32xf32>
    %cst_108 = arith.constant 1.000000e+00 : f32
    %237 = vector.broadcast %cst_108 : f32 to vector<8x32xf32>
    %238 = arith.subf %237, %231 : vector<8x32xf32>
    %239 = arith.mulf %238, %236 : vector<8x32xf32>
    %240 = arith.mulf %231, %137 : vector<8x32xf32>
    %241 = arith.addf %239, %240 : vector<8x32xf32>
    %c8 = arith.constant 8 : index
    %c0_109 = arith.constant 0 : index
    %242 = vector.load %arg19[%c8, %c0_109] : memref<64x32xf32, #tpu.memory_space<vmem>>, vector<8x32xf32>
    tpu.vector_store %arg19[%c8, %c0_109], %241 {strides = array<i32>} : memref<64x32xf32, #tpu.memory_space<vmem>>, vector<8x32xf32>,
    %c0_110 = arith.constant 0 : index
    %c0_111 = arith.constant 0 : index
    %243 = vector.load %arg9[%c0_110, %c0_111] : memref<32x96xf32, #tpu.memory_space<vmem>>, vector<32x96xf32>
    %cst_112 = arith.constant dense<0.000000e+00> : vector<8x96xf32>
    %244 = tpu.matmul %173, %243, %cst_112 {dimension_numbers = #tpu.dot_dimension_numbers<[1], [0], [0], [1], [0, 0, 1, 1], [], []>} : vector<8x32xf32>, vector<32x96xf32>, vector<8x96xf32> -> vector<8x96xf32>
    %c0_113 = arith.constant 0 : index
    %c0_114 = arith.constant 0 : index
    %245 = vector.load %arg10[%c0_113, %c0_114] : memref<1x96xf32, #tpu.memory_space<vmem>>, vector<1x96xf32>
    %246 = vector.broadcast %245 : vector<1x96xf32> to vector<8x96xf32>
    %247 = arith.addf %244, %246 : vector<8x96xf32>
    %248 = vector.extract_strided_slice %31 {offsets = [0, 0], sizes = [8, 32], strides = [1, 1]} : vector<8x96xf32> to vector<8x32xf32>
    %249 = vector.extract_strided_slice %247 {offsets = [0, 0], sizes = [8, 32], strides = [1, 1]} : vector<8x96xf32> to vector<8x32xf32>
    %250 = arith.addf %248, %249 : vector<8x32xf32>
    %cst_115 = arith.constant 5.000000e-01 : f32
    %251 = vector.broadcast %cst_115 : f32 to vector<8x32xf32>
    %252 = arith.mulf %251, %250 : vector<8x32xf32>
    %253 = math.tanh %252 : vector<8x32xf32>
    %cst_116 = arith.constant 1.000000e+00 : f32
    %254 = vector.broadcast %cst_116 : f32 to vector<8x32xf32>
    %255 = arith.addf %253, %254 : vector<8x32xf32>
    %cst_117 = arith.constant 5.000000e-01 : f32
    %256 = vector.broadcast %cst_117 : f32 to vector<8x32xf32>
    %257 = arith.mulf %256, %255 : vector<8x32xf32>
    %258 = vector.extract_strided_slice %31 {offsets = [0, 32], sizes = [8, 32], strides = [1, 1]} : vector<8x96xf32> to vector<8x32xf32>
    %259 = vector.extract_strided_slice %247 {offsets = [0, 32], sizes = [8, 32], strides = [1, 1]} : vector<8x96xf32> to vector<8x32xf32>
    %260 = arith.addf %258, %259 : vector<8x32xf32>
    %cst_118 = arith.constant 5.000000e-01 : f32
    %261 = vector.broadcast %cst_118 : f32 to vector<8x32xf32>
    %262 = arith.mulf %261, %260 : vector<8x32xf32>
    %263 = math.tanh %262 : vector<8x32xf32>
    %cst_119 = arith.constant 1.000000e+00 : f32
    %264 = vector.broadcast %cst_119 : f32 to vector<8x32xf32>
    %265 = arith.addf %263, %264 : vector<8x32xf32>
    %cst_120 = arith.constant 5.000000e-01 : f32
    %266 = vector.broadcast %cst_120 : f32 to vector<8x32xf32>
    %267 = arith.mulf %266, %265 : vector<8x32xf32>
    %268 = vector.extract_strided_slice %31 {offsets = [0, 64], sizes = [8, 32], strides = [1, 1]} : vector<8x96xf32> to vector<8x32xf32>
    %269 = vector.extract_strided_slice %247 {offsets = [0, 64], sizes = [8, 32], strides = [1, 1]} : vector<8x96xf32> to vector<8x32xf32>
    %270 = arith.mulf %257, %269 : vector<8x32xf32>
    %271 = arith.addf %268, %270 : vector<8x32xf32>
    %272 = math.tanh %271 : vector<8x32xf32>
    %cst_121 = arith.constant 1.000000e+00 : f32
    %273 = vector.broadcast %cst_121 : f32 to vector<8x32xf32>
    %274 = arith.subf %273, %267 : vector<8x32xf32>
    %275 = arith.mulf %274, %272 : vector<8x32xf32>
    %276 = arith.mulf %267, %173 : vector<8x32xf32>
    %277 = arith.addf %275, %276 : vector<8x32xf32>
    %278 = tpu.concatenate %277, %207 in 1 : vector<8x32xf32>, vector<8x32xf32> -> vector<8x64xf32>
    %c0_122 = arith.constant 0 : index
    %c0_123 = arith.constant 0 : index
    %c0_124 = arith.constant 0 : index
    %279 = vector.load %arg11[%c0_122, %c0_123, %c0_124] : memref<2x64x128xf32, #tpu.memory_space<vmem>>, vector<1x64x128xf32>
    %280 = vector.shape_cast %279 : vector<1x64x128xf32> to vector<64x128xf32>
    %cst_125 = arith.constant dense<0.000000e+00> : vector<8x128xf32>
    %281 = tpu.matmul %278, %280, %cst_125 {dimension_numbers = #tpu.dot_dimension_numbers<[1], [0], [0], [1], [0, 0, 1, 1], [], []>} : vector<8x64xf32>, vector<64x128xf32>, vector<8x128xf32> -> vector<8x128xf32>
    %c0_126 = arith.constant 0 : index
    %c0_127 = arith.constant 0 : index
    %c0_128 = arith.constant 0 : index
    %282 = vector.load %arg12[%c0_126, %c0_127, %c0_128] : memref<2x1x128xf32, #tpu.memory_space<vmem>>, vector<1x1x128xf32>
    %283 = vector.shape_cast %282 : vector<1x1x128xf32> to vector<1x128xf32>
    %284 = vector.broadcast %283 : vector<1x128xf32> to vector<8x128xf32>
    %285 = arith.addf %281, %284 : vector<8x128xf32>
    %286 = vector.extract_strided_slice %285 {offsets = [0, 0], sizes = [8, 32], strides = [1, 1]} : vector<8x128xf32> to vector<8x32xf32>
    %cst_129 = arith.constant 5.000000e-01 : f32
    %287 = vector.broadcast %cst_129 : f32 to vector<8x32xf32>
    %288 = arith.mulf %287, %286 : vector<8x32xf32>
    %289 = math.tanh %288 : vector<8x32xf32>
    %cst_130 = arith.constant 1.000000e+00 : f32
    %290 = vector.broadcast %cst_130 : f32 to vector<8x32xf32>
    %291 = arith.addf %289, %290 : vector<8x32xf32>
    %cst_131 = arith.constant 5.000000e-01 : f32
    %292 = vector.broadcast %cst_131 : f32 to vector<8x32xf32>
    %293 = arith.mulf %292, %291 : vector<8x32xf32>
    %294 = vector.extract_strided_slice %285 {offsets = [0, 32], sizes = [8, 32], strides = [1, 1]} : vector<8x128xf32> to vector<8x32xf32>
    %cst_132 = arith.constant 5.000000e-01 : f32
    %295 = vector.broadcast %cst_132 : f32 to vector<8x32xf32>
    %296 = arith.mulf %295, %294 : vector<8x32xf32>
    %297 = math.tanh %296 : vector<8x32xf32>
    %cst_133 = arith.constant 1.000000e+00 : f32
    %298 = vector.broadcast %cst_133 : f32 to vector<8x32xf32>
    %299 = arith.addf %297, %298 : vector<8x32xf32>
    %cst_134 = arith.constant 5.000000e-01 : f32
    %300 = vector.broadcast %cst_134 : f32 to vector<8x32xf32>
    %301 = arith.mulf %300, %299 : vector<8x32xf32>
    %302 = vector.extract_strided_slice %285 {offsets = [0, 64], sizes = [8, 32], strides = [1, 1]} : vector<8x128xf32> to vector<8x32xf32>
    %303 = vector.extract_strided_slice %285 {offsets = [0, 96], sizes = [8, 32], strides = [1, 1]} : vector<8x128xf32> to vector<8x32xf32>
    %304 = arith.mulf %293, %303 : vector<8x32xf32>
    %305 = arith.addf %302, %304 : vector<8x32xf32>
    %306 = math.tanh %305 : vector<8x32xf32>
    %cst_135 = arith.constant 1.000000e+00 : f32
    %307 = vector.broadcast %cst_135 : f32 to vector<8x32xf32>
    %308 = arith.subf %307, %301 : vector<8x32xf32>
    %309 = arith.mulf %308, %306 : vector<8x32xf32>
    %310 = arith.mulf %301, %207 : vector<8x32xf32>
    %311 = arith.addf %309, %310 : vector<8x32xf32>
    %312 = tpu.concatenate %311, %241 in 1 : vector<8x32xf32>, vector<8x32xf32> -> vector<8x64xf32>
    %c1_136 = arith.constant 1 : index
    %c0_137 = arith.constant 0 : index
    %c0_138 = arith.constant 0 : index
    %313 = vector.load %arg11[%c1_136, %c0_137, %c0_138] : memref<2x64x128xf32, #tpu.memory_space<vmem>>, vector<1x64x128xf32>
    %314 = vector.shape_cast %313 : vector<1x64x128xf32> to vector<64x128xf32>
    %cst_139 = arith.constant dense<0.000000e+00> : vector<8x128xf32>
    %315 = tpu.matmul %312, %314, %cst_139 {dimension_numbers = #tpu.dot_dimension_numbers<[1], [0], [0], [1], [0, 0, 1, 1], [], []>} : vector<8x64xf32>, vector<64x128xf32>, vector<8x128xf32> -> vector<8x128xf32>
    %c1_140 = arith.constant 1 : index
    %c0_141 = arith.constant 0 : index
    %c0_142 = arith.constant 0 : index
    %316 = vector.load %arg12[%c1_140, %c0_141, %c0_142] : memref<2x1x128xf32, #tpu.memory_space<vmem>>, vector<1x1x128xf32>
    %317 = vector.shape_cast %316 : vector<1x1x128xf32> to vector<1x128xf32>
    %318 = vector.broadcast %317 : vector<1x128xf32> to vector<8x128xf32>
    %319 = arith.addf %315, %318 : vector<8x128xf32>
    %320 = vector.extract_strided_slice %319 {offsets = [0, 0], sizes = [8, 32], strides = [1, 1]} : vector<8x128xf32> to vector<8x32xf32>
    %cst_143 = arith.constant 5.000000e-01 : f32
    %321 = vector.broadcast %cst_143 : f32 to vector<8x32xf32>
    %322 = arith.mulf %321, %320 : vector<8x32xf32>
    %323 = math.tanh %322 : vector<8x32xf32>
    %cst_144 = arith.constant 1.000000e+00 : f32
    %324 = vector.broadcast %cst_144 : f32 to vector<8x32xf32>
    %325 = arith.addf %323, %324 : vector<8x32xf32>
    %cst_145 = arith.constant 5.000000e-01 : f32
    %326 = vector.broadcast %cst_145 : f32 to vector<8x32xf32>
    %327 = arith.mulf %326, %325 : vector<8x32xf32>
    %328 = vector.extract_strided_slice %319 {offsets = [0, 32], sizes = [8, 32], strides = [1, 1]} : vector<8x128xf32> to vector<8x32xf32>
    %cst_146 = arith.constant 5.000000e-01 : f32
    %329 = vector.broadcast %cst_146 : f32 to vector<8x32xf32>
    %330 = arith.mulf %329, %328 : vector<8x32xf32>
    %331 = math.tanh %330 : vector<8x32xf32>
    %cst_147 = arith.constant 1.000000e+00 : f32
    %332 = vector.broadcast %cst_147 : f32 to vector<8x32xf32>
    %333 = arith.addf %331, %332 : vector<8x32xf32>
    %cst_148 = arith.constant 5.000000e-01 : f32
    %334 = vector.broadcast %cst_148 : f32 to vector<8x32xf32>
    %335 = arith.mulf %334, %333 : vector<8x32xf32>
    %336 = vector.extract_strided_slice %319 {offsets = [0, 64], sizes = [8, 32], strides = [1, 1]} : vector<8x128xf32> to vector<8x32xf32>
    %337 = vector.extract_strided_slice %319 {offsets = [0, 96], sizes = [8, 32], strides = [1, 1]} : vector<8x128xf32> to vector<8x32xf32>
    %338 = arith.mulf %327, %337 : vector<8x32xf32>
    %339 = arith.addf %336, %338 : vector<8x32xf32>
    %340 = math.tanh %339 : vector<8x32xf32>
    %cst_149 = arith.constant 1.000000e+00 : f32
    %341 = vector.broadcast %cst_149 : f32 to vector<8x32xf32>
    %342 = arith.subf %341, %335 : vector<8x32xf32>
    %343 = arith.mulf %342, %340 : vector<8x32xf32>
    %344 = arith.mulf %335, %241 : vector<8x32xf32>
    %345 = arith.addf %343, %344 : vector<8x32xf32>
    %c16 = arith.constant 16 : index
    %c0_150 = arith.constant 0 : index
    %346 = vector.load %arg19[%c16, %c0_150] : memref<64x32xf32, #tpu.memory_space<vmem>>, vector<8x32xf32>
    tpu.vector_store %arg19[%c16, %c0_150], %345 {strides = array<i32>} : memref<64x32xf32, #tpu.memory_space<vmem>>, vector<8x32xf32>,
    %c0_151 = arith.constant 0 : index
    %c0_152 = arith.constant 0 : index
    %347 = vector.load %arg9[%c0_151, %c0_152] : memref<32x96xf32, #tpu.memory_space<vmem>>, vector<32x96xf32>
    %cst_153 = arith.constant dense<0.000000e+00> : vector<8x96xf32>
    %348 = tpu.matmul %277, %347, %cst_153 {dimension_numbers = #tpu.dot_dimension_numbers<[1], [0], [0], [1], [0, 0, 1, 1], [], []>} : vector<8x32xf32>, vector<32x96xf32>, vector<8x96xf32> -> vector<8x96xf32>
    %c0_154 = arith.constant 0 : index
    %c0_155 = arith.constant 0 : index
    %349 = vector.load %arg10[%c0_154, %c0_155] : memref<1x96xf32, #tpu.memory_space<vmem>>, vector<1x96xf32>
    %350 = vector.broadcast %349 : vector<1x96xf32> to vector<8x96xf32>
    %351 = arith.addf %348, %350 : vector<8x96xf32>
    %352 = vector.extract_strided_slice %31 {offsets = [0, 0], sizes = [8, 32], strides = [1, 1]} : vector<8x96xf32> to vector<8x32xf32>
    %353 = vector.extract_strided_slice %351 {offsets = [0, 0], sizes = [8, 32], strides = [1, 1]} : vector<8x96xf32> to vector<8x32xf32>
    %354 = arith.addf %352, %353 : vector<8x32xf32>
    %cst_156 = arith.constant 5.000000e-01 : f32
    %355 = vector.broadcast %cst_156 : f32 to vector<8x32xf32>
    %356 = arith.mulf %355, %354 : vector<8x32xf32>
    %357 = math.tanh %356 : vector<8x32xf32>
    %cst_157 = arith.constant 1.000000e+00 : f32
    %358 = vector.broadcast %cst_157 : f32 to vector<8x32xf32>
    %359 = arith.addf %357, %358 : vector<8x32xf32>
    %cst_158 = arith.constant 5.000000e-01 : f32
    %360 = vector.broadcast %cst_158 : f32 to vector<8x32xf32>
    %361 = arith.mulf %360, %359 : vector<8x32xf32>
    %362 = vector.extract_strided_slice %31 {offsets = [0, 32], sizes = [8, 32], strides = [1, 1]} : vector<8x96xf32> to vector<8x32xf32>
    %363 = vector.extract_strided_slice %351 {offsets = [0, 32], sizes = [8, 32], strides = [1, 1]} : vector<8x96xf32> to vector<8x32xf32>
    %364 = arith.addf %362, %363 : vector<8x32xf32>
    %cst_159 = arith.constant 5.000000e-01 : f32
    %365 = vector.broadcast %cst_159 : f32 to vector<8x32xf32>
    %366 = arith.mulf %365, %364 : vector<8x32xf32>
    %367 = math.tanh %366 : vector<8x32xf32>
    %cst_160 = arith.constant 1.000000e+00 : f32
    %368 = vector.broadcast %cst_160 : f32 to vector<8x32xf32>
    %369 = arith.addf %367, %368 : vector<8x32xf32>
    %cst_161 = arith.constant 5.000000e-01 : f32
    %370 = vector.broadcast %cst_161 : f32 to vector<8x32xf32>
    %371 = arith.mulf %370, %369 : vector<8x32xf32>
    %372 = vector.extract_strided_slice %31 {offsets = [0, 64], sizes = [8, 32], strides = [1, 1]} : vector<8x96xf32> to vector<8x32xf32>
    %373 = vector.extract_strided_slice %351 {offsets = [0, 64], sizes = [8, 32], strides = [1, 1]} : vector<8x96xf32> to vector<8x32xf32>
    %374 = arith.mulf %361, %373 : vector<8x32xf32>
    %375 = arith.addf %372, %374 : vector<8x32xf32>
    %376 = math.tanh %375 : vector<8x32xf32>
    %cst_162 = arith.constant 1.000000e+00 : f32
    %377 = vector.broadcast %cst_162 : f32 to vector<8x32xf32>
    %378 = arith.subf %377, %371 : vector<8x32xf32>
    %379 = arith.mulf %378, %376 : vector<8x32xf32>
    %380 = arith.mulf %371, %277 : vector<8x32xf32>
    %381 = arith.addf %379, %380 : vector<8x32xf32>
    %382 = tpu.concatenate %381, %311 in 1 : vector<8x32xf32>, vector<8x32xf32> -> vector<8x64xf32>
    %c0_163 = arith.constant 0 : index
    %c0_164 = arith.constant 0 : index
    %c0_165 = arith.constant 0 : index
    %383 = vector.load %arg11[%c0_163, %c0_164, %c0_165] : memref<2x64x128xf32, #tpu.memory_space<vmem>>, vector<1x64x128xf32>
    %384 = vector.shape_cast %383 : vector<1x64x128xf32> to vector<64x128xf32>
    %cst_166 = arith.constant dense<0.000000e+00> : vector<8x128xf32>
    %385 = tpu.matmul %382, %384, %cst_166 {dimension_numbers = #tpu.dot_dimension_numbers<[1], [0], [0], [1], [0, 0, 1, 1], [], []>} : vector<8x64xf32>, vector<64x128xf32>, vector<8x128xf32> -> vector<8x128xf32>
    %c0_167 = arith.constant 0 : index
    %c0_168 = arith.constant 0 : index
    %c0_169 = arith.constant 0 : index
    %386 = vector.load %arg12[%c0_167, %c0_168, %c0_169] : memref<2x1x128xf32, #tpu.memory_space<vmem>>, vector<1x1x128xf32>
    %387 = vector.shape_cast %386 : vector<1x1x128xf32> to vector<1x128xf32>
    %388 = vector.broadcast %387 : vector<1x128xf32> to vector<8x128xf32>
    %389 = arith.addf %385, %388 : vector<8x128xf32>
    %390 = vector.extract_strided_slice %389 {offsets = [0, 0], sizes = [8, 32], strides = [1, 1]} : vector<8x128xf32> to vector<8x32xf32>
    %cst_170 = arith.constant 5.000000e-01 : f32
    %391 = vector.broadcast %cst_170 : f32 to vector<8x32xf32>
    %392 = arith.mulf %391, %390 : vector<8x32xf32>
    %393 = math.tanh %392 : vector<8x32xf32>
    %cst_171 = arith.constant 1.000000e+00 : f32
    %394 = vector.broadcast %cst_171 : f32 to vector<8x32xf32>
    %395 = arith.addf %393, %394 : vector<8x32xf32>
    %cst_172 = arith.constant 5.000000e-01 : f32
    %396 = vector.broadcast %cst_172 : f32 to vector<8x32xf32>
    %397 = arith.mulf %396, %395 : vector<8x32xf32>
    %398 = vector.extract_strided_slice %389 {offsets = [0, 32], sizes = [8, 32], strides = [1, 1]} : vector<8x128xf32> to vector<8x32xf32>
    %cst_173 = arith.constant 5.000000e-01 : f32
    %399 = vector.broadcast %cst_173 : f32 to vector<8x32xf32>
    %400 = arith.mulf %399, %398 : vector<8x32xf32>
    %401 = math.tanh %400 : vector<8x32xf32>
    %cst_174 = arith.constant 1.000000e+00 : f32
    %402 = vector.broadcast %cst_174 : f32 to vector<8x32xf32>
    %403 = arith.addf %401, %402 : vector<8x32xf32>
    %cst_175 = arith.constant 5.000000e-01 : f32
    %404 = vector.broadcast %cst_175 : f32 to vector<8x32xf32>
    %405 = arith.mulf %404, %403 : vector<8x32xf32>
    %406 = vector.extract_strided_slice %389 {offsets = [0, 64], sizes = [8, 32], strides = [1, 1]} : vector<8x128xf32> to vector<8x32xf32>
    %407 = vector.extract_strided_slice %389 {offsets = [0, 96], sizes = [8, 32], strides = [1, 1]} : vector<8x128xf32> to vector<8x32xf32>
    %408 = arith.mulf %397, %407 : vector<8x32xf32>
    %409 = arith.addf %406, %408 : vector<8x32xf32>
    %410 = math.tanh %409 : vector<8x32xf32>
    %cst_176 = arith.constant 1.000000e+00 : f32
    %411 = vector.broadcast %cst_176 : f32 to vector<8x32xf32>
    %412 = arith.subf %411, %405 : vector<8x32xf32>
    %413 = arith.mulf %412, %410 : vector<8x32xf32>
    %414 = arith.mulf %405, %311 : vector<8x32xf32>
    %415 = arith.addf %413, %414 : vector<8x32xf32>
    %416 = tpu.concatenate %415, %345 in 1 : vector<8x32xf32>, vector<8x32xf32> -> vector<8x64xf32>
    %c1_177 = arith.constant 1 : index
    %c0_178 = arith.constant 0 : index
    %c0_179 = arith.constant 0 : index
    %417 = vector.load %arg11[%c1_177, %c0_178, %c0_179] : memref<2x64x128xf32, #tpu.memory_space<vmem>>, vector<1x64x128xf32>
    %418 = vector.shape_cast %417 : vector<1x64x128xf32> to vector<64x128xf32>
    %cst_180 = arith.constant dense<0.000000e+00> : vector<8x128xf32>
    %419 = tpu.matmul %416, %418, %cst_180 {dimension_numbers = #tpu.dot_dimension_numbers<[1], [0], [0], [1], [0, 0, 1, 1], [], []>} : vector<8x64xf32>, vector<64x128xf32>, vector<8x128xf32> -> vector<8x128xf32>
    %c1_181 = arith.constant 1 : index
    %c0_182 = arith.constant 0 : index
    %c0_183 = arith.constant 0 : index
    %420 = vector.load %arg12[%c1_181, %c0_182, %c0_183] : memref<2x1x128xf32, #tpu.memory_space<vmem>>, vector<1x1x128xf32>
    %421 = vector.shape_cast %420 : vector<1x1x128xf32> to vector<1x128xf32>
    %422 = vector.broadcast %421 : vector<1x128xf32> to vector<8x128xf32>
    %423 = arith.addf %419, %422 : vector<8x128xf32>
    %424 = vector.extract_strided_slice %423 {offsets = [0, 0], sizes = [8, 32], strides = [1, 1]} : vector<8x128xf32> to vector<8x32xf32>
    %cst_184 = arith.constant 5.000000e-01 : f32
    %425 = vector.broadcast %cst_184 : f32 to vector<8x32xf32>
    %426 = arith.mulf %425, %424 : vector<8x32xf32>
    %427 = math.tanh %426 : vector<8x32xf32>
    %cst_185 = arith.constant 1.000000e+00 : f32
    %428 = vector.broadcast %cst_185 : f32 to vector<8x32xf32>
    %429 = arith.addf %427, %428 : vector<8x32xf32>
    %cst_186 = arith.constant 5.000000e-01 : f32
    %430 = vector.broadcast %cst_186 : f32 to vector<8x32xf32>
    %431 = arith.mulf %430, %429 : vector<8x32xf32>
    %432 = vector.extract_strided_slice %423 {offsets = [0, 32], sizes = [8, 32], strides = [1, 1]} : vector<8x128xf32> to vector<8x32xf32>
    %cst_187 = arith.constant 5.000000e-01 : f32
    %433 = vector.broadcast %cst_187 : f32 to vector<8x32xf32>
    %434 = arith.mulf %433, %432 : vector<8x32xf32>
    %435 = math.tanh %434 : vector<8x32xf32>
    %cst_188 = arith.constant 1.000000e+00 : f32
    %436 = vector.broadcast %cst_188 : f32 to vector<8x32xf32>
    %437 = arith.addf %435, %436 : vector<8x32xf32>
    %cst_189 = arith.constant 5.000000e-01 : f32
    %438 = vector.broadcast %cst_189 : f32 to vector<8x32xf32>
    %439 = arith.mulf %438, %437 : vector<8x32xf32>
    %440 = vector.extract_strided_slice %423 {offsets = [0, 64], sizes = [8, 32], strides = [1, 1]} : vector<8x128xf32> to vector<8x32xf32>
    %441 = vector.extract_strided_slice %423 {offsets = [0, 96], sizes = [8, 32], strides = [1, 1]} : vector<8x128xf32> to vector<8x32xf32>
    %442 = arith.mulf %431, %441 : vector<8x32xf32>
    %443 = arith.addf %440, %442 : vector<8x32xf32>
    %444 = math.tanh %443 : vector<8x32xf32>
    %cst_190 = arith.constant 1.000000e+00 : f32
    %445 = vector.broadcast %cst_190 : f32 to vector<8x32xf32>
    %446 = arith.subf %445, %439 : vector<8x32xf32>
    %447 = arith.mulf %446, %444 : vector<8x32xf32>
    %448 = arith.mulf %439, %345 : vector<8x32xf32>
    %449 = arith.addf %447, %448 : vector<8x32xf32>
    %c24 = arith.constant 24 : index
    %c0_191 = arith.constant 0 : index
    %450 = vector.load %arg19[%c24, %c0_191] : memref<64x32xf32, #tpu.memory_space<vmem>>, vector<8x32xf32>
    tpu.vector_store %arg19[%c24, %c0_191], %449 {strides = array<i32>} : memref<64x32xf32, #tpu.memory_space<vmem>>, vector<8x32xf32>,
    %c0_192 = arith.constant 0 : index
    %c0_193 = arith.constant 0 : index
    %451 = vector.load %arg9[%c0_192, %c0_193] : memref<32x96xf32, #tpu.memory_space<vmem>>, vector<32x96xf32>
    %cst_194 = arith.constant dense<0.000000e+00> : vector<8x96xf32>
    %452 = tpu.matmul %381, %451, %cst_194 {dimension_numbers = #tpu.dot_dimension_numbers<[1], [0], [0], [1], [0, 0, 1, 1], [], []>} : vector<8x32xf32>, vector<32x96xf32>, vector<8x96xf32> -> vector<8x96xf32>
    %c0_195 = arith.constant 0 : index
    %c0_196 = arith.constant 0 : index
    %453 = vector.load %arg10[%c0_195, %c0_196] : memref<1x96xf32, #tpu.memory_space<vmem>>, vector<1x96xf32>
    %454 = vector.broadcast %453 : vector<1x96xf32> to vector<8x96xf32>
    %455 = arith.addf %452, %454 : vector<8x96xf32>
    %456 = vector.extract_strided_slice %31 {offsets = [0, 0], sizes = [8, 32], strides = [1, 1]} : vector<8x96xf32> to vector<8x32xf32>
    %457 = vector.extract_strided_slice %455 {offsets = [0, 0], sizes = [8, 32], strides = [1, 1]} : vector<8x96xf32> to vector<8x32xf32>
    %458 = arith.addf %456, %457 : vector<8x32xf32>
    %cst_197 = arith.constant 5.000000e-01 : f32
    %459 = vector.broadcast %cst_197 : f32 to vector<8x32xf32>
    %460 = arith.mulf %459, %458 : vector<8x32xf32>
    %461 = math.tanh %460 : vector<8x32xf32>
    %cst_198 = arith.constant 1.000000e+00 : f32
    %462 = vector.broadcast %cst_198 : f32 to vector<8x32xf32>
    %463 = arith.addf %461, %462 : vector<8x32xf32>
    %cst_199 = arith.constant 5.000000e-01 : f32
    %464 = vector.broadcast %cst_199 : f32 to vector<8x32xf32>
    %465 = arith.mulf %464, %463 : vector<8x32xf32>
    %466 = vector.extract_strided_slice %31 {offsets = [0, 32], sizes = [8, 32], strides = [1, 1]} : vector<8x96xf32> to vector<8x32xf32>
    %467 = vector.extract_strided_slice %455 {offsets = [0, 32], sizes = [8, 32], strides = [1, 1]} : vector<8x96xf32> to vector<8x32xf32>
    %468 = arith.addf %466, %467 : vector<8x32xf32>
    %cst_200 = arith.constant 5.000000e-01 : f32
    %469 = vector.broadcast %cst_200 : f32 to vector<8x32xf32>
    %470 = arith.mulf %469, %468 : vector<8x32xf32>
    %471 = math.tanh %470 : vector<8x32xf32>
    %cst_201 = arith.constant 1.000000e+00 : f32
    %472 = vector.broadcast %cst_201 : f32 to vector<8x32xf32>
    %473 = arith.addf %471, %472 : vector<8x32xf32>
    %cst_202 = arith.constant 5.000000e-01 : f32
    %474 = vector.broadcast %cst_202 : f32 to vector<8x32xf32>
    %475 = arith.mulf %474, %473 : vector<8x32xf32>
    %476 = vector.extract_strided_slice %31 {offsets = [0, 64], sizes = [8, 32], strides = [1, 1]} : vector<8x96xf32> to vector<8x32xf32>
    %477 = vector.extract_strided_slice %455 {offsets = [0, 64], sizes = [8, 32], strides = [1, 1]} : vector<8x96xf32> to vector<8x32xf32>
    %478 = arith.mulf %465, %477 : vector<8x32xf32>
    %479 = arith.addf %476, %478 : vector<8x32xf32>
    %480 = math.tanh %479 : vector<8x32xf32>
    %cst_203 = arith.constant 1.000000e+00 : f32
    %481 = vector.broadcast %cst_203 : f32 to vector<8x32xf32>
    %482 = arith.subf %481, %475 : vector<8x32xf32>
    %483 = arith.mulf %482, %480 : vector<8x32xf32>
    %484 = arith.mulf %475, %381 : vector<8x32xf32>
    %485 = arith.addf %483, %484 : vector<8x32xf32>
    %486 = tpu.concatenate %485, %415 in 1 : vector<8x32xf32>, vector<8x32xf32> -> vector<8x64xf32>
    %c0_204 = arith.constant 0 : index
    %c0_205 = arith.constant 0 : index
    %c0_206 = arith.constant 0 : index
    %487 = vector.load %arg11[%c0_204, %c0_205, %c0_206] : memref<2x64x128xf32, #tpu.memory_space<vmem>>, vector<1x64x128xf32>
    %488 = vector.shape_cast %487 : vector<1x64x128xf32> to vector<64x128xf32>
    %cst_207 = arith.constant dense<0.000000e+00> : vector<8x128xf32>
    %489 = tpu.matmul %486, %488, %cst_207 {dimension_numbers = #tpu.dot_dimension_numbers<[1], [0], [0], [1], [0, 0, 1, 1], [], []>} : vector<8x64xf32>, vector<64x128xf32>, vector<8x128xf32> -> vector<8x128xf32>
    %c0_208 = arith.constant 0 : index
    %c0_209 = arith.constant 0 : index
    %c0_210 = arith.constant 0 : index
    %490 = vector.load %arg12[%c0_208, %c0_209, %c0_210] : memref<2x1x128xf32, #tpu.memory_space<vmem>>, vector<1x1x128xf32>
    %491 = vector.shape_cast %490 : vector<1x1x128xf32> to vector<1x128xf32>
    %492 = vector.broadcast %491 : vector<1x128xf32> to vector<8x128xf32>
    %493 = arith.addf %489, %492 : vector<8x128xf32>
    %494 = vector.extract_strided_slice %493 {offsets = [0, 0], sizes = [8, 32], strides = [1, 1]} : vector<8x128xf32> to vector<8x32xf32>
    %cst_211 = arith.constant 5.000000e-01 : f32
    %495 = vector.broadcast %cst_211 : f32 to vector<8x32xf32>
    %496 = arith.mulf %495, %494 : vector<8x32xf32>
    %497 = math.tanh %496 : vector<8x32xf32>
    %cst_212 = arith.constant 1.000000e+00 : f32
    %498 = vector.broadcast %cst_212 : f32 to vector<8x32xf32>
    %499 = arith.addf %497, %498 : vector<8x32xf32>
    %cst_213 = arith.constant 5.000000e-01 : f32
    %500 = vector.broadcast %cst_213 : f32 to vector<8x32xf32>
    %501 = arith.mulf %500, %499 : vector<8x32xf32>
    %502 = vector.extract_strided_slice %493 {offsets = [0, 32], sizes = [8, 32], strides = [1, 1]} : vector<8x128xf32> to vector<8x32xf32>
    %cst_214 = arith.constant 5.000000e-01 : f32
    %503 = vector.broadcast %cst_214 : f32 to vector<8x32xf32>
    %504 = arith.mulf %503, %502 : vector<8x32xf32>
    %505 = math.tanh %504 : vector<8x32xf32>
    %cst_215 = arith.constant 1.000000e+00 : f32
    %506 = vector.broadcast %cst_215 : f32 to vector<8x32xf32>
    %507 = arith.addf %505, %506 : vector<8x32xf32>
    %cst_216 = arith.constant 5.000000e-01 : f32
    %508 = vector.broadcast %cst_216 : f32 to vector<8x32xf32>
    %509 = arith.mulf %508, %507 : vector<8x32xf32>
    %510 = vector.extract_strided_slice %493 {offsets = [0, 64], sizes = [8, 32], strides = [1, 1]} : vector<8x128xf32> to vector<8x32xf32>
    %511 = vector.extract_strided_slice %493 {offsets = [0, 96], sizes = [8, 32], strides = [1, 1]} : vector<8x128xf32> to vector<8x32xf32>
    %512 = arith.mulf %501, %511 : vector<8x32xf32>
    %513 = arith.addf %510, %512 : vector<8x32xf32>
    %514 = math.tanh %513 : vector<8x32xf32>
    %cst_217 = arith.constant 1.000000e+00 : f32
    %515 = vector.broadcast %cst_217 : f32 to vector<8x32xf32>
    %516 = arith.subf %515, %509 : vector<8x32xf32>
    %517 = arith.mulf %516, %514 : vector<8x32xf32>
    %518 = arith.mulf %509, %415 : vector<8x32xf32>
    %519 = arith.addf %517, %518 : vector<8x32xf32>
    %520 = tpu.concatenate %519, %449 in 1 : vector<8x32xf32>, vector<8x32xf32> -> vector<8x64xf32>
    %c1_218 = arith.constant 1 : index
    %c0_219 = arith.constant 0 : index
    %c0_220 = arith.constant 0 : index
    %521 = vector.load %arg11[%c1_218, %c0_219, %c0_220] : memref<2x64x128xf32, #tpu.memory_space<vmem>>, vector<1x64x128xf32>
    %522 = vector.shape_cast %521 : vector<1x64x128xf32> to vector<64x128xf32>
    %cst_221 = arith.constant dense<0.000000e+00> : vector<8x128xf32>
    %523 = tpu.matmul %520, %522, %cst_221 {dimension_numbers = #tpu.dot_dimension_numbers<[1], [0], [0], [1], [0, 0, 1, 1], [], []>} : vector<8x64xf32>, vector<64x128xf32>, vector<8x128xf32> -> vector<8x128xf32>
    %c1_222 = arith.constant 1 : index
    %c0_223 = arith.constant 0 : index
    %c0_224 = arith.constant 0 : index
    %524 = vector.load %arg12[%c1_222, %c0_223, %c0_224] : memref<2x1x128xf32, #tpu.memory_space<vmem>>, vector<1x1x128xf32>
    %525 = vector.shape_cast %524 : vector<1x1x128xf32> to vector<1x128xf32>
    %526 = vector.broadcast %525 : vector<1x128xf32> to vector<8x128xf32>
    %527 = arith.addf %523, %526 : vector<8x128xf32>
    %528 = vector.extract_strided_slice %527 {offsets = [0, 0], sizes = [8, 32], strides = [1, 1]} : vector<8x128xf32> to vector<8x32xf32>
    %cst_225 = arith.constant 5.000000e-01 : f32
    %529 = vector.broadcast %cst_225 : f32 to vector<8x32xf32>
    %530 = arith.mulf %529, %528 : vector<8x32xf32>
    %531 = math.tanh %530 : vector<8x32xf32>
    %cst_226 = arith.constant 1.000000e+00 : f32
    %532 = vector.broadcast %cst_226 : f32 to vector<8x32xf32>
    %533 = arith.addf %531, %532 : vector<8x32xf32>
    %cst_227 = arith.constant 5.000000e-01 : f32
    %534 = vector.broadcast %cst_227 : f32 to vector<8x32xf32>
    %535 = arith.mulf %534, %533 : vector<8x32xf32>
    %536 = vector.extract_strided_slice %527 {offsets = [0, 32], sizes = [8, 32], strides = [1, 1]} : vector<8x128xf32> to vector<8x32xf32>
    %cst_228 = arith.constant 5.000000e-01 : f32
    %537 = vector.broadcast %cst_228 : f32 to vector<8x32xf32>
    %538 = arith.mulf %537, %536 : vector<8x32xf32>
    %539 = math.tanh %538 : vector<8x32xf32>
    %cst_229 = arith.constant 1.000000e+00 : f32
    %540 = vector.broadcast %cst_229 : f32 to vector<8x32xf32>
    %541 = arith.addf %539, %540 : vector<8x32xf32>
    %cst_230 = arith.constant 5.000000e-01 : f32
    %542 = vector.broadcast %cst_230 : f32 to vector<8x32xf32>
    %543 = arith.mulf %542, %541 : vector<8x32xf32>
    %544 = vector.extract_strided_slice %527 {offsets = [0, 64], sizes = [8, 32], strides = [1, 1]} : vector<8x128xf32> to vector<8x32xf32>
    %545 = vector.extract_strided_slice %527 {offsets = [0, 96], sizes = [8, 32], strides = [1, 1]} : vector<8x128xf32> to vector<8x32xf32>
    %546 = arith.mulf %535, %545 : vector<8x32xf32>
    %547 = arith.addf %544, %546 : vector<8x32xf32>
    %548 = math.tanh %547 : vector<8x32xf32>
    %cst_231 = arith.constant 1.000000e+00 : f32
    %549 = vector.broadcast %cst_231 : f32 to vector<8x32xf32>
    %550 = arith.subf %549, %543 : vector<8x32xf32>
    %551 = arith.mulf %550, %548 : vector<8x32xf32>
    %552 = arith.mulf %543, %449 : vector<8x32xf32>
    %553 = arith.addf %551, %552 : vector<8x32xf32>
    %c32 = arith.constant 32 : index
    %c0_232 = arith.constant 0 : index
    %554 = vector.load %arg19[%c32, %c0_232] : memref<64x32xf32, #tpu.memory_space<vmem>>, vector<8x32xf32>
    tpu.vector_store %arg19[%c32, %c0_232], %553 {strides = array<i32>} : memref<64x32xf32, #tpu.memory_space<vmem>>, vector<8x32xf32>,
    %c0_233 = arith.constant 0 : index
    %c0_234 = arith.constant 0 : index
    %555 = vector.load %arg9[%c0_233, %c0_234] : memref<32x96xf32, #tpu.memory_space<vmem>>, vector<32x96xf32>
    %cst_235 = arith.constant dense<0.000000e+00> : vector<8x96xf32>
    %556 = tpu.matmul %485, %555, %cst_235 {dimension_numbers = #tpu.dot_dimension_numbers<[1], [0], [0], [1], [0, 0, 1, 1], [], []>} : vector<8x32xf32>, vector<32x96xf32>, vector<8x96xf32> -> vector<8x96xf32>
    %c0_236 = arith.constant 0 : index
    %c0_237 = arith.constant 0 : index
    %557 = vector.load %arg10[%c0_236, %c0_237] : memref<1x96xf32, #tpu.memory_space<vmem>>, vector<1x96xf32>
    %558 = vector.broadcast %557 : vector<1x96xf32> to vector<8x96xf32>
    %559 = arith.addf %556, %558 : vector<8x96xf32>
    %560 = vector.extract_strided_slice %31 {offsets = [0, 0], sizes = [8, 32], strides = [1, 1]} : vector<8x96xf32> to vector<8x32xf32>
    %561 = vector.extract_strided_slice %559 {offsets = [0, 0], sizes = [8, 32], strides = [1, 1]} : vector<8x96xf32> to vector<8x32xf32>
    %562 = arith.addf %560, %561 : vector<8x32xf32>
    %cst_238 = arith.constant 5.000000e-01 : f32
    %563 = vector.broadcast %cst_238 : f32 to vector<8x32xf32>
    %564 = arith.mulf %563, %562 : vector<8x32xf32>
    %565 = math.tanh %564 : vector<8x32xf32>
    %cst_239 = arith.constant 1.000000e+00 : f32
    %566 = vector.broadcast %cst_239 : f32 to vector<8x32xf32>
    %567 = arith.addf %565, %566 : vector<8x32xf32>
    %cst_240 = arith.constant 5.000000e-01 : f32
    %568 = vector.broadcast %cst_240 : f32 to vector<8x32xf32>
    %569 = arith.mulf %568, %567 : vector<8x32xf32>
    %570 = vector.extract_strided_slice %31 {offsets = [0, 32], sizes = [8, 32], strides = [1, 1]} : vector<8x96xf32> to vector<8x32xf32>
    %571 = vector.extract_strided_slice %559 {offsets = [0, 32], sizes = [8, 32], strides = [1, 1]} : vector<8x96xf32> to vector<8x32xf32>
    %572 = arith.addf %570, %571 : vector<8x32xf32>
    %cst_241 = arith.constant 5.000000e-01 : f32
    %573 = vector.broadcast %cst_241 : f32 to vector<8x32xf32>
    %574 = arith.mulf %573, %572 : vector<8x32xf32>
    %575 = math.tanh %574 : vector<8x32xf32>
    %cst_242 = arith.constant 1.000000e+00 : f32
    %576 = vector.broadcast %cst_242 : f32 to vector<8x32xf32>
    %577 = arith.addf %575, %576 : vector<8x32xf32>
    %cst_243 = arith.constant 5.000000e-01 : f32
    %578 = vector.broadcast %cst_243 : f32 to vector<8x32xf32>
    %579 = arith.mulf %578, %577 : vector<8x32xf32>
    %580 = vector.extract_strided_slice %31 {offsets = [0, 64], sizes = [8, 32], strides = [1, 1]} : vector<8x96xf32> to vector<8x32xf32>
    %581 = vector.extract_strided_slice %559 {offsets = [0, 64], sizes = [8, 32], strides = [1, 1]} : vector<8x96xf32> to vector<8x32xf32>
    %582 = arith.mulf %569, %581 : vector<8x32xf32>
    %583 = arith.addf %580, %582 : vector<8x32xf32>
    %584 = math.tanh %583 : vector<8x32xf32>
    %cst_244 = arith.constant 1.000000e+00 : f32
    %585 = vector.broadcast %cst_244 : f32 to vector<8x32xf32>
    %586 = arith.subf %585, %579 : vector<8x32xf32>
    %587 = arith.mulf %586, %584 : vector<8x32xf32>
    %588 = arith.mulf %579, %485 : vector<8x32xf32>
    %589 = arith.addf %587, %588 : vector<8x32xf32>
    %590 = tpu.concatenate %589, %519 in 1 : vector<8x32xf32>, vector<8x32xf32> -> vector<8x64xf32>
    %c0_245 = arith.constant 0 : index
    %c0_246 = arith.constant 0 : index
    %c0_247 = arith.constant 0 : index
    %591 = vector.load %arg11[%c0_245, %c0_246, %c0_247] : memref<2x64x128xf32, #tpu.memory_space<vmem>>, vector<1x64x128xf32>
    %592 = vector.shape_cast %591 : vector<1x64x128xf32> to vector<64x128xf32>
    %cst_248 = arith.constant dense<0.000000e+00> : vector<8x128xf32>
    %593 = tpu.matmul %590, %592, %cst_248 {dimension_numbers = #tpu.dot_dimension_numbers<[1], [0], [0], [1], [0, 0, 1, 1], [], []>} : vector<8x64xf32>, vector<64x128xf32>, vector<8x128xf32> -> vector<8x128xf32>
    %c0_249 = arith.constant 0 : index
    %c0_250 = arith.constant 0 : index
    %c0_251 = arith.constant 0 : index
    %594 = vector.load %arg12[%c0_249, %c0_250, %c0_251] : memref<2x1x128xf32, #tpu.memory_space<vmem>>, vector<1x1x128xf32>
    %595 = vector.shape_cast %594 : vector<1x1x128xf32> to vector<1x128xf32>
    %596 = vector.broadcast %595 : vector<1x128xf32> to vector<8x128xf32>
    %597 = arith.addf %593, %596 : vector<8x128xf32>
    %598 = vector.extract_strided_slice %597 {offsets = [0, 0], sizes = [8, 32], strides = [1, 1]} : vector<8x128xf32> to vector<8x32xf32>
    %cst_252 = arith.constant 5.000000e-01 : f32
    %599 = vector.broadcast %cst_252 : f32 to vector<8x32xf32>
    %600 = arith.mulf %599, %598 : vector<8x32xf32>
    %601 = math.tanh %600 : vector<8x32xf32>
    %cst_253 = arith.constant 1.000000e+00 : f32
    %602 = vector.broadcast %cst_253 : f32 to vector<8x32xf32>
    %603 = arith.addf %601, %602 : vector<8x32xf32>
    %cst_254 = arith.constant 5.000000e-01 : f32
    %604 = vector.broadcast %cst_254 : f32 to vector<8x32xf32>
    %605 = arith.mulf %604, %603 : vector<8x32xf32>
    %606 = vector.extract_strided_slice %597 {offsets = [0, 32], sizes = [8, 32], strides = [1, 1]} : vector<8x128xf32> to vector<8x32xf32>
    %cst_255 = arith.constant 5.000000e-01 : f32
    %607 = vector.broadcast %cst_255 : f32 to vector<8x32xf32>
    %608 = arith.mulf %607, %606 : vector<8x32xf32>
    %609 = math.tanh %608 : vector<8x32xf32>
    %cst_256 = arith.constant 1.000000e+00 : f32
    %610 = vector.broadcast %cst_256 : f32 to vector<8x32xf32>
    %611 = arith.addf %609, %610 : vector<8x32xf32>
    %cst_257 = arith.constant 5.000000e-01 : f32
    %612 = vector.broadcast %cst_257 : f32 to vector<8x32xf32>
    %613 = arith.mulf %612, %611 : vector<8x32xf32>
    %614 = vector.extract_strided_slice %597 {offsets = [0, 64], sizes = [8, 32], strides = [1, 1]} : vector<8x128xf32> to vector<8x32xf32>
    %615 = vector.extract_strided_slice %597 {offsets = [0, 96], sizes = [8, 32], strides = [1, 1]} : vector<8x128xf32> to vector<8x32xf32>
    %616 = arith.mulf %605, %615 : vector<8x32xf32>
    %617 = arith.addf %614, %616 : vector<8x32xf32>
    %618 = math.tanh %617 : vector<8x32xf32>
    %cst_258 = arith.constant 1.000000e+00 : f32
    %619 = vector.broadcast %cst_258 : f32 to vector<8x32xf32>
    %620 = arith.subf %619, %613 : vector<8x32xf32>
    %621 = arith.mulf %620, %618 : vector<8x32xf32>
    %622 = arith.mulf %613, %519 : vector<8x32xf32>
    %623 = arith.addf %621, %622 : vector<8x32xf32>
    %624 = tpu.concatenate %623, %553 in 1 : vector<8x32xf32>, vector<8x32xf32> -> vector<8x64xf32>
    %c1_259 = arith.constant 1 : index
    %c0_260 = arith.constant 0 : index
    %c0_261 = arith.constant 0 : index
    %625 = vector.load %arg11[%c1_259, %c0_260, %c0_261] : memref<2x64x128xf32, #tpu.memory_space<vmem>>, vector<1x64x128xf32>
    %626 = vector.shape_cast %625 : vector<1x64x128xf32> to vector<64x128xf32>
    %cst_262 = arith.constant dense<0.000000e+00> : vector<8x128xf32>
    %627 = tpu.matmul %624, %626, %cst_262 {dimension_numbers = #tpu.dot_dimension_numbers<[1], [0], [0], [1], [0, 0, 1, 1], [], []>} : vector<8x64xf32>, vector<64x128xf32>, vector<8x128xf32> -> vector<8x128xf32>
    %c1_263 = arith.constant 1 : index
    %c0_264 = arith.constant 0 : index
    %c0_265 = arith.constant 0 : index
    %628 = vector.load %arg12[%c1_263, %c0_264, %c0_265] : memref<2x1x128xf32, #tpu.memory_space<vmem>>, vector<1x1x128xf32>
    %629 = vector.shape_cast %628 : vector<1x1x128xf32> to vector<1x128xf32>
    %630 = vector.broadcast %629 : vector<1x128xf32> to vector<8x128xf32>
    %631 = arith.addf %627, %630 : vector<8x128xf32>
    %632 = vector.extract_strided_slice %631 {offsets = [0, 0], sizes = [8, 32], strides = [1, 1]} : vector<8x128xf32> to vector<8x32xf32>
    %cst_266 = arith.constant 5.000000e-01 : f32
    %633 = vector.broadcast %cst_266 : f32 to vector<8x32xf32>
    %634 = arith.mulf %633, %632 : vector<8x32xf32>
    %635 = math.tanh %634 : vector<8x32xf32>
    %cst_267 = arith.constant 1.000000e+00 : f32
    %636 = vector.broadcast %cst_267 : f32 to vector<8x32xf32>
    %637 = arith.addf %635, %636 : vector<8x32xf32>
    %cst_268 = arith.constant 5.000000e-01 : f32
    %638 = vector.broadcast %cst_268 : f32 to vector<8x32xf32>
    %639 = arith.mulf %638, %637 : vector<8x32xf32>
    %640 = vector.extract_strided_slice %631 {offsets = [0, 32], sizes = [8, 32], strides = [1, 1]} : vector<8x128xf32> to vector<8x32xf32>
    %cst_269 = arith.constant 5.000000e-01 : f32
    %641 = vector.broadcast %cst_269 : f32 to vector<8x32xf32>
    %642 = arith.mulf %641, %640 : vector<8x32xf32>
    %643 = math.tanh %642 : vector<8x32xf32>
    %cst_270 = arith.constant 1.000000e+00 : f32
    %644 = vector.broadcast %cst_270 : f32 to vector<8x32xf32>
    %645 = arith.addf %643, %644 : vector<8x32xf32>
    %cst_271 = arith.constant 5.000000e-01 : f32
    %646 = vector.broadcast %cst_271 : f32 to vector<8x32xf32>
    %647 = arith.mulf %646, %645 : vector<8x32xf32>
    %648 = vector.extract_strided_slice %631 {offsets = [0, 64], sizes = [8, 32], strides = [1, 1]} : vector<8x128xf32> to vector<8x32xf32>
    %649 = vector.extract_strided_slice %631 {offsets = [0, 96], sizes = [8, 32], strides = [1, 1]} : vector<8x128xf32> to vector<8x32xf32>
    %650 = arith.mulf %639, %649 : vector<8x32xf32>
    %651 = arith.addf %648, %650 : vector<8x32xf32>
    %652 = math.tanh %651 : vector<8x32xf32>
    %cst_272 = arith.constant 1.000000e+00 : f32
    %653 = vector.broadcast %cst_272 : f32 to vector<8x32xf32>
    %654 = arith.subf %653, %647 : vector<8x32xf32>
    %655 = arith.mulf %654, %652 : vector<8x32xf32>
    %656 = arith.mulf %647, %553 : vector<8x32xf32>
    %657 = arith.addf %655, %656 : vector<8x32xf32>
    %c40 = arith.constant 40 : index
    %c0_273 = arith.constant 0 : index
    %658 = vector.load %arg19[%c40, %c0_273] : memref<64x32xf32, #tpu.memory_space<vmem>>, vector<8x32xf32>
    tpu.vector_store %arg19[%c40, %c0_273], %657 {strides = array<i32>} : memref<64x32xf32, #tpu.memory_space<vmem>>, vector<8x32xf32>,
    %c0_274 = arith.constant 0 : index
    %c0_275 = arith.constant 0 : index
    %659 = vector.load %arg9[%c0_274, %c0_275] : memref<32x96xf32, #tpu.memory_space<vmem>>, vector<32x96xf32>
    %cst_276 = arith.constant dense<0.000000e+00> : vector<8x96xf32>
    %660 = tpu.matmul %589, %659, %cst_276 {dimension_numbers = #tpu.dot_dimension_numbers<[1], [0], [0], [1], [0, 0, 1, 1], [], []>} : vector<8x32xf32>, vector<32x96xf32>, vector<8x96xf32> -> vector<8x96xf32>
    %c0_277 = arith.constant 0 : index
    %c0_278 = arith.constant 0 : index
    %661 = vector.load %arg10[%c0_277, %c0_278] : memref<1x96xf32, #tpu.memory_space<vmem>>, vector<1x96xf32>
    %662 = vector.broadcast %661 : vector<1x96xf32> to vector<8x96xf32>
    %663 = arith.addf %660, %662 : vector<8x96xf32>
    %664 = vector.extract_strided_slice %31 {offsets = [0, 0], sizes = [8, 32], strides = [1, 1]} : vector<8x96xf32> to vector<8x32xf32>
    %665 = vector.extract_strided_slice %663 {offsets = [0, 0], sizes = [8, 32], strides = [1, 1]} : vector<8x96xf32> to vector<8x32xf32>
    %666 = arith.addf %664, %665 : vector<8x32xf32>
    %cst_279 = arith.constant 5.000000e-01 : f32
    %667 = vector.broadcast %cst_279 : f32 to vector<8x32xf32>
    %668 = arith.mulf %667, %666 : vector<8x32xf32>
    %669 = math.tanh %668 : vector<8x32xf32>
    %cst_280 = arith.constant 1.000000e+00 : f32
    %670 = vector.broadcast %cst_280 : f32 to vector<8x32xf32>
    %671 = arith.addf %669, %670 : vector<8x32xf32>
    %cst_281 = arith.constant 5.000000e-01 : f32
    %672 = vector.broadcast %cst_281 : f32 to vector<8x32xf32>
    %673 = arith.mulf %672, %671 : vector<8x32xf32>
    %674 = vector.extract_strided_slice %31 {offsets = [0, 32], sizes = [8, 32], strides = [1, 1]} : vector<8x96xf32> to vector<8x32xf32>
    %675 = vector.extract_strided_slice %663 {offsets = [0, 32], sizes = [8, 32], strides = [1, 1]} : vector<8x96xf32> to vector<8x32xf32>
    %676 = arith.addf %674, %675 : vector<8x32xf32>
    %cst_282 = arith.constant 5.000000e-01 : f32
    %677 = vector.broadcast %cst_282 : f32 to vector<8x32xf32>
    %678 = arith.mulf %677, %676 : vector<8x32xf32>
    %679 = math.tanh %678 : vector<8x32xf32>
    %cst_283 = arith.constant 1.000000e+00 : f32
    %680 = vector.broadcast %cst_283 : f32 to vector<8x32xf32>
    %681 = arith.addf %679, %680 : vector<8x32xf32>
    %cst_284 = arith.constant 5.000000e-01 : f32
    %682 = vector.broadcast %cst_284 : f32 to vector<8x32xf32>
    %683 = arith.mulf %682, %681 : vector<8x32xf32>
    %684 = vector.extract_strided_slice %31 {offsets = [0, 64], sizes = [8, 32], strides = [1, 1]} : vector<8x96xf32> to vector<8x32xf32>
    %685 = vector.extract_strided_slice %663 {offsets = [0, 64], sizes = [8, 32], strides = [1, 1]} : vector<8x96xf32> to vector<8x32xf32>
    %686 = arith.mulf %673, %685 : vector<8x32xf32>
    %687 = arith.addf %684, %686 : vector<8x32xf32>
    %688 = math.tanh %687 : vector<8x32xf32>
    %cst_285 = arith.constant 1.000000e+00 : f32
    %689 = vector.broadcast %cst_285 : f32 to vector<8x32xf32>
    %690 = arith.subf %689, %683 : vector<8x32xf32>
    %691 = arith.mulf %690, %688 : vector<8x32xf32>
    %692 = arith.mulf %683, %589 : vector<8x32xf32>
    %693 = arith.addf %691, %692 : vector<8x32xf32>
    %694 = tpu.concatenate %693, %623 in 1 : vector<8x32xf32>, vector<8x32xf32> -> vector<8x64xf32>
    %c0_286 = arith.constant 0 : index
    %c0_287 = arith.constant 0 : index
    %c0_288 = arith.constant 0 : index
    %695 = vector.load %arg11[%c0_286, %c0_287, %c0_288] : memref<2x64x128xf32, #tpu.memory_space<vmem>>, vector<1x64x128xf32>
    %696 = vector.shape_cast %695 : vector<1x64x128xf32> to vector<64x128xf32>
    %cst_289 = arith.constant dense<0.000000e+00> : vector<8x128xf32>
    %697 = tpu.matmul %694, %696, %cst_289 {dimension_numbers = #tpu.dot_dimension_numbers<[1], [0], [0], [1], [0, 0, 1, 1], [], []>} : vector<8x64xf32>, vector<64x128xf32>, vector<8x128xf32> -> vector<8x128xf32>
    %c0_290 = arith.constant 0 : index
    %c0_291 = arith.constant 0 : index
    %c0_292 = arith.constant 0 : index
    %698 = vector.load %arg12[%c0_290, %c0_291, %c0_292] : memref<2x1x128xf32, #tpu.memory_space<vmem>>, vector<1x1x128xf32>
    %699 = vector.shape_cast %698 : vector<1x1x128xf32> to vector<1x128xf32>
    %700 = vector.broadcast %699 : vector<1x128xf32> to vector<8x128xf32>
    %701 = arith.addf %697, %700 : vector<8x128xf32>
    %702 = vector.extract_strided_slice %701 {offsets = [0, 0], sizes = [8, 32], strides = [1, 1]} : vector<8x128xf32> to vector<8x32xf32>
    %cst_293 = arith.constant 5.000000e-01 : f32
    %703 = vector.broadcast %cst_293 : f32 to vector<8x32xf32>
    %704 = arith.mulf %703, %702 : vector<8x32xf32>
    %705 = math.tanh %704 : vector<8x32xf32>
    %cst_294 = arith.constant 1.000000e+00 : f32
    %706 = vector.broadcast %cst_294 : f32 to vector<8x32xf32>
    %707 = arith.addf %705, %706 : vector<8x32xf32>
    %cst_295 = arith.constant 5.000000e-01 : f32
    %708 = vector.broadcast %cst_295 : f32 to vector<8x32xf32>
    %709 = arith.mulf %708, %707 : vector<8x32xf32>
    %710 = vector.extract_strided_slice %701 {offsets = [0, 32], sizes = [8, 32], strides = [1, 1]} : vector<8x128xf32> to vector<8x32xf32>
    %cst_296 = arith.constant 5.000000e-01 : f32
    %711 = vector.broadcast %cst_296 : f32 to vector<8x32xf32>
    %712 = arith.mulf %711, %710 : vector<8x32xf32>
    %713 = math.tanh %712 : vector<8x32xf32>
    %cst_297 = arith.constant 1.000000e+00 : f32
    %714 = vector.broadcast %cst_297 : f32 to vector<8x32xf32>
    %715 = arith.addf %713, %714 : vector<8x32xf32>
    %cst_298 = arith.constant 5.000000e-01 : f32
    %716 = vector.broadcast %cst_298 : f32 to vector<8x32xf32>
    %717 = arith.mulf %716, %715 : vector<8x32xf32>
    %718 = vector.extract_strided_slice %701 {offsets = [0, 64], sizes = [8, 32], strides = [1, 1]} : vector<8x128xf32> to vector<8x32xf32>
    %719 = vector.extract_strided_slice %701 {offsets = [0, 96], sizes = [8, 32], strides = [1, 1]} : vector<8x128xf32> to vector<8x32xf32>
    %720 = arith.mulf %709, %719 : vector<8x32xf32>
    %721 = arith.addf %718, %720 : vector<8x32xf32>
    %722 = math.tanh %721 : vector<8x32xf32>
    %cst_299 = arith.constant 1.000000e+00 : f32
    %723 = vector.broadcast %cst_299 : f32 to vector<8x32xf32>
    %724 = arith.subf %723, %717 : vector<8x32xf32>
    %725 = arith.mulf %724, %722 : vector<8x32xf32>
    %726 = arith.mulf %717, %623 : vector<8x32xf32>
    %727 = arith.addf %725, %726 : vector<8x32xf32>
    %728 = tpu.concatenate %727, %657 in 1 : vector<8x32xf32>, vector<8x32xf32> -> vector<8x64xf32>
    %c1_300 = arith.constant 1 : index
    %c0_301 = arith.constant 0 : index
    %c0_302 = arith.constant 0 : index
    %729 = vector.load %arg11[%c1_300, %c0_301, %c0_302] : memref<2x64x128xf32, #tpu.memory_space<vmem>>, vector<1x64x128xf32>
    %730 = vector.shape_cast %729 : vector<1x64x128xf32> to vector<64x128xf32>
    %cst_303 = arith.constant dense<0.000000e+00> : vector<8x128xf32>
    %731 = tpu.matmul %728, %730, %cst_303 {dimension_numbers = #tpu.dot_dimension_numbers<[1], [0], [0], [1], [0, 0, 1, 1], [], []>} : vector<8x64xf32>, vector<64x128xf32>, vector<8x128xf32> -> vector<8x128xf32>
    %c1_304 = arith.constant 1 : index
    %c0_305 = arith.constant 0 : index
    %c0_306 = arith.constant 0 : index
    %732 = vector.load %arg12[%c1_304, %c0_305, %c0_306] : memref<2x1x128xf32, #tpu.memory_space<vmem>>, vector<1x1x128xf32>
    %733 = vector.shape_cast %732 : vector<1x1x128xf32> to vector<1x128xf32>
    %734 = vector.broadcast %733 : vector<1x128xf32> to vector<8x128xf32>
    %735 = arith.addf %731, %734 : vector<8x128xf32>
    %736 = vector.extract_strided_slice %735 {offsets = [0, 0], sizes = [8, 32], strides = [1, 1]} : vector<8x128xf32> to vector<8x32xf32>
    %cst_307 = arith.constant 5.000000e-01 : f32
    %737 = vector.broadcast %cst_307 : f32 to vector<8x32xf32>
    %738 = arith.mulf %737, %736 : vector<8x32xf32>
    %739 = math.tanh %738 : vector<8x32xf32>
    %cst_308 = arith.constant 1.000000e+00 : f32
    %740 = vector.broadcast %cst_308 : f32 to vector<8x32xf32>
    %741 = arith.addf %739, %740 : vector<8x32xf32>
    %cst_309 = arith.constant 5.000000e-01 : f32
    %742 = vector.broadcast %cst_309 : f32 to vector<8x32xf32>
    %743 = arith.mulf %742, %741 : vector<8x32xf32>
    %744 = vector.extract_strided_slice %735 {offsets = [0, 32], sizes = [8, 32], strides = [1, 1]} : vector<8x128xf32> to vector<8x32xf32>
    %cst_310 = arith.constant 5.000000e-01 : f32
    %745 = vector.broadcast %cst_310 : f32 to vector<8x32xf32>
    %746 = arith.mulf %745, %744 : vector<8x32xf32>
    %747 = math.tanh %746 : vector<8x32xf32>
    %cst_311 = arith.constant 1.000000e+00 : f32
    %748 = vector.broadcast %cst_311 : f32 to vector<8x32xf32>
    %749 = arith.addf %747, %748 : vector<8x32xf32>
    %cst_312 = arith.constant 5.000000e-01 : f32
    %750 = vector.broadcast %cst_312 : f32 to vector<8x32xf32>
    %751 = arith.mulf %750, %749 : vector<8x32xf32>
    %752 = vector.extract_strided_slice %735 {offsets = [0, 64], sizes = [8, 32], strides = [1, 1]} : vector<8x128xf32> to vector<8x32xf32>
    %753 = vector.extract_strided_slice %735 {offsets = [0, 96], sizes = [8, 32], strides = [1, 1]} : vector<8x128xf32> to vector<8x32xf32>
    %754 = arith.mulf %743, %753 : vector<8x32xf32>
    %755 = arith.addf %752, %754 : vector<8x32xf32>
    %756 = math.tanh %755 : vector<8x32xf32>
    %cst_313 = arith.constant 1.000000e+00 : f32
    %757 = vector.broadcast %cst_313 : f32 to vector<8x32xf32>
    %758 = arith.subf %757, %751 : vector<8x32xf32>
    %759 = arith.mulf %758, %756 : vector<8x32xf32>
    %760 = arith.mulf %751, %657 : vector<8x32xf32>
    %761 = arith.addf %759, %760 : vector<8x32xf32>
    %c48 = arith.constant 48 : index
    %c0_314 = arith.constant 0 : index
    %762 = vector.load %arg19[%c48, %c0_314] : memref<64x32xf32, #tpu.memory_space<vmem>>, vector<8x32xf32>
    tpu.vector_store %arg19[%c48, %c0_314], %761 {strides = array<i32>} : memref<64x32xf32, #tpu.memory_space<vmem>>, vector<8x32xf32>,
    %c0_315 = arith.constant 0 : index
    %c0_316 = arith.constant 0 : index
    %763 = vector.load %arg9[%c0_315, %c0_316] : memref<32x96xf32, #tpu.memory_space<vmem>>, vector<32x96xf32>
    %cst_317 = arith.constant dense<0.000000e+00> : vector<8x96xf32>
    %764 = tpu.matmul %693, %763, %cst_317 {dimension_numbers = #tpu.dot_dimension_numbers<[1], [0], [0], [1], [0, 0, 1, 1], [], []>} : vector<8x32xf32>, vector<32x96xf32>, vector<8x96xf32> -> vector<8x96xf32>
    %c0_318 = arith.constant 0 : index
    %c0_319 = arith.constant 0 : index
    %765 = vector.load %arg10[%c0_318, %c0_319] : memref<1x96xf32, #tpu.memory_space<vmem>>, vector<1x96xf32>
    %766 = vector.broadcast %765 : vector<1x96xf32> to vector<8x96xf32>
    %767 = arith.addf %764, %766 : vector<8x96xf32>
    %768 = vector.extract_strided_slice %31 {offsets = [0, 0], sizes = [8, 32], strides = [1, 1]} : vector<8x96xf32> to vector<8x32xf32>
    %769 = vector.extract_strided_slice %767 {offsets = [0, 0], sizes = [8, 32], strides = [1, 1]} : vector<8x96xf32> to vector<8x32xf32>
    %770 = arith.addf %768, %769 : vector<8x32xf32>
    %cst_320 = arith.constant 5.000000e-01 : f32
    %771 = vector.broadcast %cst_320 : f32 to vector<8x32xf32>
    %772 = arith.mulf %771, %770 : vector<8x32xf32>
    %773 = math.tanh %772 : vector<8x32xf32>
    %cst_321 = arith.constant 1.000000e+00 : f32
    %774 = vector.broadcast %cst_321 : f32 to vector<8x32xf32>
    %775 = arith.addf %773, %774 : vector<8x32xf32>
    %cst_322 = arith.constant 5.000000e-01 : f32
    %776 = vector.broadcast %cst_322 : f32 to vector<8x32xf32>
    %777 = arith.mulf %776, %775 : vector<8x32xf32>
    %778 = vector.extract_strided_slice %31 {offsets = [0, 32], sizes = [8, 32], strides = [1, 1]} : vector<8x96xf32> to vector<8x32xf32>
    %779 = vector.extract_strided_slice %767 {offsets = [0, 32], sizes = [8, 32], strides = [1, 1]} : vector<8x96xf32> to vector<8x32xf32>
    %780 = arith.addf %778, %779 : vector<8x32xf32>
    %cst_323 = arith.constant 5.000000e-01 : f32
    %781 = vector.broadcast %cst_323 : f32 to vector<8x32xf32>
    %782 = arith.mulf %781, %780 : vector<8x32xf32>
    %783 = math.tanh %782 : vector<8x32xf32>
    %cst_324 = arith.constant 1.000000e+00 : f32
    %784 = vector.broadcast %cst_324 : f32 to vector<8x32xf32>
    %785 = arith.addf %783, %784 : vector<8x32xf32>
    %cst_325 = arith.constant 5.000000e-01 : f32
    %786 = vector.broadcast %cst_325 : f32 to vector<8x32xf32>
    %787 = arith.mulf %786, %785 : vector<8x32xf32>
    %788 = vector.extract_strided_slice %31 {offsets = [0, 64], sizes = [8, 32], strides = [1, 1]} : vector<8x96xf32> to vector<8x32xf32>
    %789 = vector.extract_strided_slice %767 {offsets = [0, 64], sizes = [8, 32], strides = [1, 1]} : vector<8x96xf32> to vector<8x32xf32>
    %790 = arith.mulf %777, %789 : vector<8x32xf32>
    %791 = arith.addf %788, %790 : vector<8x32xf32>
    %792 = math.tanh %791 : vector<8x32xf32>
    %cst_326 = arith.constant 1.000000e+00 : f32
    %793 = vector.broadcast %cst_326 : f32 to vector<8x32xf32>
    %794 = arith.subf %793, %787 : vector<8x32xf32>
    %795 = arith.mulf %794, %792 : vector<8x32xf32>
    %796 = arith.mulf %787, %693 : vector<8x32xf32>
    %797 = arith.addf %795, %796 : vector<8x32xf32>
    %798 = tpu.concatenate %797, %727 in 1 : vector<8x32xf32>, vector<8x32xf32> -> vector<8x64xf32>
    %c0_327 = arith.constant 0 : index
    %c0_328 = arith.constant 0 : index
    %c0_329 = arith.constant 0 : index
    %799 = vector.load %arg11[%c0_327, %c0_328, %c0_329] : memref<2x64x128xf32, #tpu.memory_space<vmem>>, vector<1x64x128xf32>
    %800 = vector.shape_cast %799 : vector<1x64x128xf32> to vector<64x128xf32>
    %cst_330 = arith.constant dense<0.000000e+00> : vector<8x128xf32>
    %801 = tpu.matmul %798, %800, %cst_330 {dimension_numbers = #tpu.dot_dimension_numbers<[1], [0], [0], [1], [0, 0, 1, 1], [], []>} : vector<8x64xf32>, vector<64x128xf32>, vector<8x128xf32> -> vector<8x128xf32>
    %c0_331 = arith.constant 0 : index
    %c0_332 = arith.constant 0 : index
    %c0_333 = arith.constant 0 : index
    %802 = vector.load %arg12[%c0_331, %c0_332, %c0_333] : memref<2x1x128xf32, #tpu.memory_space<vmem>>, vector<1x1x128xf32>
    %803 = vector.shape_cast %802 : vector<1x1x128xf32> to vector<1x128xf32>
    %804 = vector.broadcast %803 : vector<1x128xf32> to vector<8x128xf32>
    %805 = arith.addf %801, %804 : vector<8x128xf32>
    %806 = vector.extract_strided_slice %805 {offsets = [0, 0], sizes = [8, 32], strides = [1, 1]} : vector<8x128xf32> to vector<8x32xf32>
    %cst_334 = arith.constant 5.000000e-01 : f32
    %807 = vector.broadcast %cst_334 : f32 to vector<8x32xf32>
    %808 = arith.mulf %807, %806 : vector<8x32xf32>
    %809 = math.tanh %808 : vector<8x32xf32>
    %cst_335 = arith.constant 1.000000e+00 : f32
    %810 = vector.broadcast %cst_335 : f32 to vector<8x32xf32>
    %811 = arith.addf %809, %810 : vector<8x32xf32>
    %cst_336 = arith.constant 5.000000e-01 : f32
    %812 = vector.broadcast %cst_336 : f32 to vector<8x32xf32>
    %813 = arith.mulf %812, %811 : vector<8x32xf32>
    %814 = vector.extract_strided_slice %805 {offsets = [0, 32], sizes = [8, 32], strides = [1, 1]} : vector<8x128xf32> to vector<8x32xf32>
    %cst_337 = arith.constant 5.000000e-01 : f32
    %815 = vector.broadcast %cst_337 : f32 to vector<8x32xf32>
    %816 = arith.mulf %815, %814 : vector<8x32xf32>
    %817 = math.tanh %816 : vector<8x32xf32>
    %cst_338 = arith.constant 1.000000e+00 : f32
    %818 = vector.broadcast %cst_338 : f32 to vector<8x32xf32>
    %819 = arith.addf %817, %818 : vector<8x32xf32>
    %cst_339 = arith.constant 5.000000e-01 : f32
    %820 = vector.broadcast %cst_339 : f32 to vector<8x32xf32>
    %821 = arith.mulf %820, %819 : vector<8x32xf32>
    %822 = vector.extract_strided_slice %805 {offsets = [0, 64], sizes = [8, 32], strides = [1, 1]} : vector<8x128xf32> to vector<8x32xf32>
    %823 = vector.extract_strided_slice %805 {offsets = [0, 96], sizes = [8, 32], strides = [1, 1]} : vector<8x128xf32> to vector<8x32xf32>
    %824 = arith.mulf %813, %823 : vector<8x32xf32>
    %825 = arith.addf %822, %824 : vector<8x32xf32>
    %826 = math.tanh %825 : vector<8x32xf32>
    %cst_340 = arith.constant 1.000000e+00 : f32
    %827 = vector.broadcast %cst_340 : f32 to vector<8x32xf32>
    %828 = arith.subf %827, %821 : vector<8x32xf32>
    %829 = arith.mulf %828, %826 : vector<8x32xf32>
    %830 = arith.mulf %821, %727 : vector<8x32xf32>
    %831 = arith.addf %829, %830 : vector<8x32xf32>
    %832 = tpu.concatenate %831, %761 in 1 : vector<8x32xf32>, vector<8x32xf32> -> vector<8x64xf32>
    %c1_341 = arith.constant 1 : index
    %c0_342 = arith.constant 0 : index
    %c0_343 = arith.constant 0 : index
    %833 = vector.load %arg11[%c1_341, %c0_342, %c0_343] : memref<2x64x128xf32, #tpu.memory_space<vmem>>, vector<1x64x128xf32>
    %834 = vector.shape_cast %833 : vector<1x64x128xf32> to vector<64x128xf32>
    %cst_344 = arith.constant dense<0.000000e+00> : vector<8x128xf32>
    %835 = tpu.matmul %832, %834, %cst_344 {dimension_numbers = #tpu.dot_dimension_numbers<[1], [0], [0], [1], [0, 0, 1, 1], [], []>} : vector<8x64xf32>, vector<64x128xf32>, vector<8x128xf32> -> vector<8x128xf32>
    %c1_345 = arith.constant 1 : index
    %c0_346 = arith.constant 0 : index
    %c0_347 = arith.constant 0 : index
    %836 = vector.load %arg12[%c1_345, %c0_346, %c0_347] : memref<2x1x128xf32, #tpu.memory_space<vmem>>, vector<1x1x128xf32>
    %837 = vector.shape_cast %836 : vector<1x1x128xf32> to vector<1x128xf32>
    %838 = vector.broadcast %837 : vector<1x128xf32> to vector<8x128xf32>
    %839 = arith.addf %835, %838 : vector<8x128xf32>
    %840 = vector.extract_strided_slice %839 {offsets = [0, 0], sizes = [8, 32], strides = [1, 1]} : vector<8x128xf32> to vector<8x32xf32>
    %cst_348 = arith.constant 5.000000e-01 : f32
    %841 = vector.broadcast %cst_348 : f32 to vector<8x32xf32>
    %842 = arith.mulf %841, %840 : vector<8x32xf32>
    %843 = math.tanh %842 : vector<8x32xf32>
    %cst_349 = arith.constant 1.000000e+00 : f32
    %844 = vector.broadcast %cst_349 : f32 to vector<8x32xf32>
    %845 = arith.addf %843, %844 : vector<8x32xf32>
    %cst_350 = arith.constant 5.000000e-01 : f32
    %846 = vector.broadcast %cst_350 : f32 to vector<8x32xf32>
    %847 = arith.mulf %846, %845 : vector<8x32xf32>
    %848 = vector.extract_strided_slice %839 {offsets = [0, 32], sizes = [8, 32], strides = [1, 1]} : vector<8x128xf32> to vector<8x32xf32>
    %cst_351 = arith.constant 5.000000e-01 : f32
    %849 = vector.broadcast %cst_351 : f32 to vector<8x32xf32>
    %850 = arith.mulf %849, %848 : vector<8x32xf32>
    %851 = math.tanh %850 : vector<8x32xf32>
    %cst_352 = arith.constant 1.000000e+00 : f32
    %852 = vector.broadcast %cst_352 : f32 to vector<8x32xf32>
    %853 = arith.addf %851, %852 : vector<8x32xf32>
    %cst_353 = arith.constant 5.000000e-01 : f32
    %854 = vector.broadcast %cst_353 : f32 to vector<8x32xf32>
    %855 = arith.mulf %854, %853 : vector<8x32xf32>
    %856 = vector.extract_strided_slice %839 {offsets = [0, 64], sizes = [8, 32], strides = [1, 1]} : vector<8x128xf32> to vector<8x32xf32>
    %857 = vector.extract_strided_slice %839 {offsets = [0, 96], sizes = [8, 32], strides = [1, 1]} : vector<8x128xf32> to vector<8x32xf32>
    %858 = arith.mulf %847, %857 : vector<8x32xf32>
    %859 = arith.addf %856, %858 : vector<8x32xf32>
    %860 = math.tanh %859 : vector<8x32xf32>
    %cst_354 = arith.constant 1.000000e+00 : f32
    %861 = vector.broadcast %cst_354 : f32 to vector<8x32xf32>
    %862 = arith.subf %861, %855 : vector<8x32xf32>
    %863 = arith.mulf %862, %860 : vector<8x32xf32>
    %864 = arith.mulf %855, %761 : vector<8x32xf32>
    %865 = arith.addf %863, %864 : vector<8x32xf32>
    %c56 = arith.constant 56 : index
    %c0_355 = arith.constant 0 : index
    %866 = vector.load %arg19[%c56, %c0_355] : memref<64x32xf32, #tpu.memory_space<vmem>>, vector<8x32xf32>
    tpu.vector_store %arg19[%c56, %c0_355], %865 {strides = array<i32>} : memref<64x32xf32, #tpu.memory_space<vmem>>, vector<8x32xf32>,
    %c0_356 = arith.constant 0 : index
    %c0_357 = arith.constant 0 : index
    %867 = vector.load %arg19[%c0_356, %c0_357] : memref<64x32xf32, #tpu.memory_space<vmem>>, vector<64x32xf32>
    %c0_358 = arith.constant 0 : index
    %c0_359 = arith.constant 0 : index
    %868 = vector.load %arg13[%c0_358, %c0_359] : memref<32x12xf32, #tpu.memory_space<vmem>>, vector<32x12xf32>
    %cst_360 = arith.constant dense<0.000000e+00> : vector<64x12xf32>
    %869 = tpu.matmul %867, %868, %cst_360 {dimension_numbers = #tpu.dot_dimension_numbers<[1], [0], [0], [1], [0, 0, 1, 1], [], []>} : vector<64x32xf32>, vector<32x12xf32>, vector<64x12xf32> -> vector<64x12xf32>
    %c0_361 = arith.constant 0 : index
    %c0_362 = arith.constant 0 : index
    %870 = vector.load %arg14[%c0_361, %c0_362] : memref<1x12xf32, #tpu.memory_space<vmem>>, vector<1x12xf32>
    %871 = vector.broadcast %870 : vector<1x12xf32> to vector<64x12xf32>
    %872 = arith.addf %869, %871 : vector<64x12xf32>
    %cst_363 = arith.constant dense<0xFF800000> : vector<64xf32>
    %873 = vector.multi_reduction <maximumf>, %872, %cst_363 [1] : vector<64x12xf32> to vector<64xf32>
    %874 = vector.shape_cast %873 : vector<64xf32> to vector<64x1xf32>
    %875 = vector.broadcast %874 : vector<64x1xf32> to vector<64x12xf32>
    %876 = arith.subf %872, %875 : vector<64x12xf32>
    %877 = math.exp %876 : vector<64x12xf32>
    %cst_364 = arith.constant dense<0.000000e+00> : vector<64xf32>
    %878 = vector.multi_reduction <add>, %877, %cst_364 [1] : vector<64x12xf32> to vector<64xf32>
    %879 = vector.shape_cast %878 : vector<64xf32> to vector<64x1xf32>
    %880 = vector.broadcast %879 : vector<64x1xf32> to vector<64x12xf32>
    %881 = arith.divf %877, %880 : vector<64x12xf32>
    %c0_365 = arith.constant 0 : index
    %c0_366 = arith.constant 0 : index
    %882 = vector.load %arg15[%c0_365, %c0_366] : memref<64x12xf32, #tpu.memory_space<vmem>>, vector<64x12xf32>
    tpu.vector_store %arg15[%c0_365, %c0_366], %881 {strides = array<i32>} : memref<64x12xf32, #tpu.memory_space<vmem>>, vector<64x12xf32>,
    %c0_367 = arith.constant 0 : index
    %c0_368 = arith.constant 0 : index
    %883 = vector.load %arg16[%c0_367, %c0_368] : memref<8x32xf32, #tpu.memory_space<vmem>>, vector<8x32xf32>
    tpu.vector_store %arg16[%c0_367, %c0_368], %797 {strides = array<i32>} : memref<8x32xf32, #tpu.memory_space<vmem>>, vector<8x32xf32>,
    %c0_369 = arith.constant 0 : index
    %c0_370 = arith.constant 0 : index
    %884 = vector.load %arg17[%c0_369, %c0_370] : memref<8x32xf32, #tpu.memory_space<vmem>>, vector<8x32xf32>
    tpu.vector_store %arg17[%c0_369, %c0_370], %831 {strides = array<i32>} : memref<8x32xf32, #tpu.memory_space<vmem>>, vector<8x32xf32>,
    %c0_371 = arith.constant 0 : index
    %c0_372 = arith.constant 0 : index
    %885 = vector.load %arg18[%c0_371, %c0_372] : memref<8x32xf32, #tpu.memory_space<vmem>>, vector<8x32xf32>
    tpu.vector_store %arg18[%c0_371, %c0_372], %865 {strides = array<i32>} : memref<8x32xf32, #tpu.memory_space<vmem>>, vector<8x32xf32>,
    return
  }
}

</mosaic_0001>

<llo_original>
// kernel: tpu_custom_call.1
$region0: #{tpu_custom_call.1}
  #allocation0 [shape = 'u32[]', space=smem, size = 0x4, offset = 0x4, fixed_abs, tag = 'smem constant byte address 0x4 - core index']
  #allocation1 [shape = 'u32[144,128]{1,0:T(1,128)}', space=vmem, size = 0x12000, scoped, tag = 'internal scratch']
  #allocation2 [shape = 'f32[64,32]{1,0:T(8,128)}', space=vmem, size = 0x8000, scoped, tag = 'scratch operand']
  %s0 = inlined_call_operand.hbm [shape: f32[8,32], index: 0, kind: input, shape index: {}]
  %s1 = inlined_call_operand.hbm [shape: f32[8,32], index: 1, kind: input, shape index: {}]
  %s2 = inlined_call_operand.hbm [shape: f32[8,32], index: 2, kind: input, shape index: {}]
  %s3 = inlined_call_operand.hbm [shape: f32[8,32], index: 3, kind: input, shape index: {}]
  %s4 = inlined_call_operand.hbm [shape: f32[4,1,32], index: 4, kind: input, shape index: {}]
  %s5 = inlined_call_operand.vmem [shape: f32[32,32], index: 5, kind: input, shape index: {}]
  %s6 = inlined_call_operand.hbm [shape: f32[1,32], index: 6, kind: input, shape index: {}]
  %s7 = inlined_call_operand.hbm [shape: f32[32,96], index: 7, kind: input, shape index: {}]
  %s8 = inlined_call_operand.hbm [shape: f32[1,96], index: 8, kind: input, shape index: {}]
  %s9 = inlined_call_operand.vmem [shape: f32[32,96], index: 9, kind: input, shape index: {}]
  %s10 = inlined_call_operand.hbm [shape: f32[1,96], index: 10, kind: input, shape index: {}]
  %s11 = inlined_call_operand.hbm [shape: f32[2,64,128], index: 11, kind: input, shape index: {}]
  %s12 = inlined_call_operand.vmem [shape: f32[2,1,128], index: 12, kind: input, shape index: {}]
  %s13 = inlined_call_operand.vmem [shape: f32[32,12], index: 13, kind: input, shape index: {}]
  %s14 = inlined_call_operand.vmem [shape: f32[1,12], index: 14, kind: input, shape index: {}]
  %s15 = inlined_call_operand.vmem [shape: f32[64,12], index: 15, kind: output, shape index: {0}]
  %s16 = inlined_call_operand.hbm [shape: f32[8,32], index: 16, kind: output, shape index: {1}]
  %s17 = inlined_call_operand.hbm [shape: f32[8,32], index: 17, kind: output, shape index: {2}]
  %s18 = inlined_call_operand.hbm [shape: f32[8,32], index: 18, kind: output, shape index: {3}]
  %19 = xla_tuple %s15, %s16, %s17, %s18
  %s20 = sld [smem:[#allocation0]]
  $region134: #{tpu_custom_call.1} parent=0
    _
  %s22 = ssub.s32 1, %s20
  %s23 = scalar_select 0, %s22, %s20
  $region1: #{tpu_custom_call.1} parent=0
    #allocation3 [shape = 'u8[4096]{0}', space=vmem, size = 0x1000, scoped, tag = 'input window, operand 0, single buffered']
    #allocation4 [shape = 's32[1]{0}', space=sflag, size = 0x4, scoped, tag = 'scoped memory for tpu_custom_call.1']
    #allocation5 [shape = 's32[1]{0}', space=sflag, size = 0x4, scoped, tag = 'scoped memory for tpu_custom_call.1']
    #allocation6 [shape = 'u8[4096]{0}', space=vmem, size = 0x1000, scoped, tag = 'input window, operand 1, single buffered']
    #allocation7 [shape = 's32[1]{0}', space=sflag, size = 0x4, scoped, tag = 'scoped memory for tpu_custom_call.1']
    #allocation8 [shape = 'u8[4096]{0}', space=vmem, size = 0x1000, scoped, tag = 'input window, operand 2, single buffered']
    #allocation9 [shape = 'u8[4096]{0}', space=vmem, size = 0x1000, scoped, tag = 'input window, operand 3, single buffered']
    #allocation10 [shape = 's32[1]{0}', space=sflag, size = 0x4, scoped, tag = 'scoped memory for tpu_custom_call.1']
    #allocation11 [shape = 'u8[2048]{0}', space=vmem, size = 0x800, scoped, tag = 'input window, operand 4, single buffered']
    #allocation12 [shape = 'u8[512]{0}', space=vmem, size = 0x400, scoped, tag = 'input window, operand 6, single buffered']
    #allocation13 [shape = 's32[1]{0}', space=sflag, size = 0x4, scoped, tag = 'scoped memory for tpu_custom_call.1']
    #allocation14 [shape = 'u8[16384]{0}', space=vmem, size = 0x4000, scoped, tag = 'input window, operand 7, single buffered']
    #allocation15 [shape = 'u8[512]{0}', space=vmem, size = 0x400, scoped, tag = 'input window, operand 8, single buffered']
    #allocation16 [shape = 's32[1]{0}', space=sflag, size = 0x4, scoped, tag = 'scoped memory for tpu_custom_call.1']
    #allocation17 [shape = 'u8[512]{0}', space=vmem, size = 0x400, scoped, tag = 'input window, operand 10, single buffered']
    #allocation18 [shape = 'u8[65536]{0}', space=vmem, size = 0x10000, scoped, tag = 'input window, operand 11, single buffered']
    #allocation19 [shape = 's32[1]{0}', space=sflag, size = 0x4, scoped, tag = 'scoped memory for tpu_custom_call.1']
    #allocation20 [shape = 'u8[4096]{0}', space=vmem, size = 0x1000, scoped, tag = 'output window, operand 1, single buffered']
    #allocation21 [shape = 'u8[4096]{0}', space=vmem, size = 0x1000, scoped, tag = 'output window, operand 2, single buffered']
    #allocation22 [shape = 's32[1]{0}', space=sflag, size = 0x4, scoped, tag = 'scoped memory for tpu_custom_call.1']
    #allocation23 [shape = 'u8[4096]{0}', space=vmem, size = 0x1000, scoped, tag = 'output window, operand 3, single buffered']
    %24 = vsyncpa [#allocation4], 0
    %25 = vsyncpa [#allocation7], 0
    %26 = vsyncpa [#allocation10], 0
    %27 = vsyncpa [#allocation13], 0
    %28 = vsyncpa [#allocation16], 0
    %29 = vsyncpa [#allocation19], 0
    %30 = vsyncpa [#allocation5], 0
    %31 = vsyncpa [#allocation22], 0
    // Predicated region
    $region2: #{tpu_custom_call.1} parent=1 // pred_check
      _
    $region3: #{tpu_custom_call.1} parent=1 // pred_check_branch
      %33 = sbr.rel (0) target = $region5
    $region4: #{tpu_custom_call.1} parent=1 // pred_region
      %s35 = ssub.s32 128, 128
      %36 = vsyncadd [#allocation4], %s35
      %s38 = sshll.u32 [#allocation3], 4
      %s39 = int_to_ptr.vmem [resolvable:$true] %s38
      %41 = dma.hbm_to_vmem [thread:$0]  %s0, 128, %s39, [#allocation4]
    $region5: #{tpu_custom_call.1} parent=1 // pred_fallthru
      _
    // Predicated region
    $region6: #{tpu_custom_call.1} parent=1 // pred_check
      _
    $region7: #{tpu_custom_call.1} parent=1 // pred_check_branch
      %43 = sbr.rel (0) target = $region9
    $region8: #{tpu_custom_call.1} parent=1 // pred_region
      %s45 = ssub.s32 128, 128
      %46 = vsyncadd [#allocation7], %s45
      %s48 = sshll.u32 [#allocation6], 4
      %s49 = int_to_ptr.vmem [resolvable:$true] %s48
      %51 = dma.hbm_to_vmem [thread:$0]  %s1, 128, %s49, [#allocation7]
    $region9: #{tpu_custom_call.1} parent=1 // pred_fallthru
      _
    // Predicated region
    $region10: #{tpu_custom_call.1} parent=1 // pred_check
      _
    $region11: #{tpu_custom_call.1} parent=1 // pred_check_branch
      %53 = sbr.rel (0) target = $region13
    $region12: #{tpu_custom_call.1} parent=1 // pred_region
      %s55 = ssub.s32 128, 128
      %56 = vsyncadd [#allocation7], %s55
      %s58 = sshll.u32 [#allocation8], 4
      %s59 = int_to_ptr.vmem [resolvable:$true] %s58
      %61 = dma.hbm_to_vmem [thread:$0]  %s2, 128, %s59, [#allocation7]
    $region13: #{tpu_custom_call.1} parent=1 // pred_fallthru
      _
    // Predicated region
    $region14: #{tpu_custom_call.1} parent=1 // pred_check
      _
    $region15: #{tpu_custom_call.1} parent=1 // pred_check_branch
      %63 = sbr.rel (0) target = $region17
    $region16: #{tpu_custom_call.1} parent=1 // pred_region
      %s65 = ssub.s32 128, 128
      %66 = vsyncadd [#allocation10], %s65
      %s68 = sshll.u32 [#allocation9], 4
      %s69 = int_to_ptr.vmem [resolvable:$true] %s68
      %71 = dma.hbm_to_vmem [thread:$0]  %s3, 128, %s69, [#allocation10]
    $region17: #{tpu_custom_call.1} parent=1 // pred_fallthru
      _
    // Predicated region
    $region18: #{tpu_custom_call.1} parent=1 // pred_check
      _
    $region19: #{tpu_custom_call.1} parent=1 // pred_check_branch
      %73 = sbr.rel (0) target = $region21
    $region20: #{tpu_custom_call.1} parent=1 // pred_region
      %s75 = ssub.s32 64, 64
      %76 = vsyncadd [#allocation10], %s75
      %s77 = sshll.u32 [#allocation11], 4
      %s78 = int_to_ptr.vmem [resolvable:$true] %s77
      %83 = dma.hbm_to_vmem [thread:$0]  %s4, 64, %s78, [#allocation10], 16, 16, 1
    $region21: #{tpu_custom_call.1} parent=1 // pred_fallthru
      _
    // Predicated region
    $region22: #{tpu_custom_call.1} parent=1 // pred_check
      _
    $region23: #{tpu_custom_call.1} parent=1 // pred_check_branch
      %85 = sbr.rel (0) target = $region25
    $region24: #{tpu_custom_call.1} parent=1 // pred_region
      _
    $region25: #{tpu_custom_call.1} parent=1 // pred_fallthru
      _
    // Predicated region
    $region26: #{tpu_custom_call.1} parent=1 // pred_check
      _
    $region27: #{tpu_custom_call.1} parent=1 // pred_check_branch
      %87 = sbr.rel (0) target = $region29
    $region28: #{tpu_custom_call.1} parent=1 // pred_region
      %s89 = ssub.s32 16, 16
      %90 = vsyncadd [#allocation13], %s89
      %s92 = sshll.u32 [#allocation12], 4
      %s93 = int_to_ptr.vmem [resolvable:$true] %s92
      %95 = dma.hbm_to_vmem [thread:$0]  %s6, 16, %s93, [#allocation13]
    $region29: #{tpu_custom_call.1} parent=1 // pred_fallthru
      _
    // Predicated region
    $region30: #{tpu_custom_call.1} parent=1 // pred_check
      _
    $region31: #{tpu_custom_call.1} parent=1 // pred_check_branch
      %97 = sbr.rel (0) target = $region33
    $region32: #{tpu_custom_call.1} parent=1 // pred_region
      %s99 = ssub.s32 512, 512
      %100 = vsyncadd [#allocation13], %s99
      %s101 = sshll.u32 [#allocation14], 4
      %s102 = int_to_ptr.vmem [resolvable:$true] %s101
      %107 = dma.hbm_to_vmem [thread:$0]  %s7, 512, %s102, [#allocation13], 128, 128, 8
    $region33: #{tpu_custom_call.1} parent=1 // pred_fallthru
      _
    // Predicated region
    $region34: #{tpu_custom_call.1} parent=1 // pred_check
      _
    $region35: #{tpu_custom_call.1} parent=1 // pred_check_branch
      %109 = sbr.rel (0) target = $region37
    $region36: #{tpu_custom_call.1} parent=1 // pred_region
      %s111 = ssub.s32 16, 16
      %112 = vsyncadd [#allocation16], %s111
      %s114 = sshll.u32 [#allocation15], 4
      %s115 = int_to_ptr.vmem [resolvable:$true] %s114
      %117 = dma.hbm_to_vmem [thread:$0]  %s8, 16, %s115, [#allocation16]
    $region37: #{tpu_custom_call.1} parent=1 // pred_fallthru
      _
    // Predicated region
    $region38: #{tpu_custom_call.1} parent=1 // pred_check
      _
    $region39: #{tpu_custom_call.1} parent=1 // pred_check_branch
      %119 = sbr.rel (0) target = $region41
    $region40: #{tpu_custom_call.1} parent=1 // pred_region
      _
    $region41: #{tpu_custom_call.1} parent=1 // pred_fallthru
      _
    // Predicated region
    $region42: #{tpu_custom_call.1} parent=1 // pred_check
      _
    $region43: #{tpu_custom_call.1} parent=1 // pred_check_branch
      %121 = sbr.rel (0) target = $region45
    $region44: #{tpu_custom_call.1} parent=1 // pred_region
      %s123 = ssub.s32 16, 16
      %124 = vsyncadd [#allocation16], %s123
      %s126 = sshll.u32 [#allocation17], 4
      %s127 = int_to_ptr.vmem [resolvable:$true] %s126
      %129 = dma.hbm_to_vmem [thread:$0]  %s10, 16, %s127, [#allocation16]
    $region45: #{tpu_custom_call.1} parent=1 // pred_fallthru
      _
    // Predicated region
    $region46: #{tpu_custom_call.1} parent=1 // pred_check
      _
    $region47: #{tpu_custom_call.1} parent=1 // pred_check_branch
      %131 = sbr.rel (0) target = $region49
    $region48: #{tpu_custom_call.1} parent=1 // pred_region
      %s133 = ssub.s32 2048, 2048
      %134 = vsyncadd [#allocation19], %s133
      %s135 = sshll.u32 [#allocation18], 4
      %s136 = int_to_ptr.vmem [resolvable:$true] %s135
      %141 = dma.hbm_to_vmem [thread:$0]  %s11, 2048, %s136, [#allocation19], 128, 128, 8
    $region49: #{tpu_custom_call.1} parent=1 // pred_fallthru
      _
    // Predicated region
    $region50: #{tpu_custom_call.1} parent=1 // pred_check
      _
    $region51: #{tpu_custom_call.1} parent=1 // pred_check_branch
      %143 = sbr.rel (0) target = $region53
    $region52: #{tpu_custom_call.1} parent=1 // pred_region
      _
    $region53: #{tpu_custom_call.1} parent=1 // pred_fallthru
      _
    // Predicated region
    $region54: #{tpu_custom_call.1} parent=1 // pred_check
      _
    $region55: #{tpu_custom_call.1} parent=1 // pred_check_branch
      %145 = sbr.rel (0) target = $region57
    $region56: #{tpu_custom_call.1} parent=1 // pred_region
      _
    $region57: #{tpu_custom_call.1} parent=1 // pred_fallthru
      _
    // Predicated region
    $region58: #{tpu_custom_call.1} parent=1 // pred_check
      _
    $region59: #{tpu_custom_call.1} parent=1 // pred_check_branch
      %147 = sbr.rel (0) target = $region61
    $region60: #{tpu_custom_call.1} parent=1 // pred_region
      _
    $region61: #{tpu_custom_call.1} parent=1 // pred_fallthru
      _
    // Predicated region
    $region62: #{tpu_custom_call.1} parent=1 // pred_check
      _
    $region63: #{tpu_custom_call.1} parent=1 // pred_check_branch
      %149 = sbr.rel (0) target = $region65
    $region64: #{tpu_custom_call.1} parent=1 // pred_region
      %150 = dma.done [#allocation4], 128
    $region65: #{tpu_custom_call.1} parent=1 // pred_fallthru
      _
    // Predicated region
    $region66: #{tpu_custom_call.1} parent=1 // pred_check
      _
    $region67: #{tpu_custom_call.1} parent=1 // pred_check_branch
      %152 = sbr.rel (0) target = $region69
    $region68: #{tpu_custom_call.1} parent=1 // pred_region
      %153 = dma.done [#allocation7], 128
    $region69: #{tpu_custom_call.1} parent=1 // pred_fallthru
      _
    // Predicated region
    $region70: #{tpu_custom_call.1} parent=1 // pred_check
      _
    $region71: #{tpu_custom_call.1} parent=1 // pred_check_branch
      %155 = sbr.rel (0) target = $region73
    $region72: #{tpu_custom_call.1} parent=1 // pred_region
      %156 = dma.done [#allocation7], 128
    $region73: #{tpu_custom_call.1} parent=1 // pred_fallthru
      _
    // Predicated region
    $region74: #{tpu_custom_call.1} parent=1 // pred_check
      _
    $region75: #{tpu_custom_call.1} parent=1 // pred_check_branch
      %158 = sbr.rel (0) target = $region77
    $region76: #{tpu_custom_call.1} parent=1 // pred_region
      %159 = dma.done [#allocation10], 128
    $region77: #{tpu_custom_call.1} parent=1 // pred_fallthru
      _
    // Predicated region
    $region78: #{tpu_custom_call.1} parent=1 // pred_check
      _
    $region79: #{tpu_custom_call.1} parent=1 // pred_check_branch
      %161 = sbr.rel (0) target = $region81
    $region80: #{tpu_custom_call.1} parent=1 // pred_region
      %162 = dma.done [#allocation10], 64
    $region81: #{tpu_custom_call.1} parent=1 // pred_fallthru
      _
    // Predicated region
    $region82: #{tpu_custom_call.1} parent=1 // pred_check
      _
    $region83: #{tpu_custom_call.1} parent=1 // pred_check_branch
      %164 = sbr.rel (0) target = $region85
    $region84: #{tpu_custom_call.1} parent=1 // pred_region
      %165 = dma.done [#allocation13], 16
    $region85: #{tpu_custom_call.1} parent=1 // pred_fallthru
      _
    // Predicated region
    $region86: #{tpu_custom_call.1} parent=1 // pred_check
      _
    $region87: #{tpu_custom_call.1} parent=1 // pred_check_branch
      %167 = sbr.rel (0) target = $region89
    $region88: #{tpu_custom_call.1} parent=1 // pred_region
      %168 = dma.done [#allocation13], 512
    $region89: #{tpu_custom_call.1} parent=1 // pred_fallthru
      _
    // Predicated region
    $region90: #{tpu_custom_call.1} parent=1 // pred_check
      _
    $region91: #{tpu_custom_call.1} parent=1 // pred_check_branch
      %170 = sbr.rel (0) target = $region93
    $region92: #{tpu_custom_call.1} parent=1 // pred_region
      %171 = dma.done [#allocation16], 16
    $region93: #{tpu_custom_call.1} parent=1 // pred_fallthru
      _
    // Predicated region
    $region94: #{tpu_custom_call.1} parent=1 // pred_check
      _
    $region95: #{tpu_custom_call.1} parent=1 // pred_check_branch
      %173 = sbr.rel (0) target = $region97
    $region96: #{tpu_custom_call.1} parent=1 // pred_region
      %174 = dma.done [#allocation16], 16
    $region97: #{tpu_custom_call.1} parent=1 // pred_fallthru
      _
    // Predicated region
    $region98: #{tpu_custom_call.1} parent=1 // pred_check
      _
    $region99: #{tpu_custom_call.1} parent=1 // pred_check_branch
      %176 = sbr.rel (0) target = $region101
    $region100: #{tpu_custom_call.1} parent=1 // pred_region
      %177 = dma.done [#allocation19], 2048
    $region101: #{tpu_custom_call.1} parent=1 // pred_fallthru
      _
    %v178 = vld [vmem:[#allocation11] sm:$0x1]
    %s179 = scalar_lea.vmem [#allocation11], 1
    %v180 = vld [vmem:[%s179] sm:$0x1]
    %s181 = scalar_lea.vmem [#allocation11], 2
    %v182 = vld [vmem:[%s181] sm:$0x1]
    %s183 = scalar_lea.vmem [#allocation11], 3
    %v184 = vld [vmem:[%s183] sm:$0x1]
    %v185 = vld [vmem:[#allocation3] sm:$0xff]
    %v187 = vlaneseq
    %v188 = vshrl.u32 %v187, 7
    %v189 = vsub.s32 0, %v188
    %v190 = vrot.slane %v182, %v189
    %v192 = vsub.f32 %v185, %v190
    %v193 = vadd.f32 %v184, 1e-05
    %v194 = vrsqrt.pop %v193
    %v196 = vlaneseq
    %v197 = vshrl.u32 %v196, 7
    %v198 = vsub.s32 0, %v197
    %v199 = vrot.slane %v194, %v198
    %v201 = vmul.f32 %v192, %v199
    %v203 = vlaneseq
    %v204 = vshrl.u32 %v203, 7
    %v205 = vsub.s32 0, %v204
    %v206 = vrot.slane %v178, %v205
    %v208 = vmul.f32 %v201, %v206
    %v210 = vlaneseq
    %v211 = vshrl.u32 %v210, 7
    %v212 = vsub.s32 0, %v211
    %v213 = vrot.slane %v180, %v212
    %v215 = vadd.f32 %v208, %v213
    %v216 = vld [vmem:[%s5] sm:$0xff]
    %v217 = vld [vmem:[%s5 + $0x8] sm:$0xff]
    %v218 = vld [vmem:[%s5 + $0x10] sm:$0xff]
    %v219 = vld [vmem:[%s5 + $0x18] sm:$0xff]
    %v220 = vld [vmem:[#allocation12] sm:$0x1]
    %v222 = vlaneseq
    %v223 = vshrl.u32 %v222, 7
    %v224 = vsub.s32 0, %v223
    %v225 = vrot.slane %v220, %v224
    %vm227 = vcmask 261120
    %v229 = vsel %vm227, %v215, 0
    %231 = vmatprep.subr.mxu0 0.0
    %232 = vmatpush1.msra.mxu0 0.0
    %233 = vmatprep.subr.mxu0 0.0
    %234 = vmatpush1.msra.mxu0 0.0
    %235 = vmatprep.subr.mxu0 0.0
    %236 = vmatpush1.msra.mxu0 0.0
    %237 = vmatprep.subr.mxu0 0.0
    %238 = vmatpush1.msra.mxu0 0.0
    %239 = vmatprep.subr.mxu0 0.0
    %240 = vmatpush1.msra.mxu0 0.0
    %241 = vmatprep.subr.mxu0 0.0
    %242 = vmatpush1.msra.mxu0 0.0
    %243 = vmatprep.subr.mxu0 0.0
    %244 = vmatpush1.msra.mxu0 0.0
    %245 = vmatprep.subr.mxu0 0.0
    %246 = vmatpush1.msra.mxu0 0.0
    %247 = vmatprep.subr.mxu0 0.0
    %248 = vmatpush1.msra.mxu0 0.0
    %249 = vmatprep.subr.mxu0 0.0
    %250 = vmatpush1.msra.mxu0 0.0
    %251 = vmatprep.subr.mxu0 0.0
    %252 = vmatpush1.msra.mxu0 0.0
    %253 = vmatprep.subr.mxu0 0.0
    %254 = vmatpush1.msra.mxu0 0.0
    %255 = vmatprep.subr.mxu0 0.0
    %256 = vmatpush1.msra.mxu0 %v219
    %257 = vmatprep.subr.mxu0 0.0
    %258 = vmatpush1.msra.mxu0 %v218
    %259 = vmatprep.subr.mxu0 0.0
    %260 = vmatpush1.msra.mxu0 %v217
    %261 = vmatprep.subr.mxu0 0.0
    %262 = vmatpush1.msra.mxu0 %v216
    %263 = vmatprep.subr.mxu0 0.0
    %264 = vmatpush2.msra.mxu0 0.0
    %265 = vmatprep.subr.mxu0 0.0
    %266 = vmatpush2.msra.mxu0 0.0
    %267 = vmatprep.subr.mxu0 0.0
    %268 = vmatpush2.msra.mxu0 0.0
    %269 = vmatprep.subr.mxu0 0.0
    %270 = vmatpush2.msra.mxu0 0.0
    %271 = vmatprep.subr.mxu0 0.0
    %272 = vmatpush2.msra.mxu0 0.0
    %273 = vmatprep.subr.mxu0 0.0
    %274 = vmatpush2.msra.mxu0 0.0
    %275 = vmatprep.subr.mxu0 0.0
    %276 = vmatpush2.msra.mxu0 0.0
    %277 = vmatprep.subr.mxu0 0.0
    %278 = vmatpush2.msra.mxu0 0.0
    %279 = vmatprep.subr.mxu0 0.0
    %280 = vmatpush2.msra.mxu0 0.0
    %281 = vmatprep.subr.mxu0 0.0
    %282 = vmatpush2.msra.mxu0 0.0
    %283 = vmatprep.subr.mxu0 0.0
    %284 = vmatpush2.msra.mxu0 0.0
    %285 = vmatprep.subr.mxu0 0.0
    %286 = vmatpush2.msra.mxu0 0.0
    %287 = vmatprep.subr.mxu0 0.0
    %288 = vmatpush2.msra.mxu0 0.0
    %289 = vmatprep.subr.mxu0 0.0
    %290 = vmatpush2.msra.mxu0 0.0
    %291 = vmatprep.subr.mxu0 0.0
    %292 = vmatpush2.msra.mxu0 0.0
    %293 = vmatprep.subr.mxu0 0.0
    %294 = vmatpush2.msra.mxu0 0.0
    %295 = vmatprep.mubr.f32.mxu0 0.0
    %296 = vmatmul.mubr.f32.gmra.mxu0 %v229
    %v297 = vpop.f32.mrf.mxu0
    %v298 = vadd.f32 %v225, %v297
    %v299 = vpop.f32.mrf.mxu0
    %300 = vdwg.mxu0
    %v301 = vmax.f32 %v298, 0.0
    %v302 = vld [vmem:[#allocation14] sm:$0xff]
    %v303 = vld [vmem:[#allocation14 + $0x8] sm:$0xff]
    %v304 = vld [vmem:[#allocation14 + $0x10] sm:$0xff]
    %v305 = vld [vmem:[#allocation14 + $0x18] sm:$0xff]
    %v306 = vld [vmem:[#allocation15] sm:$0x1]
    %v308 = vlaneseq
    %v309 = vshrl.u32 %v308, 7
    %v310 = vsub.s32 0, %v309
    %v311 = vrot.slane %v306, %v310
    %v314 = vsel %vm227, %v301, 0
    %316 = vmatprep.subr.mxu0 0.0
    %317 = vmatpush1.msra.mxu0 0.0
    %318 = vmatprep.subr.mxu0 0.0
    %319 = vmatpush1.msra.mxu0 0.0
    %320 = vmatprep.subr.mxu0 0.0
    %321 = vmatpush1.msra.mxu0 0.0
    %322 = vmatprep.subr.mxu0 0.0
    %323 = vmatpush1.msra.mxu0 0.0
    %324 = vmatprep.subr.mxu0 0.0
    %325 = vmatpush1.msra.mxu0 0.0
    %326 = vmatprep.subr.mxu0 0.0
    %327 = vmatpush1.msra.mxu0 0.0
    %328 = vmatprep.subr.mxu0 0.0
    %329 = vmatpush1.msra.mxu0 0.0
    %330 = vmatprep.subr.mxu0 0.0
    %331 = vmatpush1.msra.mxu0 0.0
    %332 = vmatprep.subr.mxu0 0.0
    %333 = vmatpush1.msra.mxu0 0.0
    %334 = vmatprep.subr.mxu0 0.0
    %335 = vmatpush1.msra.mxu0 0.0
    %336 = vmatprep.subr.mxu0 0.0
    %337 = vmatpush1.msra.mxu0 0.0
    %338 = vmatprep.subr.mxu0 0.0
    %339 = vmatpush1.msra.mxu0 0.0
    %340 = vmatprep.subr.mxu0 0.0
    %341 = vmatpush1.msra.mxu0 %v305
    %342 = vmatprep.subr.mxu0 0.0
    %343 = vmatpush1.msra.mxu0 %v304
    %344 = vmatprep.subr.mxu0 0.0
    %345 = vmatpush1.msra.mxu0 %v303
    %346 = vmatprep.subr.mxu0 0.0
    %347 = vmatpush1.msra.mxu0 %v302
    %348 = vmatprep.subr.mxu0 0.0
    %349 = vmatpush2.msra.mxu0 0.0
    %350 = vmatprep.subr.mxu0 0.0
    %351 = vmatpush2.msra.mxu0 0.0
    %352 = vmatprep.subr.mxu0 0.0
    %353 = vmatpush2.msra.mxu0 0.0
    %354 = vmatprep.subr.mxu0 0.0
    %355 = vmatpush2.msra.mxu0 0.0
    %356 = vmatprep.subr.mxu0 0.0
    %357 = vmatpush2.msra.mxu0 0.0
    %358 = vmatprep.subr.mxu0 0.0
    %359 = vmatpush2.msra.mxu0 0.0
    %360 = vmatprep.subr.mxu0 0.0
    %361 = vmatpush2.msra.mxu0 0.0
    %362 = vmatprep.subr.mxu0 0.0
    %363 = vmatpush2.msra.mxu0 0.0
    %364 = vmatprep.subr.mxu0 0.0
    %365 = vmatpush2.msra.mxu0 0.0
    %366 = vmatprep.subr.mxu0 0.0
    %367 = vmatpush2.msra.mxu0 0.0
    %368 = vmatprep.subr.mxu0 0.0
    %369 = vmatpush2.msra.mxu0 0.0
    %370 = vmatprep.subr.mxu0 0.0
    %371 = vmatpush2.msra.mxu0 0.0
    %372 = vmatprep.subr.mxu0 0.0
    %373 = vmatpush2.msra.mxu0 0.0
    %374 = vmatprep.subr.mxu0 0.0
    %375 = vmatpush2.msra.mxu0 0.0
    %376 = vmatprep.subr.mxu0 0.0
    %377 = vmatpush2.msra.mxu0 0.0
    %378 = vmatprep.subr.mxu0 0.0
    %379 = vmatpush2.msra.mxu0 0.0
    %380 = vmatprep.mubr.f32.mxu0 0.0
    %381 = vmatmul.mubr.f32.gmra.mxu0 %v314
    %v382 = vpop.f32.mrf.mxu0
    %v383 = vadd.f32 %v311, %v382
    %v384 = vpop.f32.mrf.mxu0
    %385 = vdwg.mxu0
    %v386 = vld [vmem:[#allocation6] sm:$0xff]
    %v387 = vld [vmem:[#allocation8] sm:$0xff]
    %v388 = vld [vmem:[#allocation9] sm:$0xff]
    %v389 = vld [vmem:[%s9] sm:$0xff]
    %v390 = vld [vmem:[%s9 + $0x8] sm:$0xff]
    %v391 = vld [vmem:[%s9 + $0x10] sm:$0xff]
    %v392 = vld [vmem:[%s9 + $0x18] sm:$0xff]
    %v393 = vld [vmem:[#allocation17] sm:$0x1]
    %v395 = vlaneseq
    %v396 = vshrl.u32 %v395, 7
    %v397 = vsub.s32 0, %v396
    %v398 = vrot.slane %v393, %v397
    %v401 = vsel %vm227, %v386, 0
    %403 = vmatprep.subr.mxu0 0.0
    %404 = vmatpush1.msra.mxu0 0.0
    %405 = vmatprep.subr.mxu0 0.0
    %406 = vmatpush1.msra.mxu0 0.0
    %407 = vmatprep.subr.mxu0 0.0
    %408 = vmatpush1.msra.mxu0 0.0
    %409 = vmatprep.subr.mxu0 0.0
    %410 = vmatpush1.msra.mxu0 0.0
    %411 = vmatprep.subr.mxu0 0.0
    %412 = vmatpush1.msra.mxu0 0.0
    %413 = vmatprep.subr.mxu0 0.0
    %414 = vmatpush1.msra.mxu0 0.0
    %415 = vmatprep.subr.mxu0 0.0
    %416 = vmatpush1.msra.mxu0 0.0
    %417 = vmatprep.subr.mxu0 0.0
    %418 = vmatpush1.msra.mxu0 0.0
    %419 = vmatprep.subr.mxu0 0.0
    %420 = vmatpush1.msra.mxu0 0.0
    %421 = vmatprep.subr.mxu0 0.0
    %422 = vmatpush1.msra.mxu0 0.0
    %423 = vmatprep.subr.mxu0 0.0
    %424 = vmatpush1.msra.mxu0 0.0
    %425 = vmatprep.subr.mxu0 0.0
    %426 = vmatpush1.msra.mxu0 0.0
    %427 = vmatprep.subr.mxu0 0.0
    %428 = vmatpush1.msra.mxu0 %v392
    %429 = vmatprep.subr.mxu0 0.0
    %430 = vmatpush1.msra.mxu0 %v391
    %431 = vmatprep.subr.mxu0 0.0
    %432 = vmatpush1.msra.mxu0 %v390
    %433 = vmatprep.subr.mxu0 0.0
    %434 = vmatpush1.msra.mxu0 %v389
    %435 = vmatprep.subr.mxu0 0.0
    %436 = vmatpush2.msra.mxu0 0.0
    %437 = vmatprep.subr.mxu0 0.0
    %438 = vmatpush2.msra.mxu0 0.0
    %439 = vmatprep.subr.mxu0 0.0
    %440 = vmatpush2.msra.mxu0 0.0
    %441 = vmatprep.subr.mxu0 0.0
    %442 = vmatpush2.msra.mxu0 0.0
    %443 = vmatprep.subr.mxu0 0.0
    %444 = vmatpush2.msra.mxu0 0.0
    %445 = vmatprep.subr.mxu0 0.0
    %446 = vmatpush2.msra.mxu0 0.0
    %447 = vmatprep.subr.mxu0 0.0
    %448 = vmatpush2.msra.mxu0 0.0
    %449 = vmatprep.subr.mxu0 0.0
    %450 = vmatpush2.msra.mxu0 0.0
    %451 = vmatprep.subr.mxu0 0.0
    %452 = vmatpush2.msra.mxu0 0.0
    %453 = vmatprep.subr.mxu0 0.0
    %454 = vmatpush2.msra.mxu0 0.0
    %455 = vmatprep.subr.mxu0 0.0
    %456 = vmatpush2.msra.mxu0 0.0
    %457 = vmatprep.subr.mxu0 0.0
    %458 = vmatpush2.msra.mxu0 0.0
    %459 = vmatprep.subr.mxu0 0.0
    %460 = vmatpush2.msra.mxu0 0.0
    %461 = vmatprep.subr.mxu0 0.0
    %462 = vmatpush2.msra.mxu0 0.0
    %463 = vmatprep.subr.mxu0 0.0
    %464 = vmatpush2.msra.mxu0 0.0
    %465 = vmatprep.subr.mxu0 0.0
    %466 = vmatpush2.msra.mxu0 0.0
    %467 = vmatprep.mubr.f32.mxu0 0.0
    %468 = vmatmul.mubr.f32.gmra.mxu0 %v401
    %v469 = vpop.f32.mrf.mxu0
    %v470 = vadd.f32 %v398, %v469
    %v471 = vpop.f32.mrf.mxu0
    %472 = vdwg.mxu0
    %v473 = vadd.f32 %v383, %v470
    %v474 = vmul.f32 %v473, 0.5
    %v475 = vtanh.pop %v474
    %v476 = vadd.f32 %v475, 1.0
    %v477 = vmul.f32 %v476, 0.5
    %479 = vrot.lane.b32.xlu0 %v470, 64
    %v480 = vpop.permute.xlu0 %479
    %v482 = vmul.f32 %v477, %v480
    %484 = vrot.lane.b32.xlu0 %v482, 64
    %v485 = vpop.permute.xlu0 %484
    %v487 = vadd.f32 %v383, %v485
    %v488 = vtanh.pop %v487
    %v489 = vsub.f32 1.0, %v477
    %491 = vrot.lane.b32.xlu0 %v488, 96
    %v492 = vpop.permute.xlu0 %491
    %v494 = vmul.f32 %v489, %v492
    %495 = vrot.lane.b32.xlu0 %v386, 32
    %v496 = vpop.permute.xlu0 %495
    %v498 = vmul.f32 %v477, %v496
    %v499 = vadd.f32 %v494, %v498
    %501 = vrot.lane.b32.xlu0 %v499, 96
    %v502 = vpop.permute.xlu0 %501
    %505 = vrot.lane.b32.xlu0 %v387, 32
    %v506 = vpop.permute.xlu0 %505
    %v508 = vsel %vm227, %v502, %v506
    %v509 = vld [vmem:[#allocation18] sm:$0xff]
    %v510 = vld [vmem:[#allocation18 + $0x8] sm:$0xff]
    %v511 = vld [vmem:[#allocation18 + $0x10] sm:$0xff]
    %v512 = vld [vmem:[#allocation18 + $0x18] sm:$0xff]
    %v513 = vld [vmem:[#allocation18 + $0x20] sm:$0xff]
    %v514 = vld [vmem:[#allocation18 + $0x28] sm:$0xff]
    %v515 = vld [vmem:[#allocation18 + $0x30] sm:$0xff]
    %v516 = vld [vmem:[#allocation18 + $0x38] sm:$0xff]
    %v517 = vld [vmem:[%s12] sm:$0x1]
    %v519 = vlaneseq
    %v520 = vshrl.u32 %v519, 7
    %v521 = vsub.s32 0, %v520
    %v522 = vrot.slane %v517, %v521
    %vm524 = vcmask 523264
    %v526 = vsel %vm524, %v508, 0
    %528 = vmatprep.subr.mxu0 0.0
    %529 = vmatpush1.msra.mxu0 0.0
    %530 = vmatprep.subr.mxu0 0.0
    %531 = vmatpush1.msra.mxu0 0.0
    %532 = vmatprep.subr.mxu0 0.0
    %533 = vmatpush1.msra.mxu0 0.0
    %534 = vmatprep.subr.mxu0 0.0
    %535 = vmatpush1.msra.mxu0 0.0
    %536 = vmatprep.subr.mxu0 0.0
    %537 = vmatpush1.msra.mxu0 0.0
    %538 = vmatprep.subr.mxu0 0.0
    %539 = vmatpush1.msra.mxu0 0.0
    %540 = vmatprep.subr.mxu0 0.0
    %541 = vmatpush1.msra.mxu0 0.0
    %542 = vmatprep.subr.mxu0 0.0
    %543 = vmatpush1.msra.mxu0 0.0
    %544 = vmatprep.subr.mxu0 0.0
    %545 = vmatpush1.msra.mxu0 %v516
    %546 = vmatprep.subr.mxu0 0.0
    %547 = vmatpush1.msra.mxu0 %v515
    %548 = vmatprep.subr.mxu0 0.0
    %549 = vmatpush1.msra.mxu0 %v514
    %550 = vmatprep.subr.mxu0 0.0
    %551 = vmatpush1.msra.mxu0 %v513
    %552 = vmatprep.subr.mxu0 0.0
    %553 = vmatpush1.msra.mxu0 %v512
    %554 = vmatprep.subr.mxu0 0.0
    %555 = vmatpush1.msra.mxu0 %v511
    %556 = vmatprep.subr.mxu0 0.0
    %557 = vmatpush1.msra.mxu0 %v510
    %558 = vmatprep.subr.mxu0 0.0
    %559 = vmatpush1.msra.mxu0 %v509
    %560 = vmatprep.subr.mxu0 0.0
    %561 = vmatpush2.msra.mxu0 0.0
    %562 = vmatprep.subr.mxu0 0.0
    %563 = vmatpush2.msra.mxu0 0.0
    %564 = vmatprep.subr.mxu0 0.0
    %565 = vmatpush2.msra.mxu0 0.0
    %566 = vmatprep.subr.mxu0 0.0
    %567 = vmatpush2.msra.mxu0 0.0
    %568 = vmatprep.subr.mxu0 0.0
    %569 = vmatpush2.msra.mxu0 0.0
    %570 = vmatprep.subr.mxu0 0.0
    %571 = vmatpush2.msra.mxu0 0.0
    %572 = vmatprep.subr.mxu0 0.0
    %573 = vmatpush2.msra.mxu0 0.0
    %574 = vmatprep.subr.mxu0 0.0
    %575 = vmatpush2.msra.mxu0 0.0
    %576 = vmatprep.subr.mxu0 0.0
    %577 = vmatpush2.msra.mxu0 0.0
    %578 = vmatprep.subr.mxu0 0.0
    %579 = vmatpush2.msra.mxu0 0.0
    %580 = vmatprep.subr.mxu0 0.0
    %581 = vmatpush2.msra.mxu0 0.0
    %582 = vmatprep.subr.mxu0 0.0
    %583 = vmatpush2.msra.mxu0 0.0
    %584 = vmatprep.subr.mxu0 0.0
    %585 = vmatpush2.msra.mxu0 0.0
    %586 = vmatprep.subr.mxu0 0.0
    %587 = vmatpush2.msra.mxu0 0.0
    %588 = vmatprep.subr.mxu0 0.0
    %589 = vmatpush2.msra.mxu0 0.0
    %590 = vmatprep.subr.mxu0 0.0
    %591 = vmatpush2.msra.mxu0 0.0
    %592 = vmatprep.mubr.f32.mxu0 0.0
    %593 = vmatmul.mubr.f32.gmra.mxu0 %v526
    %v594 = vpop.f32.mrf.mxu0
    %v595 = vadd.f32 %v522, %v594
    %v596 = vpop.f32.mrf.mxu0
    %597 = vdwg.mxu0
    %v598 = vmul.f32 %v595, 0.5
    %v599 = vtanh.pop %v598
    %v600 = vadd.f32 %v599, 1.0
    %v601 = vmul.f32 %v600, 0.5
    %603 = vrot.lane.b32.xlu0 %v595, 32
    %v604 = vpop.permute.xlu0 %603
    %v606 = vmul.f32 %v601, %v604
    %608 = vrot.lane.b32.xlu0 %v606, 64
    %v609 = vpop.permute.xlu0 %608
    %v611 = vadd.f32 %v595, %v609
    %v612 = vtanh.pop %v611
    %v613 = vsub.f32 1.0, %v601
    %615 = vrot.lane.b32.xlu0 %v612, 96
    %v616 = vpop.permute.xlu0 %615
    %v618 = vmul.f32 %v613, %v616
    %v619 = vmul.f32 %v601, %v506
    %v620 = vadd.f32 %v618, %v619
    %622 = vrot.lane.b32.xlu0 %v620, 96
    %v623 = vpop.permute.xlu0 %622
    %626 = vrot.lane.b32.xlu0 %v388, 32
    %v627 = vpop.permute.xlu0 %626
    %v629 = vsel %vm227, %v623, %v627
    %s630 = scalar_lea.vmem [#allocation18], 64
    %v631 = vld [vmem:[%s630] sm:$0xff]
    %v632 = vld [vmem:[%s630 + $0x8] sm:$0xff]
    %v633 = vld [vmem:[%s630 + $0x10] sm:$0xff]
    %v634 = vld [vmem:[%s630 + $0x18] sm:$0xff]
    %v635 = vld [vmem:[%s630 + $0x20] sm:$0xff]
    %v636 = vld [vmem:[%s630 + $0x28] sm:$0xff]
    %v637 = vld [vmem:[%s630 + $0x30] sm:$0xff]
    %v638 = vld [vmem:[%s630 + $0x38] sm:$0xff]
    %s639 = scalar_lea.vmem %s12, 1
    %v640 = vld [vmem:[%s639] sm:$0x1]
    %v642 = vlaneseq
    %v643 = vshrl.u32 %v642, 7
    %v644 = vsub.s32 0, %v643
    %v645 = vrot.slane %v640, %v644
    %v648 = vsel %vm524, %v629, 0
    %650 = vmatprep.subr.mxu0 0.0
    %651 = vmatpush1.msra.mxu0 0.0
    %652 = vmatprep.subr.mxu0 0.0
    %653 = vmatpush1.msra.mxu0 0.0
    %654 = vmatprep.subr.mxu0 0.0
    %655 = vmatpush1.msra.mxu0 0.0
    %656 = vmatprep.subr.mxu0 0.0
    %657 = vmatpush1.msra.mxu0 0.0
    %658 = vmatprep.subr.mxu0 0.0
    %659 = vmatpush1.msra.mxu0 0.0
    %660 = vmatprep.subr.mxu0 0.0
    %661 = vmatpush1.msra.mxu0 0.0
    %662 = vmatprep.subr.mxu0 0.0
    %663 = vmatpush1.msra.mxu0 0.0
    %664 = vmatprep.subr.mxu0 0.0
    %665 = vmatpush1.msra.mxu0 0.0
    %666 = vmatprep.subr.mxu0 0.0
    %667 = vmatpush1.msra.mxu0 %v638
    %668 = vmatprep.subr.mxu0 0.0
    %669 = vmatpush1.msra.mxu0 %v637
    %670 = vmatprep.subr.mxu0 0.0
    %671 = vmatpush1.msra.mxu0 %v636
    %672 = vmatprep.subr.mxu0 0.0
    %673 = vmatpush1.msra.mxu0 %v635
    %674 = vmatprep.subr.mxu0 0.0
    %675 = vmatpush1.msra.mxu0 %v634
    %676 = vmatprep.subr.mxu0 0.0
    %677 = vmatpush1.msra.mxu0 %v633
    %678 = vmatprep.subr.mxu0 0.0
    %679 = vmatpush1.msra.mxu0 %v632
    %680 = vmatprep.subr.mxu0 0.0
    %681 = vmatpush1.msra.mxu0 %v631
    %682 = vmatprep.subr.mxu0 0.0
    %683 = vmatpush2.msra.mxu0 0.0
    %684 = vmatprep.subr.mxu0 0.0
    %685 = vmatpush2.msra.mxu0 0.0
    %686 = vmatprep.subr.mxu0 0.0
    %687 = vmatpush2.msra.mxu0 0.0
    %688 = vmatprep.subr.mxu0 0.0
    %689 = vmatpush2.msra.mxu0 0.0
    %690 = vmatprep.subr.mxu0 0.0
    %691 = vmatpush2.msra.mxu0 0.0
    %692 = vmatprep.subr.mxu0 0.0
    %693 = vmatpush2.msra.mxu0 0.0
    %694 = vmatprep.subr.mxu0 0.0
    %695 = vmatpush2.msra.mxu0 0.0
    %696 = vmatprep.subr.mxu0 0.0
    %697 = vmatpush2.msra.mxu0 0.0
    %698 = vmatprep.subr.mxu0 0.0
    %699 = vmatpush2.msra.mxu0 0.0
    %700 = vmatprep.subr.mxu0 0.0
    %701 = vmatpush2.msra.mxu0 0.0
    %702 = vmatprep.subr.mxu0 0.0
    %703 = vmatpush2.msra.mxu0 0.0
    %704 = vmatprep.subr.mxu0 0.0
    %705 = vmatpush2.msra.mxu0 0.0
    %706 = vmatprep.subr.mxu0 0.0
    %707 = vmatpush2.msra.mxu0 0.0
    %708 = vmatprep.subr.mxu0 0.0
    %709 = vmatpush2.msra.mxu0 0.0
    %710 = vmatprep.subr.mxu0 0.0
    %711 = vmatpush2.msra.mxu0 0.0
    %712 = vmatprep.subr.mxu0 0.0
    %713 = vmatpush2.msra.mxu0 0.0
    %714 = vmatprep.mubr.f32.mxu0 0.0
    %715 = vmatmul.mubr.f32.gmra.mxu0 %v648
    %v716 = vpop.f32.mrf.mxu0
    %v717 = vadd.f32 %v645, %v716
    %v718 = vpop.f32.mrf.mxu0
    %719 = vdwg.mxu0
    %v720 = vmul.f32 %v717, 0.5
    %v721 = vtanh.pop %v720
    %v722 = vadd.f32 %v721, 1.0
    %v723 = vmul.f32 %v722, 0.5
    %725 = vrot.lane.b32.xlu0 %v717, 32
    %v726 = vpop.permute.xlu0 %725
    %v728 = vmul.f32 %v723, %v726
    %730 = vrot.lane.b32.xlu0 %v728, 64
    %v731 = vpop.permute.xlu0 %730
    %v733 = vadd.f32 %v717, %v731
    %v734 = vtanh.pop %v733
    %v735 = vsub.f32 1.0, %v723
    %737 = vrot.lane.b32.xlu0 %v734, 96
    %v738 = vpop.permute.xlu0 %737
    %v740 = vmul.f32 %v735, %v738
    %v741 = vmul.f32 %v723, %v627
    %v742 = vadd.f32 %v740, %v741
    %744 = vrot.lane.b32.xlu0 %v742, 96
    %v745 = vpop.permute.xlu0 %744
    %747 = vst.msk [vmem:[#allocation2] sm:$0xff] %vm227, %v745
    %v748 = vld [vmem:[%s9] sm:$0xff]
    %v749 = vld [vmem:[%s9 + $0x8] sm:$0xff]
    %v750 = vld [vmem:[%s9 + $0x10] sm:$0xff]
    %v751 = vld [vmem:[%s9 + $0x18] sm:$0xff]
    %v752 = vld [vmem:[#allocation17] sm:$0x1]
    %v754 = vlaneseq
    %v755 = vshrl.u32 %v754, 7
    %v756 = vsub.s32 0, %v755
    %v757 = vrot.slane %v752, %v756
    %v759 = vsel %vm227, %v502, 0
    %761 = vmatprep.subr.mxu0 0.0
    %762 = vmatpush1.msra.mxu0 0.0
    %763 = vmatprep.subr.mxu0 0.0
    %764 = vmatpush1.msra.mxu0 0.0
    %765 = vmatprep.subr.mxu0 0.0
    %766 = vmatpush1.msra.mxu0 0.0
    %767 = vmatprep.subr.mxu0 0.0
    %768 = vmatpush1.msra.mxu0 0.0
    %769 = vmatprep.subr.mxu0 0.0
    %770 = vmatpush1.msra.mxu0 0.0
    %771 = vmatprep.subr.mxu0 0.0
    %772 = vmatpush1.msra.mxu0 0.0
    %773 = vmatprep.subr.mxu0 0.0
    %774 = vmatpush1.msra.mxu0 0.0
    %775 = vmatprep.subr.mxu0 0.0
    %776 = vmatpush1.msra.mxu0 0.0
    %777 = vmatprep.subr.mxu0 0.0
    %778 = vmatpush1.msra.mxu0 0.0
    %779 = vmatprep.subr.mxu0 0.0
    %780 = vmatpush1.msra.mxu0 0.0
    %781 = vmatprep.subr.mxu0 0.0
    %782 = vmatpush1.msra.mxu0 0.0
    %783 = vmatprep.subr.mxu0 0.0
    %784 = vmatpush1.msra.mxu0 0.0
    %785 = vmatprep.subr.mxu0 0.0
    %786 = vmatpush1.msra.mxu0 %v751
    %787 = vmatprep.subr.mxu0 0.0
    %788 = vmatpush1.msra.mxu0 %v750
    %789 = vmatprep.subr.mxu0 0.0
    %790 = vmatpush1.msra.mxu0 %v749
    %791 = vmatprep.subr.mxu0 0.0
    %792 = vmatpush1.msra.mxu0 %v748
    %793 = vmatprep.subr.mxu0 0.0
    %794 = vmatpush2.msra.mxu0 0.0
    %795 = vmatprep.subr.mxu0 0.0
    %796 = vmatpush2.msra.mxu0 0.0
    %797 = vmatprep.subr.mxu0 0.0
    %798 = vmatpush2.msra.mxu0 0.0
    %799 = vmatprep.subr.mxu0 0.0
    %800 = vmatpush2.msra.mxu0 0.0
    %801 = vmatprep.subr.mxu0 0.0
    %802 = vmatpush2.msra.mxu0 0.0
    %803 = vmatprep.subr.mxu0 0.0
    %804 = vmatpush2.msra.mxu0 0.0
    %805 = vmatprep.subr.mxu0 0.0
    %806 = vmatpush2.msra.mxu0 0.0
    %807 = vmatprep.subr.mxu0 0.0
    %808 = vmatpush2.msra.mxu0 0.0
    %809 = vmatprep.subr.mxu0 0.0
    %810 = vmatpush2.msra.mxu0 0.0
    %811 = vmatprep.subr.mxu0 0.0
    %812 = vmatpush2.msra.mxu0 0.0
    %813 = vmatprep.subr.mxu0 0.0
    %814 = vmatpush2.msra.mxu0 0.0
    %815 = vmatprep.subr.mxu0 0.0
    %816 = vmatpush2.msra.mxu0 0.0
    %817 = vmatprep.subr.mxu0 0.0
    %818 = vmatpush2.msra.mxu0 0.0
    %819 = vmatprep.subr.mxu0 0.0
    %820 = vmatpush2.msra.mxu0 0.0
    %821 = vmatprep.subr.mxu0 0.0
    %822 = vmatpush2.msra.mxu0 0.0
    %823 = vmatprep.subr.mxu0 0.0
    %824 = vmatpush2.msra.mxu0 0.0
    %825 = vmatprep.mubr.f32.mxu0 0.0
    %826 = vmatmul.mubr.f32.gmra.mxu0 %v759
    %v827 = vpop.f32.mrf.mxu0
    %v828 = vadd.f32 %v757, %v827
    %v829 = vpop.f32.mrf.mxu0
    %830 = vdwg.mxu0
    %v831 = vadd.f32 %v383, %v828
    %v832 = vmul.f32 %v831, 0.5
    %v833 = vtanh.pop %v832
    %v834 = vadd.f32 %v833, 1.0
    %v835 = vmul.f32 %v834, 0.5
    %837 = vrot.lane.b32.xlu0 %v828, 64
    %v838 = vpop.permute.xlu0 %837
    %v840 = vmul.f32 %v835, %v838
    %842 = vrot.lane.b32.xlu0 %v840, 64
    %v843 = vpop.permute.xlu0 %842
    %v845 = vadd.f32 %v383, %v843
    %v846 = vtanh.pop %v845
    %v847 = vsub.f32 1.0, %v835
    %849 = vrot.lane.b32.xlu0 %v846, 96
    %v850 = vpop.permute.xlu0 %849
    %v852 = vmul.f32 %v847, %v850
    %v853 = vmul.f32 %v835, %v499
    %v854 = vadd.f32 %v852, %v853
    %856 = vrot.lane.b32.xlu0 %v854, 96
    %v857 = vpop.permute.xlu0 %856
    %v859 = vsel %vm227, %v857, %v620
    %v860 = vld [vmem:[#allocation18] sm:$0xff]
    %v861 = vld [vmem:[#allocation18 + $0x8] sm:$0xff]
    %v862 = vld [vmem:[#allocation18 + $0x10] sm:$0xff]
    %v863 = vld [vmem:[#allocation18 + $0x18] sm:$0xff]
    %v864 = vld [vmem:[#allocation18 + $0x20] sm:$0xff]
    %v865 = vld [vmem:[#allocation18 + $0x28] sm:$0xff]
    %v866 = vld [vmem:[#allocation18 + $0x30] sm:$0xff]
    %v867 = vld [vmem:[#allocation18 + $0x38] sm:$0xff]
    %v868 = vld [vmem:[%s12] sm:$0x1]
    %v870 = vlaneseq
    %v871 = vshrl.u32 %v870, 7
    %v872 = vsub.s32 0, %v871
    %v873 = vrot.slane %v868, %v872
    %v876 = vsel %vm524, %v859, 0
    %878 = vmatprep.subr.mxu0 0.0
    %879 = vmatpush1.msra.mxu0 0.0
    %880 = vmatprep.subr.mxu0 0.0
    %881 = vmatpush1.msra.mxu0 0.0
    %882 = vmatprep.subr.mxu0 0.0
    %883 = vmatpush1.msra.mxu0 0.0
    %884 = vmatprep.subr.mxu0 0.0
    %885 = vmatpush1.msra.mxu0 0.0
    %886 = vmatprep.subr.mxu0 0.0
    %887 = vmatpush1.msra.mxu0 0.0
    %888 = vmatprep.subr.mxu0 0.0
    %889 = vmatpush1.msra.mxu0 0.0
    %890 = vmatprep.subr.mxu0 0.0
    %891 = vmatpush1.msra.mxu0 0.0
    %892 = vmatprep.subr.mxu0 0.0
    %893 = vmatpush1.msra.mxu0 0.0
    %894 = vmatprep.subr.mxu0 0.0
    %895 = vmatpush1.msra.mxu0 %v867
    %896 = vmatprep.subr.mxu0 0.0
    %897 = vmatpush1.msra.mxu0 %v866
    %898 = vmatprep.subr.mxu0 0.0
    %899 = vmatpush1.msra.mxu0 %v865
    %900 = vmatprep.subr.mxu0 0.0
    %901 = vmatpush1.msra.mxu0 %v864
    %902 = vmatprep.subr.mxu0 0.0
    %903 = vmatpush1.msra.mxu0 %v863
    %904 = vmatprep.subr.mxu0 0.0
    %905 = vmatpush1.msra.mxu0 %v862
    %906 = vmatprep.subr.mxu0 0.0
    %907 = vmatpush1.msra.mxu0 %v861
    %908 = vmatprep.subr.mxu0 0.0
    %909 = vmatpush1.msra.mxu0 %v860
    %910 = vmatprep.subr.mxu0 0.0
    %911 = vmatpush2.msra.mxu0 0.0
    %912 = vmatprep.subr.mxu0 0.0
    %913 = vmatpush2.msra.mxu0 0.0
    %914 = vmatprep.subr.mxu0 0.0
    %915 = vmatpush2.msra.mxu0 0.0
    %916 = vmatprep.subr.mxu0 0.0
    %917 = vmatpush2.msra.mxu0 0.0
    %918 = vmatprep.subr.mxu0 0.0
    %919 = vmatpush2.msra.mxu0 0.0
    %920 = vmatprep.subr.mxu0 0.0
    %921 = vmatpush2.msra.mxu0 0.0
    %922 = vmatprep.subr.mxu0 0.0
    %923 = vmatpush2.msra.mxu0 0.0
    %924 = vmatprep.subr.mxu0 0.0
    %925 = vmatpush2.msra.mxu0 0.0
    %926 = vmatprep.subr.mxu0 0.0
    %927 = vmatpush2.msra.mxu0 0.0
    %928 = vmatprep.subr.mxu0 0.0
    %929 = vmatpush2.msra.mxu0 0.0
    %930 = vmatprep.subr.mxu0 0.0
    %931 = vmatpush2.msra.mxu0 0.0
    %932 = vmatprep.subr.mxu0 0.0
    %933 = vmatpush2.msra.mxu0 0.0
    %934 = vmatprep.subr.mxu0 0.0
    %935 = vmatpush2.msra.mxu0 0.0
    %936 = vmatprep.subr.mxu0 0.0
    %937 = vmatpush2.msra.mxu0 0.0
    %938 = vmatprep.subr.mxu0 0.0
    %939 = vmatpush2.msra.mxu0 0.0
    %940 = vmatprep.subr.mxu0 0.0
    %941 = vmatpush2.msra.mxu0 0.0
    %942 = vmatprep.mubr.f32.mxu0 0.0
    %943 = vmatmul.mubr.f32.gmra.mxu0 %v876
    %v944 = vpop.f32.mrf.mxu0
    %v945 = vadd.f32 %v873, %v944
    %v946 = vpop.f32.mrf.mxu0
    %947 = vdwg.mxu0
    %v948 = vmul.f32 %v945, 0.5
    %v949 = vtanh.pop %v948
    %v950 = vadd.f32 %v949, 1.0
    %v951 = vmul.f32 %v950, 0.5
    %953 = vrot.lane.b32.xlu0 %v945, 32
    %v954 = vpop.permute.xlu0 %953
    %v956 = vmul.f32 %v951, %v954
    %958 = vrot.lane.b32.xlu0 %v956, 64
    %v959 = vpop.permute.xlu0 %958
    %v961 = vadd.f32 %v945, %v959
    %v962 = vtanh.pop %v961
    %v963 = vsub.f32 1.0, %v951
    %965 = vrot.lane.b32.xlu0 %v962, 96
    %v966 = vpop.permute.xlu0 %965
    %v968 = vmul.f32 %v963, %v966
    %v969 = vmul.f32 %v951, %v620
    %v970 = vadd.f32 %v968, %v969
    %972 = vrot.lane.b32.xlu0 %v970, 96
    %v973 = vpop.permute.xlu0 %972
    %v975 = vsel %vm227, %v973, %v742
    %v976 = vld [vmem:[%s630] sm:$0xff]
    %v977 = vld [vmem:[%s630 + $0x8] sm:$0xff]
    %v978 = vld [vmem:[%s630 + $0x10] sm:$0xff]
    %v979 = vld [vmem:[%s630 + $0x18] sm:$0xff]
    %v980 = vld [vmem:[%s630 + $0x20] sm:$0xff]
    %v981 = vld [vmem:[%s630 + $0x28] sm:$0xff]
    %v982 = vld [vmem:[%s630 + $0x30] sm:$0xff]
    %v983 = vld [vmem:[%s630 + $0x38] sm:$0xff]
    %v984 = vld [vmem:[%s639] sm:$0x1]
    %v986 = vlaneseq
    %v987 = vshrl.u32 %v986, 7
    %v988 = vsub.s32 0, %v987
    %v989 = vrot.slane %v984, %v988
    %v992 = vsel %vm524, %v975, 0
    %994 = vmatprep.subr.mxu0 0.0
    %995 = vmatpush1.msra.mxu0 0.0
    %996 = vmatprep.subr.mxu0 0.0
    %997 = vmatpush1.msra.mxu0 0.0
    %998 = vmatprep.subr.mxu0 0.0
    %999 = vmatpush1.msra.mxu0 0.0
    %1000 = vmatprep.subr.mxu0 0.0
    %1001 = vmatpush1.msra.mxu0 0.0
    %1002 = vmatprep.subr.mxu0 0.0
    %1003 = vmatpush1.msra.mxu0 0.0
    %1004 = vmatprep.subr.mxu0 0.0
    %1005 = vmatpush1.msra.mxu0 0.0
    %1006 = vmatprep.subr.mxu0 0.0
    %1007 = vmatpush1.msra.mxu0 0.0
    %1008 = vmatprep.subr.mxu0 0.0
    %1009 = vmatpush1.msra.mxu0 0.0
    %1010 = vmatprep.subr.mxu0 0.0
    %1011 = vmatpush1.msra.mxu0 %v983
    %1012 = vmatprep.subr.mxu0 0.0
    %1013 = vmatpush1.msra.mxu0 %v982
    %1014 = vmatprep.subr.mxu0 0.0
    %1015 = vmatpush1.msra.mxu0 %v981
    %1016 = vmatprep.subr.mxu0 0.0
    %1017 = vmatpush1.msra.mxu0 %v980
    %1018 = vmatprep.subr.mxu0 0.0
    %1019 = vmatpush1.msra.mxu0 %v979
    %1020 = vmatprep.subr.mxu0 0.0
    %1021 = vmatpush1.msra.mxu0 %v978
    %1022 = vmatprep.subr.mxu0 0.0
    %1023 = vmatpush1.msra.mxu0 %v977
    %1024 = vmatprep.subr.mxu0 0.0
    %1025 = vmatpush1.msra.mxu0 %v976
    %1026 = vmatprep.subr.mxu0 0.0
    %1027 = vmatpush2.msra.mxu0 0.0
    %1028 = vmatprep.subr.mxu0 0.0
    %1029 = vmatpush2.msra.mxu0 0.0
    %1030 = vmatprep.subr.mxu0 0.0
    %1031 = vmatpush2.msra.mxu0 0.0
    %1032 = vmatprep.subr.mxu0 0.0
    %1033 = vmatpush2.msra.mxu0 0.0
    %1034 = vmatprep.subr.mxu0 0.0
    %1035 = vmatpush2.msra.mxu0 0.0
    %1036 = vmatprep.subr.mxu0 0.0
    %1037 = vmatpush2.msra.mxu0 0.0
    %1038 = vmatprep.subr.mxu0 0.0
    %1039 = vmatpush2.msra.mxu0 0.0
    %1040 = vmatprep.subr.mxu0 0.0
    %1041 = vmatpush2.msra.mxu0 0.0
    %1042 = vmatprep.subr.mxu0 0.0
    %1043 = vmatpush2.msra.mxu0 0.0
    %1044 = vmatprep.subr.mxu0 0.0
    %1045 = vmatpush2.msra.mxu0 0.0
    %1046 = vmatprep.subr.mxu0 0.0
    %1047 = vmatpush2.msra.mxu0 0.0
    %1048 = vmatprep.subr.mxu0 0.0
    %1049 = vmatpush2.msra.mxu0 0.0
    %1050 = vmatprep.subr.mxu0 0.0
    %1051 = vmatpush2.msra.mxu0 0.0
    %1052 = vmatprep.subr.mxu0 0.0
    %1053 = vmatpush2.msra.mxu0 0.0
    %1054 = vmatprep.subr.mxu0 0.0
    %1055 = vmatpush2.msra.mxu0 0.0
    %1056 = vmatprep.subr.mxu0 0.0
    %1057 = vmatpush2.msra.mxu0 0.0
    %1058 = vmatprep.mubr.f32.mxu0 0.0
    %1059 = vmatmul.mubr.f32.gmra.mxu0 %v992
    %v1060 = vpop.f32.mrf.mxu0
    %v1061 = vadd.f32 %v989, %v1060
    %v1062 = vpop.f32.mrf.mxu0
    %1063 = vdwg.mxu0
    %v1064 = vmul.f32 %v1061, 0.5
    %v1065 = vtanh.pop %v1064
    %v1066 = vadd.f32 %v1065, 1.0
    %v1067 = vmul.f32 %v1066, 0.5
    %1069 = vrot.lane.b32.xlu0 %v1061, 32
    %v1070 = vpop.permute.xlu0 %1069
    %v1072 = vmul.f32 %v1067, %v1070
    %1074 = vrot.lane.b32.xlu0 %v1072, 64
    %v1075 = vpop.permute.xlu0 %1074
    %v1077 = vadd.f32 %v1061, %v1075
    %v1078 = vtanh.pop %v1077
    %v1079 = vsub.f32 1.0, %v1067
    %1081 = vrot.lane.b32.xlu0 %v1078, 96
    %v1082 = vpop.permute.xlu0 %1081
    %v1084 = vmul.f32 %v1079, %v1082
    %v1085 = vmul.f32 %v1067, %v742
    %v1086 = vadd.f32 %v1084, %v1085
    %1088 = vrot.lane.b32.xlu0 %v1086, 96
    %v1089 = vpop.permute.xlu0 %1088
    %1091 = vst.msk [vmem:[#allocation2 + $0x8] sm:$0xff] %vm227, %v1089
    %v1092 = vld [vmem:[%s9] sm:$0xff]
    %v1093 = vld [vmem:[%s9 + $0x8] sm:$0xff]
    %v1094 = vld [vmem:[%s9 + $0x10] sm:$0xff]
    %v1095 = vld [vmem:[%s9 + $0x18] sm:$0xff]
    %v1096 = vld [vmem:[#allocation17] sm:$0x1]
    %v1098 = vlaneseq
    %v1099 = vshrl.u32 %v1098, 7
    %v1100 = vsub.s32 0, %v1099
    %v1101 = vrot.slane %v1096, %v1100
    %v1103 = vsel %vm227, %v857, 0
    %1105 = vmatprep.subr.mxu0 0.0
    %1106 = vmatpush1.msra.mxu0 0.0
    %1107 = vmatprep.subr.mxu0 0.0
    %1108 = vmatpush1.msra.mxu0 0.0
    %1109 = vmatprep.subr.mxu0 0.0
    %1110 = vmatpush1.msra.mxu0 0.0
    %1111 = vmatprep.subr.mxu0 0.0
    %1112 = vmatpush1.msra.mxu0 0.0
    %1113 = vmatprep.subr.mxu0 0.0
    %1114 = vmatpush1.msra.mxu0 0.0
    %1115 = vmatprep.subr.mxu0 0.0
    %1116 = vmatpush1.msra.mxu0 0.0
    %1117 = vmatprep.subr.mxu0 0.0
    %1118 = vmatpush1.msra.mxu0 0.0
    %1119 = vmatprep.subr.mxu0 0.0
    %1120 = vmatpush1.msra.mxu0 0.0
    %1121 = vmatprep.subr.mxu0 0.0
    %1122 = vmatpush1.msra.mxu0 0.0
    %1123 = vmatprep.subr.mxu0 0.0
    %1124 = vmatpush1.msra.mxu0 0.0
    %1125 = vmatprep.subr.mxu0 0.0
    %1126 = vmatpush1.msra.mxu0 0.0
    %1127 = vmatprep.subr.mxu0 0.0
    %1128 = vmatpush1.msra.mxu0 0.0
    %1129 = vmatprep.subr.mxu0 0.0
    %1130 = vmatpush1.msra.mxu0 %v1095
    %1131 = vmatprep.subr.mxu0 0.0
    %1132 = vmatpush1.msra.mxu0 %v1094
    %1133 = vmatprep.subr.mxu0 0.0
    %1134 = vmatpush1.msra.mxu0 %v1093
    %1135 = vmatprep.subr.mxu0 0.0
    %1136 = vmatpush1.msra.mxu0 %v1092
    %1137 = vmatprep.subr.mxu0 0.0
    %1138 = vmatpush2.msra.mxu0 0.0
    %1139 = vmatprep.subr.mxu0 0.0
    %1140 = vmatpush2.msra.mxu0 0.0
    %1141 = vmatprep.subr.mxu0 0.0
    %1142 = vmatpush2.msra.mxu0 0.0
    %1143 = vmatprep.subr.mxu0 0.0
    %1144 = vmatpush2.msra.mxu0 0.0
    %1145 = vmatprep.subr.mxu0 0.0
    %1146 = vmatpush2.msra.mxu0 0.0
    %1147 = vmatprep.subr.mxu0 0.0
    %1148 = vmatpush2.msra.mxu0 0.0
    %1149 = vmatprep.subr.mxu0 0.0
    %1150 = vmatpush2.msra.mxu0 0.0
    %1151 = vmatprep.subr.mxu0 0.0
    %1152 = vmatpush2.msra.mxu0 0.0
    %1153 = vmatprep.subr.mxu0 0.0
    %1154 = vmatpush2.msra.mxu0 0.0
    %1155 = vmatprep.subr.mxu0 0.0
    %1156 = vmatpush2.msra.mxu0 0.0
    %1157 = vmatprep.subr.mxu0 0.0
    %1158 = vmatpush2.msra.mxu0 0.0
    %1159 = vmatprep.subr.mxu0 0.0
    %1160 = vmatpush2.msra.mxu0 0.0
    %1161 = vmatprep.subr.mxu0 0.0
    %1162 = vmatpush2.msra.mxu0 0.0
    %1163 = vmatprep.subr.mxu0 0.0
    %1164 = vmatpush2.msra.mxu0 0.0
    %1165 = vmatprep.subr.mxu0 0.0
    %1166 = vmatpush2.msra.mxu0 0.0
    %1167 = vmatprep.subr.mxu0 0.0
    %1168 = vmatpush2.msra.mxu0 0.0
    %1169 = vmatprep.mubr.f32.mxu0 0.0
    %1170 = vmatmul.mubr.f32.gmra.mxu0 %v1103
    %v1171 = vpop.f32.mrf.mxu0
    %v1172 = vadd.f32 %v1101, %v1171
    %v1173 = vpop.f32.mrf.mxu0
    %1174 = vdwg.mxu0
    %v1175 = vadd.f32 %v383, %v1172
    %v1176 = vmul.f32 %v1175, 0.5
    %v1177 = vtanh.pop %v1176
    %v1178 = vadd.f32 %v1177, 1.0
    %v1179 = vmul.f32 %v1178, 0.5
    %1181 = vrot.lane.b32.xlu0 %v1172, 64
    %v1182 = vpop.permute.xlu0 %1181
    %v1184 = vmul.f32 %v1179, %v1182
    %1186 = vrot.lane.b32.xlu0 %v1184, 64
    %v1187 = vpop.permute.xlu0 %1186
    %v1189 = vadd.f32 %v383, %v1187
    %v1190 = vtanh.pop %v1189
    %v1191 = vsub.f32 1.0, %v1179
    %1193 = vrot.lane.b32.xlu0 %v1190, 96
    %v1194 = vpop.permute.xlu0 %1193
    %v1196 = vmul.f32 %v1191, %v1194
    %v1197 = vmul.f32 %v1179, %v854
    %v1198 = vadd.f32 %v1196, %v1197
    %1200 = vrot.lane.b32.xlu0 %v1198, 96
    %v1201 = vpop.permute.xlu0 %1200
    %v1203 = vsel %vm227, %v1201, %v970
    %v1204 = vld [vmem:[#allocation18] sm:$0xff]
    %v1205 = vld [vmem:[#allocation18 + $0x8] sm:$0xff]
    %v1206 = vld [vmem:[#allocation18 + $0x10] sm:$0xff]
    %v1207 = vld [vmem:[#allocation18 + $0x18] sm:$0xff]
    %v1208 = vld [vmem:[#allocation18 + $0x20] sm:$0xff]
    %v1209 = vld [vmem:[#allocation18 + $0x28] sm:$0xff]
    %v1210 = vld [vmem:[#allocation18 + $0x30] sm:$0xff]
    %v1211 = vld [vmem:[#allocation18 + $0x38] sm:$0xff]
    %v1212 = vld [vmem:[%s12] sm:$0x1]
    %v1214 = vlaneseq
    %v1215 = vshrl.u32 %v1214, 7
    %v1216 = vsub.s32 0, %v1215
    %v1217 = vrot.slane %v1212, %v1216
    %v1220 = vsel %vm524, %v1203, 0
    %1222 = vmatprep.subr.mxu0 0.0
    %1223 = vmatpush1.msra.mxu0 0.0
    %1224 = vmatprep.subr.mxu0 0.0
    %1225 = vmatpush1.msra.mxu0 0.0
    %1226 = vmatprep.subr.mxu0 0.0
    %1227 = vmatpush1.msra.mxu0 0.0
    %1228 = vmatprep.subr.mxu0 0.0
    %1229 = vmatpush1.msra.mxu0 0.0
    %1230 = vmatprep.subr.mxu0 0.0
    %1231 = vmatpush1.msra.mxu0 0.0
    %1232 = vmatprep.subr.mxu0 0.0
    %1233 = vmatpush1.msra.mxu0 0.0
    %1234 = vmatprep.subr.mxu0 0.0
    %1235 = vmatpush1.msra.mxu0 0.0
    %1236 = vmatprep.subr.mxu0 0.0
    %1237 = vmatpush1.msra.mxu0 0.0
    %1238 = vmatprep.subr.mxu0 0.0
    %1239 = vmatpush1.msra.mxu0 %v1211
    %1240 = vmatprep.subr.mxu0 0.0
    %1241 = vmatpush1.msra.mxu0 %v1210
    %1242 = vmatprep.subr.mxu0 0.0
    %1243 = vmatpush1.msra.mxu0 %v1209
    %1244 = vmatprep.subr.mxu0 0.0
    %1245 = vmatpush1.msra.mxu0 %v1208
    %1246 = vmatprep.subr.mxu0 0.0
    %1247 = vmatpush1.msra.mxu0 %v1207
    %1248 = vmatprep.subr.mxu0 0.0
    %1249 = vmatpush1.msra.mxu0 %v1206
    %1250 = vmatprep.subr.mxu0 0.0
    %1251 = vmatpush1.msra.mxu0 %v1205
    %1252 = vmatprep.subr.mxu0 0.0
    %1253 = vmatpush1.msra.mxu0 %v1204
    %1254 = vmatprep.subr.mxu0 0.0
    %1255 = vmatpush2.msra.mxu0 0.0
    %1256 = vmatprep.subr.mxu0 0.0
    %1257 = vmatpush2.msra.mxu0 0.0
    %1258 = vmatprep.subr.mxu0 0.0
    %1259 = vmatpush2.msra.mxu0 0.0
    %1260 = vmatprep.subr.mxu0 0.0
    %1261 = vmatpush2.msra.mxu0 0.0
    %1262 = vmatprep.subr.mxu0 0.0
    %1263 = vmatpush2.msra.mxu0 0.0
    %1264 = vmatprep.subr.mxu0 0.0
    %1265 = vmatpush2.msra.mxu0 0.0
    %1266 = vmatprep.subr.mxu0 0.0
    %1267 = vmatpush2.msra.mxu0 0.0
    %1268 = vmatprep.subr.mxu0 0.0
    %1269 = vmatpush2.msra.mxu0 0.0
    %1270 = vmatprep.subr.mxu0 0.0
    %1271 = vmatpush2.msra.mxu0 0.0
    %1272 = vmatprep.subr.mxu0 0.0
    %1273 = vmatpush2.msra.mxu0 0.0
    %1274 = vmatprep.subr.mxu0 0.0
    %1275 = vmatpush2.msra.mxu0 0.0
    %1276 = vmatprep.subr.mxu0 0.0
    %1277 = vmatpush2.msra.mxu0 0.0
    %1278 = vmatprep.subr.mxu0 0.0
    %1279 = vmatpush2.msra.mxu0 0.0
    %1280 = vmatprep.subr.mxu0 0.0
    %1281 = vmatpush2.msra.mxu0 0.0
    %1282 = vmatprep.subr.mxu0 0.0
    %1283 = vmatpush2.msra.mxu0 0.0
    %1284 = vmatprep.subr.mxu0 0.0
    %1285 = vmatpush2.msra.mxu0 0.0
    %1286 = vmatprep.mubr.f32.mxu0 0.0
    %1287 = vmatmul.mubr.f32.gmra.mxu0 %v1220
    %v1288 = vpop.f32.mrf.mxu0
    %v1289 = vadd.f32 %v1217, %v1288
    %v1290 = vpop.f32.mrf.mxu0
    %1291 = vdwg.mxu0
    %v1292 = vmul.f32 %v1289, 0.5
    %v1293 = vtanh.pop %v1292
    %v1294 = vadd.f32 %v1293, 1.0
    %v1295 = vmul.f32 %v1294, 0.5
    %1297 = vrot.lane.b32.xlu0 %v1289, 32
    %v1298 = vpop.permute.xlu0 %1297
    %v1300 = vmul.f32 %v1295, %v1298
    %1302 = vrot.lane.b32.xlu0 %v1300, 64
    %v1303 = vpop.permute.xlu0 %1302
    %v1305 = vadd.f32 %v1289, %v1303
    %v1306 = vtanh.pop %v1305
    %v1307 = vsub.f32 1.0, %v1295
    %1309 = vrot.lane.b32.xlu0 %v1306, 96
    %v1310 = vpop.permute.xlu0 %1309
    %v1312 = vmul.f32 %v1307, %v1310
    %v1313 = vmul.f32 %v1295, %v970
    %v1314 = vadd.f32 %v1312, %v1313
    %1316 = vrot.lane.b32.xlu0 %v1314, 96
    %v1317 = vpop.permute.xlu0 %1316
    %v1319 = vsel %vm227, %v1317, %v1086
    %v1320 = vld [vmem:[%s630] sm:$0xff]
    %v1321 = vld [vmem:[%s630 + $0x8] sm:$0xff]
    %v1322 = vld [vmem:[%s630 + $0x10] sm:$0xff]
    %v1323 = vld [vmem:[%s630 + $0x18] sm:$0xff]
    %v1324 = vld [vmem:[%s630 + $0x20] sm:$0xff]
    %v1325 = vld [vmem:[%s630 + $0x28] sm:$0xff]
    %v1326 = vld [vmem:[%s630 + $0x30] sm:$0xff]
    %v1327 = vld [vmem:[%s630 + $0x38] sm:$0xff]
    %v1328 = vld [vmem:[%s639] sm:$0x1]
    %v1330 = vlaneseq
    %v1331 = vshrl.u32 %v1330, 7
    %v1332 = vsub.s32 0, %v1331
    %v1333 = vrot.slane %v1328, %v1332
    %v1336 = vsel %vm524, %v1319, 0
    %1338 = vmatprep.subr.mxu0 0.0
    %1339 = vmatpush1.msra.mxu0 0.0
    %1340 = vmatprep.subr.mxu0 0.0
    %1341 = vmatpush1.msra.mxu0 0.0
    %1342 = vmatprep.subr.mxu0 0.0
    %1343 = vmatpush1.msra.mxu0 0.0
    %1344 = vmatprep.subr.mxu0 0.0
    %1345 = vmatpush1.msra.mxu0 0.0
    %1346 = vmatprep.subr.mxu0 0.0
    %1347 = vmatpush1.msra.mxu0 0.0
    %1348 = vmatprep.subr.mxu0 0.0
    %1349 = vmatpush1.msra.mxu0 0.0
    %1350 = vmatprep.subr.mxu0 0.0
    %1351 = vmatpush1.msra.mxu0 0.0
    %1352 = vmatprep.subr.mxu0 0.0
    %1353 = vmatpush1.msra.mxu0 0.0
    %1354 = vmatprep.subr.mxu0 0.0
    %1355 = vmatpush1.msra.mxu0 %v1327
    %1356 = vmatprep.subr.mxu0 0.0
    %1357 = vmatpush1.msra.mxu0 %v1326
    %1358 = vmatprep.subr.mxu0 0.0
    %1359 = vmatpush1.msra.mxu0 %v1325
    %1360 = vmatprep.subr.mxu0 0.0
    %1361 = vmatpush1.msra.mxu0 %v1324
    %1362 = vmatprep.subr.mxu0 0.0
    %1363 = vmatpush1.msra.mxu0 %v1323
    %1364 = vmatprep.subr.mxu0 0.0
    %1365 = vmatpush1.msra.mxu0 %v1322
    %1366 = vmatprep.subr.mxu0 0.0
    %1367 = vmatpush1.msra.mxu0 %v1321
    %1368 = vmatprep.subr.mxu0 0.0
    %1369 = vmatpush1.msra.mxu0 %v1320
    %1370 = vmatprep.subr.mxu0 0.0
    %1371 = vmatpush2.msra.mxu0 0.0
    %1372 = vmatprep.subr.mxu0 0.0
    %1373 = vmatpush2.msra.mxu0 0.0
    %1374 = vmatprep.subr.mxu0 0.0
    %1375 = vmatpush2.msra.mxu0 0.0
    %1376 = vmatprep.subr.mxu0 0.0
    %1377 = vmatpush2.msra.mxu0 0.0
    %1378 = vmatprep.subr.mxu0 0.0
    %1379 = vmatpush2.msra.mxu0 0.0
    %1380 = vmatprep.subr.mxu0 0.0
    %1381 = vmatpush2.msra.mxu0 0.0
    %1382 = vmatprep.subr.mxu0 0.0
    %1383 = vmatpush2.msra.mxu0 0.0
    %1384 = vmatprep.subr.mxu0 0.0
    %1385 = vmatpush2.msra.mxu0 0.0
    %1386 = vmatprep.subr.mxu0 0.0
    %1387 = vmatpush2.msra.mxu0 0.0
    %1388 = vmatprep.subr.mxu0 0.0
    %1389 = vmatpush2.msra.mxu0 0.0
    %1390 = vmatprep.subr.mxu0 0.0
    %1391 = vmatpush2.msra.mxu0 0.0
    %1392 = vmatprep.subr.mxu0 0.0
    %1393 = vmatpush2.msra.mxu0 0.0
    %1394 = vmatprep.subr.mxu0 0.0
    %1395 = vmatpush2.msra.mxu0 0.0
    %1396 = vmatprep.subr.mxu0 0.0
    %1397 = vmatpush2.msra.mxu0 0.0
    %1398 = vmatprep.subr.mxu0 0.0
    %1399 = vmatpush2.msra.mxu0 0.0
    %1400 = vmatprep.subr.mxu0 0.0
    %1401 = vmatpush2.msra.mxu0 0.0
    %1402 = vmatprep.mubr.f32.mxu0 0.0
    %1403 = vmatmul.mubr.f32.gmra.mxu0 %v1336
    %v1404 = vpop.f32.mrf.mxu0
    %v1405 = vadd.f32 %v1333, %v1404
    %v1406 = vpop.f32.mrf.mxu0
    %1407 = vdwg.mxu0
    %v1408 = vmul.f32 %v1405, 0.5
    %v1409 = vtanh.pop %v1408
    %v1410 = vadd.f32 %v1409, 1.0
    %v1411 = vmul.f32 %v1410, 0.5
    %1413 = vrot.lane.b32.xlu0 %v1405, 32
    %v1414 = vpop.permute.xlu0 %1413
    %v1416 = vmul.f32 %v1411, %v1414
    %1418 = vrot.lane.b32.xlu0 %v1416, 64
    %v1419 = vpop.permute.xlu0 %1418
    %v1421 = vadd.f32 %v1405, %v1419
    %v1422 = vtanh.pop %v1421
    %v1423 = vsub.f32 1.0, %v1411
    %1425 = vrot.lane.b32.xlu0 %v1422, 96
    %v1426 = vpop.permute.xlu0 %1425
    %v1428 = vmul.f32 %v1423, %v1426
    %v1429 = vmul.f32 %v1411, %v1086
    %v1430 = vadd.f32 %v1428, %v1429
    %1432 = vrot.lane.b32.xlu0 %v1430, 96
    %v1433 = vpop.permute.xlu0 %1432
    %1435 = vst.msk [vmem:[#allocation2 + $0x10] sm:$0xff] %vm227, %v1433
    %v1436 = vld [vmem:[%s9] sm:$0xff]
    %v1437 = vld [vmem:[%s9 + $0x8] sm:$0xff]
    %v1438 = vld [vmem:[%s9 + $0x10] sm:$0xff]
    %v1439 = vld [vmem:[%s9 + $0x18] sm:$0xff]
    %v1440 = vld [vmem:[#allocation17] sm:$0x1]
    %v1442 = vlaneseq
    %v1443 = vshrl.u32 %v1442, 7
    %v1444 = vsub.s32 0, %v1443
    %v1445 = vrot.slane %v1440, %v1444
    %v1447 = vsel %vm227, %v1201, 0
    %1449 = vmatprep.subr.mxu0 0.0
    %1450 = vmatpush1.msra.mxu0 0.0
    %1451 = vmatprep.subr.mxu0 0.0
    %1452 = vmatpush1.msra.mxu0 0.0
    %1453 = vmatprep.subr.mxu0 0.0
    %1454 = vmatpush1.msra.mxu0 0.0
    %1455 = vmatprep.subr.mxu0 0.0
    %1456 = vmatpush1.msra.mxu0 0.0
    %1457 = vmatprep.subr.mxu0 0.0
    %1458 = vmatpush1.msra.mxu0 0.0
    %1459 = vmatprep.subr.mxu0 0.0
    %1460 = vmatpush1.msra.mxu0 0.0
    %1461 = vmatprep.subr.mxu0 0.0
    %1462 = vmatpush1.msra.mxu0 0.0
    %1463 = vmatprep.subr.mxu0 0.0
    %1464 = vmatpush1.msra.mxu0 0.0
    %1465 = vmatprep.subr.mxu0 0.0
    %1466 = vmatpush1.msra.mxu0 0.0
    %1467 = vmatprep.subr.mxu0 0.0
    %1468 = vmatpush1.msra.mxu0 0.0
    %1469 = vmatprep.subr.mxu0 0.0
    %1470 = vmatpush1.msra.mxu0 0.0
    %1471 = vmatprep.subr.mxu0 0.0
    %1472 = vmatpush1.msra.mxu0 0.0
    %1473 = vmatprep.subr.mxu0 0.0
    %1474 = vmatpush1.msra.mxu0 %v1439
    %1475 = vmatprep.subr.mxu0 0.0
    %1476 = vmatpush1.msra.mxu0 %v1438
    %1477 = vmatprep.subr.mxu0 0.0
    %1478 = vmatpush1.msra.mxu0 %v1437
    %1479 = vmatprep.subr.mxu0 0.0
    %1480 = vmatpush1.msra.mxu0 %v1436
    %1481 = vmatprep.subr.mxu0 0.0
    %1482 = vmatpush2.msra.mxu0 0.0
    %1483 = vmatprep.subr.mxu0 0.0
    %1484 = vmatpush2.msra.mxu0 0.0
    %1485 = vmatprep.subr.mxu0 0.0
    %1486 = vmatpush2.msra.mxu0 0.0
    %1487 = vmatprep.subr.mxu0 0.0
    %1488 = vmatpush2.msra.mxu0 0.0
    %1489 = vmatprep.subr.mxu0 0.0
    %1490 = vmatpush2.msra.mxu0 0.0
    %1491 = vmatprep.subr.mxu0 0.0
    %1492 = vmatpush2.msra.mxu0 0.0
    %1493 = vmatprep.subr.mxu0 0.0
    %1494 = vmatpush2.msra.mxu0 0.0
    %1495 = vmatprep.subr.mxu0 0.0
    %1496 = vmatpush2.msra.mxu0 0.0
    %1497 = vmatprep.subr.mxu0 0.0
    %1498 = vmatpush2.msra.mxu0 0.0
    %1499 = vmatprep.subr.mxu0 0.0
    %1500 = vmatpush2.msra.mxu0 0.0
    %1501 = vmatprep.subr.mxu0 0.0
    %1502 = vmatpush2.msra.mxu0 0.0
    %1503 = vmatprep.subr.mxu0 0.0
    %1504 = vmatpush2.msra.mxu0 0.0
    %1505 = vmatprep.subr.mxu0 0.0
    %1506 = vmatpush2.msra.mxu0 0.0
    %1507 = vmatprep.subr.mxu0 0.0
    %1508 = vmatpush2.msra.mxu0 0.0
    %1509 = vmatprep.subr.mxu0 0.0
    %1510 = vmatpush2.msra.mxu0 0.0
    %1511 = vmatprep.subr.mxu0 0.0
    %1512 = vmatpush2.msra.mxu0 0.0
    %1513 = vmatprep.mubr.f32.mxu0 0.0
    %1514 = vmatmul.mubr.f32.gmra.mxu0 %v1447
    %v1515 = vpop.f32.mrf.mxu0
    %v1516 = vadd.f32 %v1445, %v1515
    %v1517 = vpop.f32.mrf.mxu0
    %1518 = vdwg.mxu0
    %v1519 = vadd.f32 %v383, %v1516
    %v1520 = vmul.f32 %v1519, 0.5
    %v1521 = vtanh.pop %v1520
    %v1522 = vadd.f32 %v1521, 1.0
    %v1523 = vmul.f32 %v1522, 0.5
    %1525 = vrot.lane.b32.xlu0 %v1516, 64
    %v1526 = vpop.permute.xlu0 %1525
    %v1528 = vmul.f32 %v1523, %v1526
    %1530 = vrot.lane.b32.xlu0 %v1528, 64
    %v1531 = vpop.permute.xlu0 %1530
    %v1533 = vadd.f32 %v383, %v1531
    %v1534 = vtanh.pop %v1533
    %v1535 = vsub.f32 1.0, %v1523
    %1537 = vrot.lane.b32.xlu0 %v1534, 96
    %v1538 = vpop.permute.xlu0 %1537
    %v1540 = vmul.f32 %v1535, %v1538
    %v1541 = vmul.f32 %v1523, %v1198
    %v1542 = vadd.f32 %v1540, %v1541
    %1544 = vrot.lane.b32.xlu0 %v1542, 96
    %v1545 = vpop.permute.xlu0 %1544
    %v1547 = vsel %vm227, %v1545, %v1314
    %v1548 = vld [vmem:[#allocation18] sm:$0xff]
    %v1549 = vld [vmem:[#allocation18 + $0x8] sm:$0xff]
    %v1550 = vld [vmem:[#allocation18 + $0x10] sm:$0xff]
    %v1551 = vld [vmem:[#allocation18 + $0x18] sm:$0xff]
    %v1552 = vld [vmem:[#allocation18 + $0x20] sm:$0xff]
    %v1553 = vld [vmem:[#allocation18 + $0x28] sm:$0xff]
    %v1554 = vld [vmem:[#allocation18 + $0x30] sm:$0xff]
    %v1555 = vld [vmem:[#allocation18 + $0x38] sm:$0xff]
    %v1556 = vld [vmem:[%s12] sm:$0x1]
    %v1558 = vlaneseq
    %v1559 = vshrl.u32 %v1558, 7
    %v1560 = vsub.s32 0, %v1559
    %v1561 = vrot.slane %v1556, %v1560
    %v1564 = vsel %vm524, %v1547, 0
    %1566 = vmatprep.subr.mxu0 0.0
    %1567 = vmatpush1.msra.mxu0 0.0
    %1568 = vmatprep.subr.mxu0 0.0
    %1569 = vmatpush1.msra.mxu0 0.0
    %1570 = vmatprep.subr.mxu0 0.0
    %1571 = vmatpush1.msra.mxu0 0.0
    %1572 = vmatprep.subr.mxu0 0.0
    %1573 = vmatpush1.msra.mxu0 0.0
    %1574 = vmatprep.subr.mxu0 0.0
    %1575 = vmatpush1.msra.mxu0 0.0
    %1576 = vmatprep.subr.mxu0 0.0
    %1577 = vmatpush1.msra.mxu0 0.0
    %1578 = vmatprep.subr.mxu0 0.0
    %1579 = vmatpush1.msra.mxu0 0.0
    %1580 = vmatprep.subr.mxu0 0.0
    %1581 = vmatpush1.msra.mxu0 0.0
    %1582 = vmatprep.subr.mxu0 0.0
    %1583 = vmatpush1.msra.mxu0 %v1555
    %1584 = vmatprep.subr.mxu0 0.0
    %1585 = vmatpush1.msra.mxu0 %v1554
    %1586 = vmatprep.subr.mxu0 0.0
    %1587 = vmatpush1.msra.mxu0 %v1553
    %1588 = vmatprep.subr.mxu0 0.0
    %1589 = vmatpush1.msra.mxu0 %v1552
    %1590 = vmatprep.subr.mxu0 0.0
    %1591 = vmatpush1.msra.mxu0 %v1551
    %1592 = vmatprep.subr.mxu0 0.0
    %1593 = vmatpush1.msra.mxu0 %v1550
    %1594 = vmatprep.subr.mxu0 0.0
    %1595 = vmatpush1.msra.mxu0 %v1549
    %1596 = vmatprep.subr.mxu0 0.0
    %1597 = vmatpush1.msra.mxu0 %v1548
    %1598 = vmatprep.subr.mxu0 0.0
    %1599 = vmatpush2.msra.mxu0 0.0
    %1600 = vmatprep.subr.mxu0 0.0
    %1601 = vmatpush2.msra.mxu0 0.0
    %1602 = vmatprep.subr.mxu0 0.0
    %1603 = vmatpush2.msra.mxu0 0.0
    %1604 = vmatprep.subr.mxu0 0.0
    %1605 = vmatpush2.msra.mxu0 0.0
    %1606 = vmatprep.subr.mxu0 0.0
    %1607 = vmatpush2.msra.mxu0 0.0
    %1608 = vmatprep.subr.mxu0 0.0
    %1609 = vmatpush2.msra.mxu0 0.0
    %1610 = vmatprep.subr.mxu0 0.0
    %1611 = vmatpush2.msra.mxu0 0.0
    %1612 = vmatprep.subr.mxu0 0.0
    %1613 = vmatpush2.msra.mxu0 0.0
    %1614 = vmatprep.subr.mxu0 0.0
    %1615 = vmatpush2.msra.mxu0 0.0
    %1616 = vmatprep.subr.mxu0 0.0
    %1617 = vmatpush2.msra.mxu0 0.0
    %1618 = vmatprep.subr.mxu0 0.0
    %1619 = vmatpush2.msra.mxu0 0.0
    %1620 = vmatprep.subr.mxu0 0.0
    %1621 = vmatpush2.msra.mxu0 0.0
    %1622 = vmatprep.subr.mxu0 0.0
    %1623 = vmatpush2.msra.mxu0 0.0
    %1624 = vmatprep.subr.mxu0 0.0
    %1625 = vmatpush2.msra.mxu0 0.0
    %1626 = vmatprep.subr.mxu0 0.0
    %1627 = vmatpush2.msra.mxu0 0.0
    %1628 = vmatprep.subr.mxu0 0.0
    %1629 = vmatpush2.msra.mxu0 0.0
    %1630 = vmatprep.mubr.f32.mxu0 0.0
    %1631 = vmatmul.mubr.f32.gmra.mxu0 %v1564
    %v1632 = vpop.f32.mrf.mxu0
    %v1633 = vadd.f32 %v1561, %v1632
    %v1634 = vpop.f32.mrf.mxu0
    %1635 = vdwg.mxu0
    %v1636 = vmul.f32 %v1633, 0.5
    %v1637 = vtanh.pop %v1636
    %v1638 = vadd.f32 %v1637, 1.0
    %v1639 = vmul.f32 %v1638, 0.5
    %1641 = vrot.lane.b32.xlu0 %v1633, 32
    %v1642 = vpop.permute.xlu0 %1641
    %v1644 = vmul.f32 %v1639, %v1642
    %1646 = vrot.lane.b32.xlu0 %v1644, 64
    %v1647 = vpop.permute.xlu0 %1646
    %v1649 = vadd.f32 %v1633, %v1647
    %v1650 = vtanh.pop %v1649
    %v1651 = vsub.f32 1.0, %v1639
    %1653 = vrot.lane.b32.xlu0 %v1650, 96
    %v1654 = vpop.permute.xlu0 %1653
    %v1656 = vmul.f32 %v1651, %v1654
    %v1657 = vmul.f32 %v1639, %v1314
    %v1658 = vadd.f32 %v1656, %v1657
    %1660 = vrot.lane.b32.xlu0 %v1658, 96
    %v1661 = vpop.permute.xlu0 %1660
    %v1663 = vsel %vm227, %v1661, %v1430
    %v1664 = vld [vmem:[%s630] sm:$0xff]
    %v1665 = vld [vmem:[%s630 + $0x8] sm:$0xff]
    %v1666 = vld [vmem:[%s630 + $0x10] sm:$0xff]
    %v1667 = vld [vmem:[%s630 + $0x18] sm:$0xff]
    %v1668 = vld [vmem:[%s630 + $0x20] sm:$0xff]
    %v1669 = vld [vmem:[%s630 + $0x28] sm:$0xff]
    %v1670 = vld [vmem:[%s630 + $0x30] sm:$0xff]
    %v1671 = vld [vmem:[%s630 + $0x38] sm:$0xff]
    %v1672 = vld [vmem:[%s639] sm:$0x1]
    %v1674 = vlaneseq
    %v1675 = vshrl.u32 %v1674, 7
    %v1676 = vsub.s32 0, %v1675
    %v1677 = vrot.slane %v1672, %v1676
    %v1680 = vsel %vm524, %v1663, 0
    %1682 = vmatprep.subr.mxu0 0.0
    %1683 = vmatpush1.msra.mxu0 0.0
    %1684 = vmatprep.subr.mxu0 0.0
    %1685 = vmatpush1.msra.mxu0 0.0
    %1686 = vmatprep.subr.mxu0 0.0
    %1687 = vmatpush1.msra.mxu0 0.0
    %1688 = vmatprep.subr.mxu0 0.0
    %1689 = vmatpush1.msra.mxu0 0.0
    %1690 = vmatprep.subr.mxu0 0.0
    %1691 = vmatpush1.msra.mxu0 0.0
    %1692 = vmatprep.subr.mxu0 0.0
    %1693 = vmatpush1.msra.mxu0 0.0
    %1694 = vmatprep.subr.mxu0 0.0
    %1695 = vmatpush1.msra.mxu0 0.0
    %1696 = vmatprep.subr.mxu0 0.0
    %1697 = vmatpush1.msra.mxu0 0.0
    %1698 = vmatprep.subr.mxu0 0.0
    %1699 = vmatpush1.msra.mxu0 %v1671
    %1700 = vmatprep.subr.mxu0 0.0
    %1701 = vmatpush1.msra.mxu0 %v1670
    %1702 = vmatprep.subr.mxu0 0.0
    %1703 = vmatpush1.msra.mxu0 %v1669
    %1704 = vmatprep.subr.mxu0 0.0
    %1705 = vmatpush1.msra.mxu0 %v1668
    %1706 = vmatprep.subr.mxu0 0.0
    %1707 = vmatpush1.msra.mxu0 %v1667
    %1708 = vmatprep.subr.mxu0 0.0
    %1709 = vmatpush1.msra.mxu0 %v1666
    %1710 = vmatprep.subr.mxu0 0.0
    %1711 = vmatpush1.msra.mxu0 %v1665
    %1712 = vmatprep.subr.mxu0 0.0
    %1713 = vmatpush1.msra.mxu0 %v1664
    %1714 = vmatprep.subr.mxu0 0.0
    %1715 = vmatpush2.msra.mxu0 0.0
    %1716 = vmatprep.subr.mxu0 0.0
    %1717 = vmatpush2.msra.mxu0 0.0
    %1718 = vmatprep.subr.mxu0 0.0
    %1719 = vmatpush2.msra.mxu0 0.0
    %1720 = vmatprep.subr.mxu0 0.0
    %1721 = vmatpush2.msra.mxu0 0.0
    %1722 = vmatprep.subr.mxu0 0.0
    %1723 = vmatpush2.msra.mxu0 0.0
    %1724 = vmatprep.subr.mxu0 0.0
    %1725 = vmatpush2.msra.mxu0 0.0
    %1726 = vmatprep.subr.mxu0 0.0
    %1727 = vmatpush2.msra.mxu0 0.0
    %1728 = vmatprep.subr.mxu0 0.0
    %1729 = vmatpush2.msra.mxu0 0.0
    %1730 = vmatprep.subr.mxu0 0.0
    %1731 = vmatpush2.msra.mxu0 0.0
    %1732 = vmatprep.subr.mxu0 0.0
    %1733 = vmatpush2.msra.mxu0 0.0
    %1734 = vmatprep.subr.mxu0 0.0
    %1735 = vmatpush2.msra.mxu0 0.0
    %1736 = vmatprep.subr.mxu0 0.0
    %1737 = vmatpush2.msra.mxu0 0.0
    %1738 = vmatprep.subr.mxu0 0.0
    %1739 = vmatpush2.msra.mxu0 0.0
    %1740 = vmatprep.subr.mxu0 0.0
    %1741 = vmatpush2.msra.mxu0 0.0
    %1742 = vmatprep.subr.mxu0 0.0
    %1743 = vmatpush2.msra.mxu0 0.0
    %1744 = vmatprep.subr.mxu0 0.0
    %1745 = vmatpush2.msra.mxu0 0.0
    %1746 = vmatprep.mubr.f32.mxu0 0.0
    %1747 = vmatmul.mubr.f32.gmra.mxu0 %v1680
    %v1748 = vpop.f32.mrf.mxu0
    %v1749 = vadd.f32 %v1677, %v1748
    %v1750 = vpop.f32.mrf.mxu0
    %1751 = vdwg.mxu0
    %v1752 = vmul.f32 %v1749, 0.5
    %v1753 = vtanh.pop %v1752
    %v1754 = vadd.f32 %v1753, 1.0
    %v1755 = vmul.f32 %v1754, 0.5
    %1757 = vrot.lane.b32.xlu0 %v1749, 32
    %v1758 = vpop.permute.xlu0 %1757
    %v1760 = vmul.f32 %v1755, %v1758
    %1762 = vrot.lane.b32.xlu0 %v1760, 64
    %v1763 = vpop.permute.xlu0 %1762
    %v1765 = vadd.f32 %v1749, %v1763
    %v1766 = vtanh.pop %v1765
    %v1767 = vsub.f32 1.0, %v1755
    %1769 = vrot.lane.b32.xlu0 %v1766, 96
    %v1770 = vpop.permute.xlu0 %1769
    %v1772 = vmul.f32 %v1767, %v1770
    %v1773 = vmul.f32 %v1755, %v1430
    %v1774 = vadd.f32 %v1772, %v1773
    %1776 = vrot.lane.b32.xlu0 %v1774, 96
    %v1777 = vpop.permute.xlu0 %1776
    %1779 = vst.msk [vmem:[#allocation2 + $0x18] sm:$0xff] %vm227, %v1777
    %v1780 = vld [vmem:[%s9] sm:$0xff]
    %v1781 = vld [vmem:[%s9 + $0x8] sm:$0xff]
    %v1782 = vld [vmem:[%s9 + $0x10] sm:$0xff]
    %v1783 = vld [vmem:[%s9 + $0x18] sm:$0xff]
    %v1784 = vld [vmem:[#allocation17] sm:$0x1]
    %v1786 = vlaneseq
    %v1787 = vshrl.u32 %v1786, 7
    %v1788 = vsub.s32 0, %v1787
    %v1789 = vrot.slane %v1784, %v1788
    %v1791 = vsel %vm227, %v1545, 0
    %1793 = vmatprep.subr.mxu0 0.0
    %1794 = vmatpush1.msra.mxu0 0.0
    %1795 = vmatprep.subr.mxu0 0.0
    %1796 = vmatpush1.msra.mxu0 0.0
    %1797 = vmatprep.subr.mxu0 0.0
    %1798 = vmatpush1.msra.mxu0 0.0
    %1799 = vmatprep.subr.mxu0 0.0
    %1800 = vmatpush1.msra.mxu0 0.0
    %1801 = vmatprep.subr.mxu0 0.0
    %1802 = vmatpush1.msra.mxu0 0.0
    %1803 = vmatprep.subr.mxu0 0.0
    %1804 = vmatpush1.msra.mxu0 0.0
    %1805 = vmatprep.subr.mxu0 0.0
    %1806 = vmatpush1.msra.mxu0 0.0
    %1807 = vmatprep.subr.mxu0 0.0
    %1808 = vmatpush1.msra.mxu0 0.0
    %1809 = vmatprep.subr.mxu0 0.0
    %1810 = vmatpush1.msra.mxu0 0.0
    %1811 = vmatprep.subr.mxu0 0.0
    %1812 = vmatpush1.msra.mxu0 0.0
    %1813 = vmatprep.subr.mxu0 0.0
    %1814 = vmatpush1.msra.mxu0 0.0
    %1815 = vmatprep.subr.mxu0 0.0
    %1816 = vmatpush1.msra.mxu0 0.0
    %1817 = vmatprep.subr.mxu0 0.0
    %1818 = vmatpush1.msra.mxu0 %v1783
    %1819 = vmatprep.subr.mxu0 0.0
    %1820 = vmatpush1.msra.mxu0 %v1782
    %1821 = vmatprep.subr.mxu0 0.0
    %1822 = vmatpush1.msra.mxu0 %v1781
    %1823 = vmatprep.subr.mxu0 0.0
    %1824 = vmatpush1.msra.mxu0 %v1780
    %1825 = vmatprep.subr.mxu0 0.0
    %1826 = vmatpush2.msra.mxu0 0.0
    %1827 = vmatprep.subr.mxu0 0.0
    %1828 = vmatpush2.msra.mxu0 0.0
    %1829 = vmatprep.subr.mxu0 0.0
    %1830 = vmatpush2.msra.mxu0 0.0
    %1831 = vmatprep.subr.mxu0 0.0
    %1832 = vmatpush2.msra.mxu0 0.0
    %1833 = vmatprep.subr.mxu0 0.0
    %1834 = vmatpush2.msra.mxu0 0.0
    %1835 = vmatprep.subr.mxu0 0.0
    %1836 = vmatpush2.msra.mxu0 0.0
    %1837 = vmatprep.subr.mxu0 0.0
    %1838 = vmatpush2.msra.mxu0 0.0
    %1839 = vmatprep.subr.mxu0 0.0
    %1840 = vmatpush2.msra.mxu0 0.0
    %1841 = vmatprep.subr.mxu0 0.0
    %1842 = vmatpush2.msra.mxu0 0.0
    %1843 = vmatprep.subr.mxu0 0.0
    %1844 = vmatpush2.msra.mxu0 0.0
    %1845 = vmatprep.subr.mxu0 0.0
    %1846 = vmatpush2.msra.mxu0 0.0
    %1847 = vmatprep.subr.mxu0 0.0
    %1848 = vmatpush2.msra.mxu0 0.0
    %1849 = vmatprep.subr.mxu0 0.0
    %1850 = vmatpush2.msra.mxu0 0.0
    %1851 = vmatprep.subr.mxu0 0.0
    %1852 = vmatpush2.msra.mxu0 0.0
    %1853 = vmatprep.subr.mxu0 0.0
    %1854 = vmatpush2.msra.mxu0 0.0
    %1855 = vmatprep.subr.mxu0 0.0
    %1856 = vmatpush2.msra.mxu0 0.0
    %1857 = vmatprep.mubr.f32.mxu0 0.0
    %1858 = vmatmul.mubr.f32.gmra.mxu0 %v1791
    %v1859 = vpop.f32.mrf.mxu0
    %v1860 = vadd.f32 %v1789, %v1859
    %v1861 = vpop.f32.mrf.mxu0
    %1862 = vdwg.mxu0
    %v1863 = vadd.f32 %v383, %v1860
    %v1864 = vmul.f32 %v1863, 0.5
    %v1865 = vtanh.pop %v1864
    %v1866 = vadd.f32 %v1865, 1.0
    %v1867 = vmul.f32 %v1866, 0.5
    %1869 = vrot.lane.b32.xlu0 %v1860, 64
    %v1870 = vpop.permute.xlu0 %1869
    %v1872 = vmul.f32 %v1867, %v1870
    %1874 = vrot.lane.b32.xlu0 %v1872, 64
    %v1875 = vpop.permute.xlu0 %1874
    %v1877 = vadd.f32 %v383, %v1875
    %v1878 = vtanh.pop %v1877
    %v1879 = vsub.f32 1.0, %v1867
    %1881 = vrot.lane.b32.xlu0 %v1878, 96
    %v1882 = vpop.permute.xlu0 %1881
    %v1884 = vmul.f32 %v1879, %v1882
    %v1885 = vmul.f32 %v1867, %v1542
    %v1886 = vadd.f32 %v1884, %v1885
    %1888 = vrot.lane.b32.xlu0 %v1886, 96
    %v1889 = vpop.permute.xlu0 %1888
    %v1891 = vsel %vm227, %v1889, %v1658
    %v1892 = vld [vmem:[#allocation18] sm:$0xff]
    %v1893 = vld [vmem:[#allocation18 + $0x8] sm:$0xff]
    %v1894 = vld [vmem:[#allocation18 + $0x10] sm:$0xff]
    %v1895 = vld [vmem:[#allocation18 + $0x18] sm:$0xff]
    %v1896 = vld [vmem:[#allocation18 + $0x20] sm:$0xff]
    %v1897 = vld [vmem:[#allocation18 + $0x28] sm:$0xff]
    %v1898 = vld [vmem:[#allocation18 + $0x30] sm:$0xff]
    %v1899 = vld [vmem:[#allocation18 + $0x38] sm:$0xff]
    %v1900 = vld [vmem:[%s12] sm:$0x1]
    %v1902 = vlaneseq
    %v1903 = vshrl.u32 %v1902, 7
    %v1904 = vsub.s32 0, %v1903
    %v1905 = vrot.slane %v1900, %v1904
    %v1908 = vsel %vm524, %v1891, 0
    %1910 = vmatprep.subr.mxu0 0.0
    %1911 = vmatpush1.msra.mxu0 0.0
    %1912 = vmatprep.subr.mxu0 0.0
    %1913 = vmatpush1.msra.mxu0 0.0
    %1914 = vmatprep.subr.mxu0 0.0
    %1915 = vmatpush1.msra.mxu0 0.0
    %1916 = vmatprep.subr.mxu0 0.0
    %1917 = vmatpush1.msra.mxu0 0.0
    %1918 = vmatprep.subr.mxu0 0.0
    %1919 = vmatpush1.msra.mxu0 0.0
    %1920 = vmatprep.subr.mxu0 0.0
    %1921 = vmatpush1.msra.mxu0 0.0
    %1922 = vmatprep.subr.mxu0 0.0
    %1923 = vmatpush1.msra.mxu0 0.0
    %1924 = vmatprep.subr.mxu0 0.0
    %1925 = vmatpush1.msra.mxu0 0.0
    %1926 = vmatprep.subr.mxu0 0.0
    %1927 = vmatpush1.msra.mxu0 %v1899
    %1928 = vmatprep.subr.mxu0 0.0
    %1929 = vmatpush1.msra.mxu0 %v1898
    %1930 = vmatprep.subr.mxu0 0.0
    %1931 = vmatpush1.msra.mxu0 %v1897
    %1932 = vmatprep.subr.mxu0 0.0
    %1933 = vmatpush1.msra.mxu0 %v1896
    %1934 = vmatprep.subr.mxu0 0.0
    %1935 = vmatpush1.msra.mxu0 %v1895
    %1936 = vmatprep.subr.mxu0 0.0
    %1937 = vmatpush1.msra.mxu0 %v1894
    %1938 = vmatprep.subr.mxu0 0.0
    %1939 = vmatpush1.msra.mxu0 %v1893
    %1940 = vmatprep.subr.mxu0 0.0
    %1941 = vmatpush1.msra.mxu0 %v1892
    %1942 = vmatprep.subr.mxu0 0.0
    %1943 = vmatpush2.msra.mxu0 0.0
    %1944 = vmatprep.subr.mxu0 0.0
    %1945 = vmatpush2.msra.mxu0 0.0
    %1946 = vmatprep.subr.mxu0 0.0
    %1947 = vmatpush2.msra.mxu0 0.0
    %1948 = vmatprep.subr.mxu0 0.0
    %1949 = vmatpush2.msra.mxu0 0.0
    %1950 = vmatprep.subr.mxu0 0.0
    %1951 = vmatpush2.msra.mxu0 0.0
    %1952 = vmatprep.subr.mxu0 0.0
    %1953 = vmatpush2.msra.mxu0 0.0
    %1954 = vmatprep.subr.mxu0 0.0
    %1955 = vmatpush2.msra.mxu0 0.0
    %1956 = vmatprep.subr.mxu0 0.0
    %1957 = vmatpush2.msra.mxu0 0.0
    %1958 = vmatprep.subr.mxu0 0.0
    %1959 = vmatpush2.msra.mxu0 0.0
    %1960 = vmatprep.subr.mxu0 0.0
    %1961 = vmatpush2.msra.mxu0 0.0
    %1962 = vmatprep.subr.mxu0 0.0
    %1963 = vmatpush2.msra.mxu0 0.0
    %1964 = vmatprep.subr.mxu0 0.0
    %1965 = vmatpush2.msra.mxu0 0.0
    %1966 = vmatprep.subr.mxu0 0.0
    %1967 = vmatpush2.msra.mxu0 0.0
    %1968 = vmatprep.subr.mxu0 0.0
    %1969 = vmatpush2.msra.mxu0 0.0
    %1970 = vmatprep.subr.mxu0 0.0
    %1971 = vmatpush2.msra.mxu0 0.0
    %1972 = vmatprep.subr.mxu0 0.0
    %1973 = vmatpush2.msra.mxu0 0.0
    %1974 = vmatprep.mubr.f32.mxu0 0.0
    %1975 = vmatmul.mubr.f32.gmra.mxu0 %v1908
    %v1976 = vpop.f32.mrf.mxu0
    %v1977 = vadd.f32 %v1905, %v1976
    %v1978 = vpop.f32.mrf.mxu0
    %1979 = vdwg.mxu0
    %v1980 = vmul.f32 %v1977, 0.5
    %v1981 = vtanh.pop %v1980
    %v1982 = vadd.f32 %v1981, 1.0
    %v1983 = vmul.f32 %v1982, 0.5
    %1985 = vrot.lane.b32.xlu0 %v1977, 32
    %v1986 = vpop.permute.xlu0 %1985
    %v1988 = vmul.f32 %v1983, %v1986
    %1990 = vrot.lane.b32.xlu0 %v1988, 64
    %v1991 = vpop.permute.xlu0 %1990
    %v1993 = vadd.f32 %v1977, %v1991
    %v1994 = vtanh.pop %v1993
    %v1995 = vsub.f32 1.0, %v1983
    %1997 = vrot.lane.b32.xlu0 %v1994, 96
    %v1998 = vpop.permute.xlu0 %1997
    %v2000 = vmul.f32 %v1995, %v1998
    %v2001 = vmul.f32 %v1983, %v1658
    %v2002 = vadd.f32 %v2000, %v2001
    %2004 = vrot.lane.b32.xlu0 %v2002, 96
    %v2005 = vpop.permute.xlu0 %2004
    %v2007 = vsel %vm227, %v2005, %v1774
    %v2008 = vld [vmem:[%s630] sm:$0xff]
    %v2009 = vld [vmem:[%s630 + $0x8] sm:$0xff]
    %v2010 = vld [vmem:[%s630 + $0x10] sm:$0xff]
    %v2011 = vld [vmem:[%s630 + $0x18] sm:$0xff]
    %v2012 = vld [vmem:[%s630 + $0x20] sm:$0xff]
    %v2013 = vld [vmem:[%s630 + $0x28] sm:$0xff]
    %v2014 = vld [vmem:[%s630 + $0x30] sm:$0xff]
    %v2015 = vld [vmem:[%s630 + $0x38] sm:$0xff]
    %v2016 = vld [vmem:[%s639] sm:$0x1]
    %v2018 = vlaneseq
    %v2019 = vshrl.u32 %v2018, 7
    %v2020 = vsub.s32 0, %v2019
    %v2021 = vrot.slane %v2016, %v2020
    %v2024 = vsel %vm524, %v2007, 0
    %2026 = vmatprep.subr.mxu0 0.0
    %2027 = vmatpush1.msra.mxu0 0.0
    %2028 = vmatprep.subr.mxu0 0.0
    %2029 = vmatpush1.msra.mxu0 0.0
    %2030 = vmatprep.subr.mxu0 0.0
    %2031 = vmatpush1.msra.mxu0 0.0
    %2032 = vmatprep.subr.mxu0 0.0
    %2033 = vmatpush1.msra.mxu0 0.0
    %2034 = vmatprep.subr.mxu0 0.0
    %2035 = vmatpush1.msra.mxu0 0.0
    %2036 = vmatprep.subr.mxu0 0.0
    %2037 = vmatpush1.msra.mxu0 0.0
    %2038 = vmatprep.subr.mxu0 0.0
    %2039 = vmatpush1.msra.mxu0 0.0
    %2040 = vmatprep.subr.mxu0 0.0
    %2041 = vmatpush1.msra.mxu0 0.0
    %2042 = vmatprep.subr.mxu0 0.0
    %2043 = vmatpush1.msra.mxu0 %v2015
    %2044 = vmatprep.subr.mxu0 0.0
    %2045 = vmatpush1.msra.mxu0 %v2014
    %2046 = vmatprep.subr.mxu0 0.0
    %2047 = vmatpush1.msra.mxu0 %v2013
    %2048 = vmatprep.subr.mxu0 0.0
    %2049 = vmatpush1.msra.mxu0 %v2012
    %2050 = vmatprep.subr.mxu0 0.0
    %2051 = vmatpush1.msra.mxu0 %v2011
    %2052 = vmatprep.subr.mxu0 0.0
    %2053 = vmatpush1.msra.mxu0 %v2010
    %2054 = vmatprep.subr.mxu0 0.0
    %2055 = vmatpush1.msra.mxu0 %v2009
    %2056 = vmatprep.subr.mxu0 0.0
    %2057 = vmatpush1.msra.mxu0 %v2008
    %2058 = vmatprep.subr.mxu0 0.0
    %2059 = vmatpush2.msra.mxu0 0.0
    %2060 = vmatprep.subr.mxu0 0.0
    %2061 = vmatpush2.msra.mxu0 0.0
    %2062 = vmatprep.subr.mxu0 0.0
    %2063 = vmatpush2.msra.mxu0 0.0
    %2064 = vmatprep.subr.mxu0 0.0
    %2065 = vmatpush2.msra.mxu0 0.0
    %2066 = vmatprep.subr.mxu0 0.0
    %2067 = vmatpush2.msra.mxu0 0.0
    %2068 = vmatprep.subr.mxu0 0.0
    %2069 = vmatpush2.msra.mxu0 0.0
    %2070 = vmatprep.subr.mxu0 0.0
    %2071 = vmatpush2.msra.mxu0 0.0
    %2072 = vmatprep.subr.mxu0 0.0
    %2073 = vmatpush2.msra.mxu0 0.0
    %2074 = vmatprep.subr.mxu0 0.0
    %2075 = vmatpush2.msra.mxu0 0.0
    %2076 = vmatprep.subr.mxu0 0.0
    %2077 = vmatpush2.msra.mxu0 0.0
    %2078 = vmatprep.subr.mxu0 0.0
    %2079 = vmatpush2.msra.mxu0 0.0
    %2080 = vmatprep.subr.mxu0 0.0
    %2081 = vmatpush2.msra.mxu0 0.0
    %2082 = vmatprep.subr.mxu0 0.0
    %2083 = vmatpush2.msra.mxu0 0.0
    %2084 = vmatprep.subr.mxu0 0.0
    %2085 = vmatpush2.msra.mxu0 0.0
    %2086 = vmatprep.subr.mxu0 0.0
    %2087 = vmatpush2.msra.mxu0 0.0
    %2088 = vmatprep.subr.mxu0 0.0
    %2089 = vmatpush2.msra.mxu0 0.0
    %2090 = vmatprep.mubr.f32.mxu0 0.0
    %2091 = vmatmul.mubr.f32.gmra.mxu0 %v2024
    %v2092 = vpop.f32.mrf.mxu0
    %v2093 = vadd.f32 %v2021, %v2092
    %v2094 = vpop.f32.mrf.mxu0
    %2095 = vdwg.mxu0
    %v2096 = vmul.f32 %v2093, 0.5
    %v2097 = vtanh.pop %v2096
    %v2098 = vadd.f32 %v2097, 1.0
    %v2099 = vmul.f32 %v2098, 0.5
    %2101 = vrot.lane.b32.xlu0 %v2093, 32
    %v2102 = vpop.permute.xlu0 %2101
    %v2104 = vmul.f32 %v2099, %v2102
    %2106 = vrot.lane.b32.xlu0 %v2104, 64
    %v2107 = vpop.permute.xlu0 %2106
    %v2109 = vadd.f32 %v2093, %v2107
    %v2110 = vtanh.pop %v2109
    %v2111 = vsub.f32 1.0, %v2099
    %2113 = vrot.lane.b32.xlu0 %v2110, 96
    %v2114 = vpop.permute.xlu0 %2113
    %v2116 = vmul.f32 %v2111, %v2114
    %v2117 = vmul.f32 %v2099, %v1774
    %v2118 = vadd.f32 %v2116, %v2117
    %2120 = vrot.lane.b32.xlu0 %v2118, 96
    %v2121 = vpop.permute.xlu0 %2120
    %2123 = vst.msk [vmem:[#allocation2 + $0x20] sm:$0xff] %vm227, %v2121
    %v2124 = vld [vmem:[%s9] sm:$0xff]
    %v2125 = vld [vmem:[%s9 + $0x8] sm:$0xff]
    %v2126 = vld [vmem:[%s9 + $0x10] sm:$0xff]
    %v2127 = vld [vmem:[%s9 + $0x18] sm:$0xff]
    %v2128 = vld [vmem:[#allocation17] sm:$0x1]
    %v2130 = vlaneseq
    %v2131 = vshrl.u32 %v2130, 7
    %v2132 = vsub.s32 0, %v2131
    %v2133 = vrot.slane %v2128, %v2132
    %v2135 = vsel %vm227, %v1889, 0
    %2137 = vmatprep.subr.mxu0 0.0
    %2138 = vmatpush1.msra.mxu0 0.0
    %2139 = vmatprep.subr.mxu0 0.0
    %2140 = vmatpush1.msra.mxu0 0.0
    %2141 = vmatprep.subr.mxu0 0.0
    %2142 = vmatpush1.msra.mxu0 0.0
    %2143 = vmatprep.subr.mxu0 0.0
    %2144 = vmatpush1.msra.mxu0 0.0
    %2145 = vmatprep.subr.mxu0 0.0
    %2146 = vmatpush1.msra.mxu0 0.0
    %2147 = vmatprep.subr.mxu0 0.0
    %2148 = vmatpush1.msra.mxu0 0.0
    %2149 = vmatprep.subr.mxu0 0.0
    %2150 = vmatpush1.msra.mxu0 0.0
    %2151 = vmatprep.subr.mxu0 0.0
    %2152 = vmatpush1.msra.mxu0 0.0
    %2153 = vmatprep.subr.mxu0 0.0
    %2154 = vmatpush1.msra.mxu0 0.0
    %2155 = vmatprep.subr.mxu0 0.0
    %2156 = vmatpush1.msra.mxu0 0.0
    %2157 = vmatprep.subr.mxu0 0.0
    %2158 = vmatpush1.msra.mxu0 0.0
    %2159 = vmatprep.subr.mxu0 0.0
    %2160 = vmatpush1.msra.mxu0 0.0
    %2161 = vmatprep.subr.mxu0 0.0
    %2162 = vmatpush1.msra.mxu0 %v2127
    %2163 = vmatprep.subr.mxu0 0.0
    %2164 = vmatpush1.msra.mxu0 %v2126
    %2165 = vmatprep.subr.mxu0 0.0
    %2166 = vmatpush1.msra.mxu0 %v2125
    %2167 = vmatprep.subr.mxu0 0.0
    %2168 = vmatpush1.msra.mxu0 %v2124
    %2169 = vmatprep.subr.mxu0 0.0
    %2170 = vmatpush2.msra.mxu0 0.0
    %2171 = vmatprep.subr.mxu0 0.0
    %2172 = vmatpush2.msra.mxu0 0.0
    %2173 = vmatprep.subr.mxu0 0.0
    %2174 = vmatpush2.msra.mxu0 0.0
    %2175 = vmatprep.subr.mxu0 0.0
    %2176 = vmatpush2.msra.mxu0 0.0
    %2177 = vmatprep.subr.mxu0 0.0
    %2178 = vmatpush2.msra.mxu0 0.0
    %2179 = vmatprep.subr.mxu0 0.0
    %2180 = vmatpush2.msra.mxu0 0.0
    %2181 = vmatprep.subr.mxu0 0.0
    %2182 = vmatpush2.msra.mxu0 0.0
    %2183 = vmatprep.subr.mxu0 0.0
    %2184 = vmatpush2.msra.mxu0 0.0
    %2185 = vmatprep.subr.mxu0 0.0
    %2186 = vmatpush2.msra.mxu0 0.0
    %2187 = vmatprep.subr.mxu0 0.0
    %2188 = vmatpush2.msra.mxu0 0.0
    %2189 = vmatprep.subr.mxu0 0.0
    %2190 = vmatpush2.msra.mxu0 0.0
    %2191 = vmatprep.subr.mxu0 0.0
    %2192 = vmatpush2.msra.mxu0 0.0
    %2193 = vmatprep.subr.mxu0 0.0
    %2194 = vmatpush2.msra.mxu0 0.0
    %2195 = vmatprep.subr.mxu0 0.0
    %2196 = vmatpush2.msra.mxu0 0.0
    %2197 = vmatprep.subr.mxu0 0.0
    %2198 = vmatpush2.msra.mxu0 0.0
    %2199 = vmatprep.subr.mxu0 0.0
    %2200 = vmatpush2.msra.mxu0 0.0
    %2201 = vmatprep.mubr.f32.mxu0 0.0
    %2202 = vmatmul.mubr.f32.gmra.mxu0 %v2135
    %v2203 = vpop.f32.mrf.mxu0
    %v2204 = vadd.f32 %v2133, %v2203
    %v2205 = vpop.f32.mrf.mxu0
    %2206 = vdwg.mxu0
    %v2207 = vadd.f32 %v383, %v2204
    %v2208 = vmul.f32 %v2207, 0.5
    %v2209 = vtanh.pop %v2208
    %v2210 = vadd.f32 %v2209, 1.0
    %v2211 = vmul.f32 %v2210, 0.5
    %2213 = vrot.lane.b32.xlu0 %v2204, 64
    %v2214 = vpop.permute.xlu0 %2213
    %v2216 = vmul.f32 %v2211, %v2214
    %2218 = vrot.lane.b32.xlu0 %v2216, 64
    %v2219 = vpop.permute.xlu0 %2218
    %v2221 = vadd.f32 %v383, %v2219
    %v2222 = vtanh.pop %v2221
    %v2223 = vsub.f32 1.0, %v2211
    %2225 = vrot.lane.b32.xlu0 %v2222, 96
    %v2226 = vpop.permute.xlu0 %2225
    %v2228 = vmul.f32 %v2223, %v2226
    %v2229 = vmul.f32 %v2211, %v1886
    %v2230 = vadd.f32 %v2228, %v2229
    %2232 = vrot.lane.b32.xlu0 %v2230, 96
    %v2233 = vpop.permute.xlu0 %2232
    %v2235 = vsel %vm227, %v2233, %v2002
    %v2236 = vld [vmem:[#allocation18] sm:$0xff]
    %v2237 = vld [vmem:[#allocation18 + $0x8] sm:$0xff]
    %v2238 = vld [vmem:[#allocation18 + $0x10] sm:$0xff]
    %v2239 = vld [vmem:[#allocation18 + $0x18] sm:$0xff]
    %v2240 = vld [vmem:[#allocation18 + $0x20] sm:$0xff]
    %v2241 = vld [vmem:[#allocation18 + $0x28] sm:$0xff]
    %v2242 = vld [vmem:[#allocation18 + $0x30] sm:$0xff]
    %v2243 = vld [vmem:[#allocation18 + $0x38] sm:$0xff]
    %v2244 = vld [vmem:[%s12] sm:$0x1]
    %v2246 = vlaneseq
    %v2247 = vshrl.u32 %v2246, 7
    %v2248 = vsub.s32 0, %v2247
    %v2249 = vrot.slane %v2244, %v2248
    %v2252 = vsel %vm524, %v2235, 0
    %2254 = vmatprep.subr.mxu0 0.0
    %2255 = vmatpush1.msra.mxu0 0.0
    %2256 = vmatprep.subr.mxu0 0.0
    %2257 = vmatpush1.msra.mxu0 0.0
    %2258 = vmatprep.subr.mxu0 0.0
    %2259 = vmatpush1.msra.mxu0 0.0
    %2260 = vmatprep.subr.mxu0 0.0
    %2261 = vmatpush1.msra.mxu0 0.0
    %2262 = vmatprep.subr.mxu0 0.0
    %2263 = vmatpush1.msra.mxu0 0.0
    %2264 = vmatprep.subr.mxu0 0.0
    %2265 = vmatpush1.msra.mxu0 0.0
    %2266 = vmatprep.subr.mxu0 0.0
    %2267 = vmatpush1.msra.mxu0 0.0
    %2268 = vmatprep.subr.mxu0 0.0
    %2269 = vmatpush1.msra.mxu0 0.0
    %2270 = vmatprep.subr.mxu0 0.0
    %2271 = vmatpush1.msra.mxu0 %v2243
    %2272 = vmatprep.subr.mxu0 0.0
    %2273 = vmatpush1.msra.mxu0 %v2242
    %2274 = vmatprep.subr.mxu0 0.0
    %2275 = vmatpush1.msra.mxu0 %v2241
    %2276 = vmatprep.subr.mxu0 0.0
    %2277 = vmatpush1.msra.mxu0 %v2240
    %2278 = vmatprep.subr.mxu0 0.0
    %2279 = vmatpush1.msra.mxu0 %v2239
    %2280 = vmatprep.subr.mxu0 0.0
    %2281 = vmatpush1.msra.mxu0 %v2238
    %2282 = vmatprep.subr.mxu0 0.0
    %2283 = vmatpush1.msra.mxu0 %v2237
    %2284 = vmatprep.subr.mxu0 0.0
    %2285 = vmatpush1.msra.mxu0 %v2236
    %2286 = vmatprep.subr.mxu0 0.0
    %2287 = vmatpush2.msra.mxu0 0.0
    %2288 = vmatprep.subr.mxu0 0.0
    %2289 = vmatpush2.msra.mxu0 0.0
    %2290 = vmatprep.subr.mxu0 0.0
    %2291 = vmatpush2.msra.mxu0 0.0
    %2292 = vmatprep.subr.mxu0 0.0
    %2293 = vmatpush2.msra.mxu0 0.0
    %2294 = vmatprep.subr.mxu0 0.0
    %2295 = vmatpush2.msra.mxu0 0.0
    %2296 = vmatprep.subr.mxu0 0.0
    %2297 = vmatpush2.msra.mxu0 0.0
    %2298 = vmatprep.subr.mxu0 0.0
    %2299 = vmatpush2.msra.mxu0 0.0
    %2300 = vmatprep.subr.mxu0 0.0
    %2301 = vmatpush2.msra.mxu0 0.0
    %2302 = vmatprep.subr.mxu0 0.0
    %2303 = vmatpush2.msra.mxu0 0.0
    %2304 = vmatprep.subr.mxu0 0.0
    %2305 = vmatpush2.msra.mxu0 0.0
    %2306 = vmatprep.subr.mxu0 0.0
    %2307 = vmatpush2.msra.mxu0 0.0
    %2308 = vmatprep.subr.mxu0 0.0
    %2309 = vmatpush2.msra.mxu0 0.0
    %2310 = vmatprep.subr.mxu0 0.0
    %2311 = vmatpush2.msra.mxu0 0.0
    %2312 = vmatprep.subr.mxu0 0.0
    %2313 = vmatpush2.msra.mxu0 0.0
    %2314 = vmatprep.subr.mxu0 0.0
    %2315 = vmatpush2.msra.mxu0 0.0
    %2316 = vmatprep.subr.mxu0 0.0
    %2317 = vmatpush2.msra.mxu0 0.0
    %2318 = vmatprep.mubr.f32.mxu0 0.0
    %2319 = vmatmul.mubr.f32.gmra.mxu0 %v2252
    %v2320 = vpop.f32.mrf.mxu0
    %v2321 = vadd.f32 %v2249, %v2320
    %v2322 = vpop.f32.mrf.mxu0
    %2323 = vdwg.mxu0
    %v2324 = vmul.f32 %v2321, 0.5
    %v2325 = vtanh.pop %v2324
    %v2326 = vadd.f32 %v2325, 1.0
    %v2327 = vmul.f32 %v2326, 0.5
    %2329 = vrot.lane.b32.xlu0 %v2321, 32
    %v2330 = vpop.permute.xlu0 %2329
    %v2332 = vmul.f32 %v2327, %v2330
    %2334 = vrot.lane.b32.xlu0 %v2332, 64
    %v2335 = vpop.permute.xlu0 %2334
    %v2337 = vadd.f32 %v2321, %v2335
    %v2338 = vtanh.pop %v2337
    %v2339 = vsub.f32 1.0, %v2327
    %2341 = vrot.lane.b32.xlu0 %v2338, 96
    %v2342 = vpop.permute.xlu0 %2341
    %v2344 = vmul.f32 %v2339, %v2342
    %v2345 = vmul.f32 %v2327, %v2002
    %v2346 = vadd.f32 %v2344, %v2345
    %2348 = vrot.lane.b32.xlu0 %v2346, 96
    %v2349 = vpop.permute.xlu0 %2348
    %v2351 = vsel %vm227, %v2349, %v2118
    %v2352 = vld [vmem:[%s630] sm:$0xff]
    %v2353 = vld [vmem:[%s630 + $0x8] sm:$0xff]
    %v2354 = vld [vmem:[%s630 + $0x10] sm:$0xff]
    %v2355 = vld [vmem:[%s630 + $0x18] sm:$0xff]
    %v2356 = vld [vmem:[%s630 + $0x20] sm:$0xff]
    %v2357 = vld [vmem:[%s630 + $0x28] sm:$0xff]
    %v2358 = vld [vmem:[%s630 + $0x30] sm:$0xff]
    %v2359 = vld [vmem:[%s630 + $0x38] sm:$0xff]
    %v2360 = vld [vmem:[%s639] sm:$0x1]
    %v2362 = vlaneseq
    %v2363 = vshrl.u32 %v2362, 7
    %v2364 = vsub.s32 0, %v2363
    %v2365 = vrot.slane %v2360, %v2364
    %v2368 = vsel %vm524, %v2351, 0
    %2370 = vmatprep.subr.mxu0 0.0
    %2371 = vmatpush1.msra.mxu0 0.0
    %2372 = vmatprep.subr.mxu0 0.0
    %2373 = vmatpush1.msra.mxu0 0.0
    %2374 = vmatprep.subr.mxu0 0.0
    %2375 = vmatpush1.msra.mxu0 0.0
    %2376 = vmatprep.subr.mxu0 0.0
    %2377 = vmatpush1.msra.mxu0 0.0
    %2378 = vmatprep.subr.mxu0 0.0
    %2379 = vmatpush1.msra.mxu0 0.0
    %2380 = vmatprep.subr.mxu0 0.0
    %2381 = vmatpush1.msra.mxu0 0.0
    %2382 = vmatprep.subr.mxu0 0.0
    %2383 = vmatpush1.msra.mxu0 0.0
    %2384 = vmatprep.subr.mxu0 0.0
    %2385 = vmatpush1.msra.mxu0 0.0
    %2386 = vmatprep.subr.mxu0 0.0
    %2387 = vmatpush1.msra.mxu0 %v2359
    %2388 = vmatprep.subr.mxu0 0.0
    %2389 = vmatpush1.msra.mxu0 %v2358
    %2390 = vmatprep.subr.mxu0 0.0
    %2391 = vmatpush1.msra.mxu0 %v2357
    %2392 = vmatprep.subr.mxu0 0.0
    %2393 = vmatpush1.msra.mxu0 %v2356
    %2394 = vmatprep.subr.mxu0 0.0
    %2395 = vmatpush1.msra.mxu0 %v2355
    %2396 = vmatprep.subr.mxu0 0.0
    %2397 = vmatpush1.msra.mxu0 %v2354
    %2398 = vmatprep.subr.mxu0 0.0
    %2399 = vmatpush1.msra.mxu0 %v2353
    %2400 = vmatprep.subr.mxu0 0.0
    %2401 = vmatpush1.msra.mxu0 %v2352
    %2402 = vmatprep.subr.mxu0 0.0
    %2403 = vmatpush2.msra.mxu0 0.0
    %2404 = vmatprep.subr.mxu0 0.0
    %2405 = vmatpush2.msra.mxu0 0.0
    %2406 = vmatprep.subr.mxu0 0.0
    %2407 = vmatpush2.msra.mxu0 0.0
    %2408 = vmatprep.subr.mxu0 0.0
    %2409 = vmatpush2.msra.mxu0 0.0
    %2410 = vmatprep.subr.mxu0 0.0
    %2411 = vmatpush2.msra.mxu0 0.0
    %2412 = vmatprep.subr.mxu0 0.0
    %2413 = vmatpush2.msra.mxu0 0.0
    %2414 = vmatprep.subr.mxu0 0.0
    %2415 = vmatpush2.msra.mxu0 0.0
    %2416 = vmatprep.subr.mxu0 0.0
    %2417 = vmatpush2.msra.mxu0 0.0
    %2418 = vmatprep.subr.mxu0 0.0
    %2419 = vmatpush2.msra.mxu0 0.0
    %2420 = vmatprep.subr.mxu0 0.0
    %2421 = vmatpush2.msra.mxu0 0.0
    %2422 = vmatprep.subr.mxu0 0.0
    %2423 = vmatpush2.msra.mxu0 0.0
    %2424 = vmatprep.subr.mxu0 0.0
    %2425 = vmatpush2.msra.mxu0 0.0
    %2426 = vmatprep.subr.mxu0 0.0
    %2427 = vmatpush2.msra.mxu0 0.0
    %2428 = vmatprep.subr.mxu0 0.0
    %2429 = vmatpush2.msra.mxu0 0.0
    %2430 = vmatprep.subr.mxu0 0.0
    %2431 = vmatpush2.msra.mxu0 0.0
    %2432 = vmatprep.subr.mxu0 0.0
    %2433 = vmatpush2.msra.mxu0 0.0
    %2434 = vmatprep.mubr.f32.mxu0 0.0
    %2435 = vmatmul.mubr.f32.gmra.mxu0 %v2368
    %v2436 = vpop.f32.mrf.mxu0
    %v2437 = vadd.f32 %v2365, %v2436
    %v2438 = vpop.f32.mrf.mxu0
    %2439 = vdwg.mxu0
    %v2440 = vmul.f32 %v2437, 0.5
    %v2441 = vtanh.pop %v2440
    %v2442 = vadd.f32 %v2441, 1.0
    %v2443 = vmul.f32 %v2442, 0.5
    %2445 = vrot.lane.b32.xlu0 %v2437, 32
    %v2446 = vpop.permute.xlu0 %2445
    %v2448 = vmul.f32 %v2443, %v2446
    %2450 = vrot.lane.b32.xlu0 %v2448, 64
    %v2451 = vpop.permute.xlu0 %2450
    %v2453 = vadd.f32 %v2437, %v2451
    %v2454 = vtanh.pop %v2453
    %v2455 = vsub.f32 1.0, %v2443
    %2457 = vrot.lane.b32.xlu0 %v2454, 96
    %v2458 = vpop.permute.xlu0 %2457
    %v2460 = vmul.f32 %v2455, %v2458
    %v2461 = vmul.f32 %v2443, %v2118
    %v2462 = vadd.f32 %v2460, %v2461
    %2464 = vrot.lane.b32.xlu0 %v2462, 96
    %v2465 = vpop.permute.xlu0 %2464
    %2467 = vst.msk [vmem:[#allocation2 + $0x28] sm:$0xff] %vm227, %v2465
    %v2468 = vld [vmem:[%s9] sm:$0xff]
    %v2469 = vld [vmem:[%s9 + $0x8] sm:$0xff]
    %v2470 = vld [vmem:[%s9 + $0x10] sm:$0xff]
    %v2471 = vld [vmem:[%s9 + $0x18] sm:$0xff]
    %v2472 = vld [vmem:[#allocation17] sm:$0x1]
    %v2474 = vlaneseq
    %v2475 = vshrl.u32 %v2474, 7
    %v2476 = vsub.s32 0, %v2475
    %v2477 = vrot.slane %v2472, %v2476
    %v2479 = vsel %vm227, %v2233, 0
    %2481 = vmatprep.subr.mxu0 0.0
    %2482 = vmatpush1.msra.mxu0 0.0
    %2483 = vmatprep.subr.mxu0 0.0
    %2484 = vmatpush1.msra.mxu0 0.0
    %2485 = vmatprep.subr.mxu0 0.0
    %2486 = vmatpush1.msra.mxu0 0.0
    %2487 = vmatprep.subr.mxu0 0.0
    %2488 = vmatpush1.msra.mxu0 0.0
    %2489 = vmatprep.subr.mxu0 0.0
    %2490 = vmatpush1.msra.mxu0 0.0
    %2491 = vmatprep.subr.mxu0 0.0
    %2492 = vmatpush1.msra.mxu0 0.0
    %2493 = vmatprep.subr.mxu0 0.0
    %2494 = vmatpush1.msra.mxu0 0.0
    %2495 = vmatprep.subr.mxu0 0.0
    %2496 = vmatpush1.msra.mxu0 0.0
    %2497 = vmatprep.subr.mxu0 0.0
    %2498 = vmatpush1.msra.mxu0 0.0
    %2499 = vmatprep.subr.mxu0 0.0
    %2500 = vmatpush1.msra.mxu0 0.0
    %2501 = vmatprep.subr.mxu0 0.0
    %2502 = vmatpush1.msra.mxu0 0.0
    %2503 = vmatprep.subr.mxu0 0.0
    %2504 = vmatpush1.msra.mxu0 0.0
    %2505 = vmatprep.subr.mxu0 0.0
    %2506 = vmatpush1.msra.mxu0 %v2471
    %2507 = vmatprep.subr.mxu0 0.0
    %2508 = vmatpush1.msra.mxu0 %v2470
    %2509 = vmatprep.subr.mxu0 0.0
    %2510 = vmatpush1.msra.mxu0 %v2469
    %2511 = vmatprep.subr.mxu0 0.0
    %2512 = vmatpush1.msra.mxu0 %v2468
    %2513 = vmatprep.subr.mxu0 0.0
    %2514 = vmatpush2.msra.mxu0 0.0
    %2515 = vmatprep.subr.mxu0 0.0
    %2516 = vmatpush2.msra.mxu0 0.0
    %2517 = vmatprep.subr.mxu0 0.0
    %2518 = vmatpush2.msra.mxu0 0.0
    %2519 = vmatprep.subr.mxu0 0.0
    %2520 = vmatpush2.msra.mxu0 0.0
    %2521 = vmatprep.subr.mxu0 0.0
    %2522 = vmatpush2.msra.mxu0 0.0
    %2523 = vmatprep.subr.mxu0 0.0
    %2524 = vmatpush2.msra.mxu0 0.0
    %2525 = vmatprep.subr.mxu0 0.0
    %2526 = vmatpush2.msra.mxu0 0.0
    %2527 = vmatprep.subr.mxu0 0.0
    %2528 = vmatpush2.msra.mxu0 0.0
    %2529 = vmatprep.subr.mxu0 0.0
    %2530 = vmatpush2.msra.mxu0 0.0
    %2531 = vmatprep.subr.mxu0 0.0
    %2532 = vmatpush2.msra.mxu0 0.0
    %2533 = vmatprep.subr.mxu0 0.0
    %2534 = vmatpush2.msra.mxu0 0.0
    %2535 = vmatprep.subr.mxu0 0.0
    %2536 = vmatpush2.msra.mxu0 0.0
    %2537 = vmatprep.subr.mxu0 0.0
    %2538 = vmatpush2.msra.mxu0 0.0
    %2539 = vmatprep.subr.mxu0 0.0
    %2540 = vmatpush2.msra.mxu0 0.0
    %2541 = vmatprep.subr.mxu0 0.0
    %2542 = vmatpush2.msra.mxu0 0.0
    %2543 = vmatprep.subr.mxu0 0.0
    %2544 = vmatpush2.msra.mxu0 0.0
    %2545 = vmatprep.mubr.f32.mxu0 0.0
    %2546 = vmatmul.mubr.f32.gmra.mxu0 %v2479
    %v2547 = vpop.f32.mrf.mxu0
    %v2548 = vadd.f32 %v2477, %v2547
    %v2549 = vpop.f32.mrf.mxu0
    %2550 = vdwg.mxu0
    %v2551 = vadd.f32 %v383, %v2548
    %v2552 = vmul.f32 %v2551, 0.5
    %v2553 = vtanh.pop %v2552
    %v2554 = vadd.f32 %v2553, 1.0
    %v2555 = vmul.f32 %v2554, 0.5
    %2557 = vrot.lane.b32.xlu0 %v2548, 64
    %v2558 = vpop.permute.xlu0 %2557
    %v2560 = vmul.f32 %v2555, %v2558
    %2562 = vrot.lane.b32.xlu0 %v2560, 64
    %v2563 = vpop.permute.xlu0 %2562
    %v2565 = vadd.f32 %v383, %v2563
    %v2566 = vtanh.pop %v2565
    %v2567 = vsub.f32 1.0, %v2555
    %2569 = vrot.lane.b32.xlu0 %v2566, 96
    %v2570 = vpop.permute.xlu0 %2569
    %v2572 = vmul.f32 %v2567, %v2570
    %v2573 = vmul.f32 %v2555, %v2230
    %v2574 = vadd.f32 %v2572, %v2573
    %2576 = vrot.lane.b32.xlu0 %v2574, 96
    %v2577 = vpop.permute.xlu0 %2576
    %v2579 = vsel %vm227, %v2577, %v2346
    %v2580 = vld [vmem:[#allocation18] sm:$0xff]
    %v2581 = vld [vmem:[#allocation18 + $0x8] sm:$0xff]
    %v2582 = vld [vmem:[#allocation18 + $0x10] sm:$0xff]
    %v2583 = vld [vmem:[#allocation18 + $0x18] sm:$0xff]
    %v2584 = vld [vmem:[#allocation18 + $0x20] sm:$0xff]
    %v2585 = vld [vmem:[#allocation18 + $0x28] sm:$0xff]
    %v2586 = vld [vmem:[#allocation18 + $0x30] sm:$0xff]
    %v2587 = vld [vmem:[#allocation18 + $0x38] sm:$0xff]
    %v2588 = vld [vmem:[%s12] sm:$0x1]
    %v2590 = vlaneseq
    %v2591 = vshrl.u32 %v2590, 7
    %v2592 = vsub.s32 0, %v2591
    %v2593 = vrot.slane %v2588, %v2592
    %v2596 = vsel %vm524, %v2579, 0
    %2598 = vmatprep.subr.mxu0 0.0
    %2599 = vmatpush1.msra.mxu0 0.0
    %2600 = vmatprep.subr.mxu0 0.0
    %2601 = vmatpush1.msra.mxu0 0.0
    %2602 = vmatprep.subr.mxu0 0.0
    %2603 = vmatpush1.msra.mxu0 0.0
    %2604 = vmatprep.subr.mxu0 0.0
    %2605 = vmatpush1.msra.mxu0 0.0
    %2606 = vmatprep.subr.mxu0 0.0
    %2607 = vmatpush1.msra.mxu0 0.0
    %2608 = vmatprep.subr.mxu0 0.0
    %2609 = vmatpush1.msra.mxu0 0.0
    %2610 = vmatprep.subr.mxu0 0.0
    %2611 = vmatpush1.msra.mxu0 0.0
    %2612 = vmatprep.subr.mxu0 0.0
    %2613 = vmatpush1.msra.mxu0 0.0
    %2614 = vmatprep.subr.mxu0 0.0
    %2615 = vmatpush1.msra.mxu0 %v2587
    %2616 = vmatprep.subr.mxu0 0.0
    %2617 = vmatpush1.msra.mxu0 %v2586
    %2618 = vmatprep.subr.mxu0 0.0
    %2619 = vmatpush1.msra.mxu0 %v2585
    %2620 = vmatprep.subr.mxu0 0.0
    %2621 = vmatpush1.msra.mxu0 %v2584
    %2622 = vmatprep.subr.mxu0 0.0
    %2623 = vmatpush1.msra.mxu0 %v2583
    %2624 = vmatprep.subr.mxu0 0.0
    %2625 = vmatpush1.msra.mxu0 %v2582
    %2626 = vmatprep.subr.mxu0 0.0
    %2627 = vmatpush1.msra.mxu0 %v2581
    %2628 = vmatprep.subr.mxu0 0.0
    %2629 = vmatpush1.msra.mxu0 %v2580
    %2630 = vmatprep.subr.mxu0 0.0
    %2631 = vmatpush2.msra.mxu0 0.0
    %2632 = vmatprep.subr.mxu0 0.0
    %2633 = vmatpush2.msra.mxu0 0.0
    %2634 = vmatprep.subr.mxu0 0.0
    %2635 = vmatpush2.msra.mxu0 0.0
    %2636 = vmatprep.subr.mxu0 0.0
    %2637 = vmatpush2.msra.mxu0 0.0
    %2638 = vmatprep.subr.mxu0 0.0
    %2639 = vmatpush2.msra.mxu0 0.0
    %2640 = vmatprep.subr.mxu0 0.0
    %2641 = vmatpush2.msra.mxu0 0.0
    %2642 = vmatprep.subr.mxu0 0.0
    %2643 = vmatpush2.msra.mxu0 0.0
    %2644 = vmatprep.subr.mxu0 0.0
    %2645 = vmatpush2.msra.mxu0 0.0
    %2646 = vmatprep.subr.mxu0 0.0
    %2647 = vmatpush2.msra.mxu0 0.0
    %2648 = vmatprep.subr.mxu0 0.0
    %2649 = vmatpush2.msra.mxu0 0.0
    %2650 = vmatprep.subr.mxu0 0.0
    %2651 = vmatpush2.msra.mxu0 0.0
    %2652 = vmatprep.subr.mxu0 0.0
    %2653 = vmatpush2.msra.mxu0 0.0
    %2654 = vmatprep.subr.mxu0 0.0
    %2655 = vmatpush2.msra.mxu0 0.0
    %2656 = vmatprep.subr.mxu0 0.0
    %2657 = vmatpush2.msra.mxu0 0.0
    %2658 = vmatprep.subr.mxu0 0.0
    %2659 = vmatpush2.msra.mxu0 0.0
    %2660 = vmatprep.subr.mxu0 0.0
    %2661 = vmatpush2.msra.mxu0 0.0
    %2662 = vmatprep.mubr.f32.mxu0 0.0
    %2663 = vmatmul.mubr.f32.gmra.mxu0 %v2596
    %v2664 = vpop.f32.mrf.mxu0
    %v2665 = vadd.f32 %v2593, %v2664
    %v2666 = vpop.f32.mrf.mxu0
    %2667 = vdwg.mxu0
    %v2668 = vmul.f32 %v2665, 0.5
    %v2669 = vtanh.pop %v2668
    %v2670 = vadd.f32 %v2669, 1.0
    %v2671 = vmul.f32 %v2670, 0.5
    %2673 = vrot.lane.b32.xlu0 %v2665, 32
    %v2674 = vpop.permute.xlu0 %2673
    %v2676 = vmul.f32 %v2671, %v2674
    %2678 = vrot.lane.b32.xlu0 %v2676, 64
    %v2679 = vpop.permute.xlu0 %2678
    %v2681 = vadd.f32 %v2665, %v2679
    %v2682 = vtanh.pop %v2681
    %v2683 = vsub.f32 1.0, %v2671
    %2685 = vrot.lane.b32.xlu0 %v2682, 96
    %v2686 = vpop.permute.xlu0 %2685
    %v2688 = vmul.f32 %v2683, %v2686
    %v2689 = vmul.f32 %v2671, %v2346
    %v2690 = vadd.f32 %v2688, %v2689
    %2692 = vrot.lane.b32.xlu0 %v2690, 96
    %v2693 = vpop.permute.xlu0 %2692
    %v2695 = vsel %vm227, %v2693, %v2462
    %v2696 = vld [vmem:[%s630] sm:$0xff]
    %v2697 = vld [vmem:[%s630 + $0x8] sm:$0xff]
    %v2698 = vld [vmem:[%s630 + $0x10] sm:$0xff]
    %v2699 = vld [vmem:[%s630 + $0x18] sm:$0xff]
    %v2700 = vld [vmem:[%s630 + $0x20] sm:$0xff]
    %v2701 = vld [vmem:[%s630 + $0x28] sm:$0xff]
    %v2702 = vld [vmem:[%s630 + $0x30] sm:$0xff]
    %v2703 = vld [vmem:[%s630 + $0x38] sm:$0xff]
    %v2704 = vld [vmem:[%s639] sm:$0x1]
    %v2706 = vlaneseq
    %v2707 = vshrl.u32 %v2706, 7
    %v2708 = vsub.s32 0, %v2707
    %v2709 = vrot.slane %v2704, %v2708
    %v2712 = vsel %vm524, %v2695, 0
    %2714 = vmatprep.subr.mxu0 0.0
    %2715 = vmatpush1.msra.mxu0 0.0
    %2716 = vmatprep.subr.mxu0 0.0
    %2717 = vmatpush1.msra.mxu0 0.0
    %2718 = vmatprep.subr.mxu0 0.0
    %2719 = vmatpush1.msra.mxu0 0.0
    %2720 = vmatprep.subr.mxu0 0.0
    %2721 = vmatpush1.msra.mxu0 0.0
    %2722 = vmatprep.subr.mxu0 0.0
    %2723 = vmatpush1.msra.mxu0 0.0
    %2724 = vmatprep.subr.mxu0 0.0
    %2725 = vmatpush1.msra.mxu0 0.0
    %2726 = vmatprep.subr.mxu0 0.0
    %2727 = vmatpush1.msra.mxu0 0.0
    %2728 = vmatprep.subr.mxu0 0.0
    %2729 = vmatpush1.msra.mxu0 0.0
    %2730 = vmatprep.subr.mxu0 0.0
    %2731 = vmatpush1.msra.mxu0 %v2703
    %2732 = vmatprep.subr.mxu0 0.0
    %2733 = vmatpush1.msra.mxu0 %v2702
    %2734 = vmatprep.subr.mxu0 0.0
    %2735 = vmatpush1.msra.mxu0 %v2701
    %2736 = vmatprep.subr.mxu0 0.0
    %2737 = vmatpush1.msra.mxu0 %v2700
    %2738 = vmatprep.subr.mxu0 0.0
    %2739 = vmatpush1.msra.mxu0 %v2699
    %2740 = vmatprep.subr.mxu0 0.0
    %2741 = vmatpush1.msra.mxu0 %v2698
    %2742 = vmatprep.subr.mxu0 0.0
    %2743 = vmatpush1.msra.mxu0 %v2697
    %2744 = vmatprep.subr.mxu0 0.0
    %2745 = vmatpush1.msra.mxu0 %v2696
    %2746 = vmatprep.subr.mxu0 0.0
    %2747 = vmatpush2.msra.mxu0 0.0
    %2748 = vmatprep.subr.mxu0 0.0
    %2749 = vmatpush2.msra.mxu0 0.0
    %2750 = vmatprep.subr.mxu0 0.0
    %2751 = vmatpush2.msra.mxu0 0.0
    %2752 = vmatprep.subr.mxu0 0.0
    %2753 = vmatpush2.msra.mxu0 0.0
    %2754 = vmatprep.subr.mxu0 0.0
    %2755 = vmatpush2.msra.mxu0 0.0
    %2756 = vmatprep.subr.mxu0 0.0
    %2757 = vmatpush2.msra.mxu0 0.0
    %2758 = vmatprep.subr.mxu0 0.0
    %2759 = vmatpush2.msra.mxu0 0.0
    %2760 = vmatprep.subr.mxu0 0.0
    %2761 = vmatpush2.msra.mxu0 0.0
    %2762 = vmatprep.subr.mxu0 0.0
    %2763 = vmatpush2.msra.mxu0 0.0
    %2764 = vmatprep.subr.mxu0 0.0
    %2765 = vmatpush2.msra.mxu0 0.0
    %2766 = vmatprep.subr.mxu0 0.0
    %2767 = vmatpush2.msra.mxu0 0.0
    %2768 = vmatprep.subr.mxu0 0.0
    %2769 = vmatpush2.msra.mxu0 0.0
    %2770 = vmatprep.subr.mxu0 0.0
    %2771 = vmatpush2.msra.mxu0 0.0
    %2772 = vmatprep.subr.mxu0 0.0
    %2773 = vmatpush2.msra.mxu0 0.0
    %2774 = vmatprep.subr.mxu0 0.0
    %2775 = vmatpush2.msra.mxu0 0.0
    %2776 = vmatprep.subr.mxu0 0.0
    %2777 = vmatpush2.msra.mxu0 0.0
    %2778 = vmatprep.mubr.f32.mxu0 0.0
    %2779 = vmatmul.mubr.f32.gmra.mxu0 %v2712
    %v2780 = vpop.f32.mrf.mxu0
    %v2781 = vadd.f32 %v2709, %v2780
    %v2782 = vpop.f32.mrf.mxu0
    %2783 = vdwg.mxu0
    %v2784 = vmul.f32 %v2781, 0.5
    %v2785 = vtanh.pop %v2784
    %v2786 = vadd.f32 %v2785, 1.0
    %v2787 = vmul.f32 %v2786, 0.5
    %2789 = vrot.lane.b32.xlu0 %v2781, 32
    %v2790 = vpop.permute.xlu0 %2789
    %v2792 = vmul.f32 %v2787, %v2790
    %2794 = vrot.lane.b32.xlu0 %v2792, 64
    %v2795 = vpop.permute.xlu0 %2794
    %v2797 = vadd.f32 %v2781, %v2795
    %v2798 = vtanh.pop %v2797
    %v2799 = vsub.f32 1.0, %v2787
    %2801 = vrot.lane.b32.xlu0 %v2798, 96
    %v2802 = vpop.permute.xlu0 %2801
    %v2804 = vmul.f32 %v2799, %v2802
    %v2805 = vmul.f32 %v2787, %v2462
    %v2806 = vadd.f32 %v2804, %v2805
    %2808 = vrot.lane.b32.xlu0 %v2806, 96
    %v2809 = vpop.permute.xlu0 %2808
    %2811 = vst.msk [vmem:[#allocation2 + $0x30] sm:$0xff] %vm227, %v2809
    %v2812 = vld [vmem:[%s9] sm:$0xff]
    %v2813 = vld [vmem:[%s9 + $0x8] sm:$0xff]
    %v2814 = vld [vmem:[%s9 + $0x10] sm:$0xff]
    %v2815 = vld [vmem:[%s9 + $0x18] sm:$0xff]
    %v2816 = vld [vmem:[#allocation17] sm:$0x1]
    %v2818 = vlaneseq
    %v2819 = vshrl.u32 %v2818, 7
    %v2820 = vsub.s32 0, %v2819
    %v2821 = vrot.slane %v2816, %v2820
    %v2823 = vsel %vm227, %v2577, 0
    %2825 = vmatprep.subr.mxu0 0.0
    %2826 = vmatpush1.msra.mxu0 0.0
    %2827 = vmatprep.subr.mxu0 0.0
    %2828 = vmatpush1.msra.mxu0 0.0
    %2829 = vmatprep.subr.mxu0 0.0
    %2830 = vmatpush1.msra.mxu0 0.0
    %2831 = vmatprep.subr.mxu0 0.0
    %2832 = vmatpush1.msra.mxu0 0.0
    %2833 = vmatprep.subr.mxu0 0.0
    %2834 = vmatpush1.msra.mxu0 0.0
    %2835 = vmatprep.subr.mxu0 0.0
    %2836 = vmatpush1.msra.mxu0 0.0
    %2837 = vmatprep.subr.mxu0 0.0
    %2838 = vmatpush1.msra.mxu0 0.0
    %2839 = vmatprep.subr.mxu0 0.0
    %2840 = vmatpush1.msra.mxu0 0.0
    %2841 = vmatprep.subr.mxu0 0.0
    %2842 = vmatpush1.msra.mxu0 0.0
    %2843 = vmatprep.subr.mxu0 0.0
    %2844 = vmatpush1.msra.mxu0 0.0
    %2845 = vmatprep.subr.mxu0 0.0
    %2846 = vmatpush1.msra.mxu0 0.0
    %2847 = vmatprep.subr.mxu0 0.0
    %2848 = vmatpush1.msra.mxu0 0.0
    %2849 = vmatprep.subr.mxu0 0.0
    %2850 = vmatpush1.msra.mxu0 %v2815
    %2851 = vmatprep.subr.mxu0 0.0
    %2852 = vmatpush1.msra.mxu0 %v2814
    %2853 = vmatprep.subr.mxu0 0.0
    %2854 = vmatpush1.msra.mxu0 %v2813
    %2855 = vmatprep.subr.mxu0 0.0
    %2856 = vmatpush1.msra.mxu0 %v2812
    %2857 = vmatprep.subr.mxu0 0.0
    %2858 = vmatpush2.msra.mxu0 0.0
    %2859 = vmatprep.subr.mxu0 0.0
    %2860 = vmatpush2.msra.mxu0 0.0
    %2861 = vmatprep.subr.mxu0 0.0
    %2862 = vmatpush2.msra.mxu0 0.0
    %2863 = vmatprep.subr.mxu0 0.0
    %2864 = vmatpush2.msra.mxu0 0.0
    %2865 = vmatprep.subr.mxu0 0.0
    %2866 = vmatpush2.msra.mxu0 0.0
    %2867 = vmatprep.subr.mxu0 0.0
    %2868 = vmatpush2.msra.mxu0 0.0
    %2869 = vmatprep.subr.mxu0 0.0
    %2870 = vmatpush2.msra.mxu0 0.0
    %2871 = vmatprep.subr.mxu0 0.0
    %2872 = vmatpush2.msra.mxu0 0.0
    %2873 = vmatprep.subr.mxu0 0.0
    %2874 = vmatpush2.msra.mxu0 0.0
    %2875 = vmatprep.subr.mxu0 0.0
    %2876 = vmatpush2.msra.mxu0 0.0
    %2877 = vmatprep.subr.mxu0 0.0
    %2878 = vmatpush2.msra.mxu0 0.0
    %2879 = vmatprep.subr.mxu0 0.0
    %2880 = vmatpush2.msra.mxu0 0.0
    %2881 = vmatprep.subr.mxu0 0.0
    %2882 = vmatpush2.msra.mxu0 0.0
    %2883 = vmatprep.subr.mxu0 0.0
    %2884 = vmatpush2.msra.mxu0 0.0
    %2885 = vmatprep.subr.mxu0 0.0
    %2886 = vmatpush2.msra.mxu0 0.0
    %2887 = vmatprep.subr.mxu0 0.0
    %2888 = vmatpush2.msra.mxu0 0.0
    %2889 = vmatprep.mubr.f32.mxu0 0.0
    %2890 = vmatmul.mubr.f32.gmra.mxu0 %v2823
    %v2891 = vpop.f32.mrf.mxu0
    %v2892 = vadd.f32 %v2821, %v2891
    %v2893 = vpop.f32.mrf.mxu0
    %2894 = vdwg.mxu0
    %v2895 = vadd.f32 %v383, %v2892
    %v2896 = vmul.f32 %v2895, 0.5
    %v2897 = vtanh.pop %v2896
    %v2898 = vadd.f32 %v2897, 1.0
    %v2899 = vmul.f32 %v2898, 0.5
    %2901 = vrot.lane.b32.xlu0 %v2892, 64
    %v2902 = vpop.permute.xlu0 %2901
    %v2904 = vmul.f32 %v2899, %v2902
    %2906 = vrot.lane.b32.xlu0 %v2904, 64
    %v2907 = vpop.permute.xlu0 %2906
    %v2909 = vadd.f32 %v383, %v2907
    %v2910 = vtanh.pop %v2909
    %v2911 = vsub.f32 1.0, %v2899
    %2913 = vrot.lane.b32.xlu0 %v2910, 96
    %v2914 = vpop.permute.xlu0 %2913
    %v2916 = vmul.f32 %v2911, %v2914
    %v2917 = vmul.f32 %v2899, %v2574
    %v2918 = vadd.f32 %v2916, %v2917
    %2920 = vrot.lane.b32.xlu0 %v2918, 96
    %v2921 = vpop.permute.xlu0 %2920
    %v2923 = vsel %vm227, %v2921, %v2690
    %v2924 = vld [vmem:[#allocation18] sm:$0xff]
    %v2925 = vld [vmem:[#allocation18 + $0x8] sm:$0xff]
    %v2926 = vld [vmem:[#allocation18 + $0x10] sm:$0xff]
    %v2927 = vld [vmem:[#allocation18 + $0x18] sm:$0xff]
    %v2928 = vld [vmem:[#allocation18 + $0x20] sm:$0xff]
    %v2929 = vld [vmem:[#allocation18 + $0x28] sm:$0xff]
    %v2930 = vld [vmem:[#allocation18 + $0x30] sm:$0xff]
    %v2931 = vld [vmem:[#allocation18 + $0x38] sm:$0xff]
    %v2932 = vld [vmem:[%s12] sm:$0x1]
    %v2934 = vlaneseq
    %v2935 = vshrl.u32 %v2934, 7
    %v2936 = vsub.s32 0, %v2935
    %v2937 = vrot.slane %v2932, %v2936
    %v2940 = vsel %vm524, %v2923, 0
    %2942 = vmatprep.subr.mxu0 0.0
    %2943 = vmatpush1.msra.mxu0 0.0
    %2944 = vmatprep.subr.mxu0 0.0
    %2945 = vmatpush1.msra.mxu0 0.0
    %2946 = vmatprep.subr.mxu0 0.0
    %2947 = vmatpush1.msra.mxu0 0.0
    %2948 = vmatprep.subr.mxu0 0.0
    %2949 = vmatpush1.msra.mxu0 0.0
    %2950 = vmatprep.subr.mxu0 0.0
    %2951 = vmatpush1.msra.mxu0 0.0
    %2952 = vmatprep.subr.mxu0 0.0
    %2953 = vmatpush1.msra.mxu0 0.0
    %2954 = vmatprep.subr.mxu0 0.0
    %2955 = vmatpush1.msra.mxu0 0.0
    %2956 = vmatprep.subr.mxu0 0.0
    %2957 = vmatpush1.msra.mxu0 0.0
    %2958 = vmatprep.subr.mxu0 0.0
    %2959 = vmatpush1.msra.mxu0 %v2931
    %2960 = vmatprep.subr.mxu0 0.0
    %2961 = vmatpush1.msra.mxu0 %v2930
    %2962 = vmatprep.subr.mxu0 0.0
    %2963 = vmatpush1.msra.mxu0 %v2929
    %2964 = vmatprep.subr.mxu0 0.0
    %2965 = vmatpush1.msra.mxu0 %v2928
    %2966 = vmatprep.subr.mxu0 0.0
    %2967 = vmatpush1.msra.mxu0 %v2927
    %2968 = vmatprep.subr.mxu0 0.0
    %2969 = vmatpush1.msra.mxu0 %v2926
    %2970 = vmatprep.subr.mxu0 0.0
    %2971 = vmatpush1.msra.mxu0 %v2925
    %2972 = vmatprep.subr.mxu0 0.0
    %2973 = vmatpush1.msra.mxu0 %v2924
    %2974 = vmatprep.subr.mxu0 0.0
    %2975 = vmatpush2.msra.mxu0 0.0
    %2976 = vmatprep.subr.mxu0 0.0
    %2977 = vmatpush2.msra.mxu0 0.0
    %2978 = vmatprep.subr.mxu0 0.0
    %2979 = vmatpush2.msra.mxu0 0.0
    %2980 = vmatprep.subr.mxu0 0.0
    %2981 = vmatpush2.msra.mxu0 0.0
    %2982 = vmatprep.subr.mxu0 0.0
    %2983 = vmatpush2.msra.mxu0 0.0
    %2984 = vmatprep.subr.mxu0 0.0
    %2985 = vmatpush2.msra.mxu0 0.0
    %2986 = vmatprep.subr.mxu0 0.0
    %2987 = vmatpush2.msra.mxu0 0.0
    %2988 = vmatprep.subr.mxu0 0.0
    %2989 = vmatpush2.msra.mxu0 0.0
    %2990 = vmatprep.subr.mxu0 0.0
    %2991 = vmatpush2.msra.mxu0 0.0
    %2992 = vmatprep.subr.mxu0 0.0
    %2993 = vmatpush2.msra.mxu0 0.0
    %2994 = vmatprep.subr.mxu0 0.0
    %2995 = vmatpush2.msra.mxu0 0.0
    %2996 = vmatprep.subr.mxu0 0.0
    %2997 = vmatpush2.msra.mxu0 0.0
    %2998 = vmatprep.subr.mxu0 0.0
    %2999 = vmatpush2.msra.mxu0 0.0
    %3000 = vmatprep.subr.mxu0 0.0
    %3001 = vmatpush2.msra.mxu0 0.0
    %3002 = vmatprep.subr.mxu0 0.0
    %3003 = vmatpush2.msra.mxu0 0.0
    %3004 = vmatprep.subr.mxu0 0.0
    %3005 = vmatpush2.msra.mxu0 0.0
    %3006 = vmatprep.mubr.f32.mxu0 0.0
    %3007 = vmatmul.mubr.f32.gmra.mxu0 %v2940
    %v3008 = vpop.f32.mrf.mxu0
    %v3009 = vadd.f32 %v2937, %v3008
    %v3010 = vpop.f32.mrf.mxu0
    %3011 = vdwg.mxu0
    %v3012 = vmul.f32 %v3009, 0.5
    %v3013 = vtanh.pop %v3012
    %v3014 = vadd.f32 %v3013, 1.0
    %v3015 = vmul.f32 %v3014, 0.5
    %3017 = vrot.lane.b32.xlu0 %v3009, 32
    %v3018 = vpop.permute.xlu0 %3017
    %v3020 = vmul.f32 %v3015, %v3018
    %3022 = vrot.lane.b32.xlu0 %v3020, 64
    %v3023 = vpop.permute.xlu0 %3022
    %v3025 = vadd.f32 %v3009, %v3023
    %v3026 = vtanh.pop %v3025
    %v3027 = vsub.f32 1.0, %v3015
    %3029 = vrot.lane.b32.xlu0 %v3026, 96
    %v3030 = vpop.permute.xlu0 %3029
    %v3032 = vmul.f32 %v3027, %v3030
    %v3033 = vmul.f32 %v3015, %v2690
    %v3034 = vadd.f32 %v3032, %v3033
    %3036 = vrot.lane.b32.xlu0 %v3034, 96
    %v3037 = vpop.permute.xlu0 %3036
    %v3039 = vsel %vm227, %v3037, %v2806
    %v3040 = vld [vmem:[%s630] sm:$0xff]
    %v3041 = vld [vmem:[%s630 + $0x8] sm:$0xff]
    %v3042 = vld [vmem:[%s630 + $0x10] sm:$0xff]
    %v3043 = vld [vmem:[%s630 + $0x18] sm:$0xff]
    %v3044 = vld [vmem:[%s630 + $0x20] sm:$0xff]
    %v3045 = vld [vmem:[%s630 + $0x28] sm:$0xff]
    %v3046 = vld [vmem:[%s630 + $0x30] sm:$0xff]
    %v3047 = vld [vmem:[%s630 + $0x38] sm:$0xff]
    %v3048 = vld [vmem:[%s639] sm:$0x1]
    %v3050 = vlaneseq
    %v3051 = vshrl.u32 %v3050, 7
    %v3052 = vsub.s32 0, %v3051
    %v3053 = vrot.slane %v3048, %v3052
    %v3056 = vsel %vm524, %v3039, 0
    %3058 = vmatprep.subr.mxu0 0.0
    %3059 = vmatpush1.msra.mxu0 0.0
    %3060 = vmatprep.subr.mxu0 0.0
    %3061 = vmatpush1.msra.mxu0 0.0
    %3062 = vmatprep.subr.mxu0 0.0
    %3063 = vmatpush1.msra.mxu0 0.0
    %3064 = vmatprep.subr.mxu0 0.0
    %3065 = vmatpush1.msra.mxu0 0.0
    %3066 = vmatprep.subr.mxu0 0.0
    %3067 = vmatpush1.msra.mxu0 0.0
    %3068 = vmatprep.subr.mxu0 0.0
    %3069 = vmatpush1.msra.mxu0 0.0
    %3070 = vmatprep.subr.mxu0 0.0
    %3071 = vmatpush1.msra.mxu0 0.0
    %3072 = vmatprep.subr.mxu0 0.0
    %3073 = vmatpush1.msra.mxu0 0.0
    %3074 = vmatprep.subr.mxu0 0.0
    %3075 = vmatpush1.msra.mxu0 %v3047
    %3076 = vmatprep.subr.mxu0 0.0
    %3077 = vmatpush1.msra.mxu0 %v3046
    %3078 = vmatprep.subr.mxu0 0.0
    %3079 = vmatpush1.msra.mxu0 %v3045
    %3080 = vmatprep.subr.mxu0 0.0
    %3081 = vmatpush1.msra.mxu0 %v3044
    %3082 = vmatprep.subr.mxu0 0.0
    %3083 = vmatpush1.msra.mxu0 %v3043
    %3084 = vmatprep.subr.mxu0 0.0
    %3085 = vmatpush1.msra.mxu0 %v3042
    %3086 = vmatprep.subr.mxu0 0.0
    %3087 = vmatpush1.msra.mxu0 %v3041
    %3088 = vmatprep.subr.mxu0 0.0
    %3089 = vmatpush1.msra.mxu0 %v3040
    %3090 = vmatprep.subr.mxu0 0.0
    %3091 = vmatpush2.msra.mxu0 0.0
    %3092 = vmatprep.subr.mxu0 0.0
    %3093 = vmatpush2.msra.mxu0 0.0
    %3094 = vmatprep.subr.mxu0 0.0
    %3095 = vmatpush2.msra.mxu0 0.0
    %3096 = vmatprep.subr.mxu0 0.0
    %3097 = vmatpush2.msra.mxu0 0.0
    %3098 = vmatprep.subr.mxu0 0.0
    %3099 = vmatpush2.msra.mxu0 0.0
    %3100 = vmatprep.subr.mxu0 0.0
    %3101 = vmatpush2.msra.mxu0 0.0
    %3102 = vmatprep.subr.mxu0 0.0
    %3103 = vmatpush2.msra.mxu0 0.0
    %3104 = vmatprep.subr.mxu0 0.0
    %3105 = vmatpush2.msra.mxu0 0.0
    %3106 = vmatprep.subr.mxu0 0.0
    %3107 = vmatpush2.msra.mxu0 0.0
    %3108 = vmatprep.subr.mxu0 0.0
    %3109 = vmatpush2.msra.mxu0 0.0
    %3110 = vmatprep.subr.mxu0 0.0
    %3111 = vmatpush2.msra.mxu0 0.0
    %3112 = vmatprep.subr.mxu0 0.0
    %3113 = vmatpush2.msra.mxu0 0.0
    %3114 = vmatprep.subr.mxu0 0.0
    %3115 = vmatpush2.msra.mxu0 0.0
    %3116 = vmatprep.subr.mxu0 0.0
    %3117 = vmatpush2.msra.mxu0 0.0
    %3118 = vmatprep.subr.mxu0 0.0
    %3119 = vmatpush2.msra.mxu0 0.0
    %3120 = vmatprep.subr.mxu0 0.0
    %3121 = vmatpush2.msra.mxu0 0.0
    %3122 = vmatprep.mubr.f32.mxu0 0.0
    %3123 = vmatmul.mubr.f32.gmra.mxu0 %v3056
    %v3124 = vpop.f32.mrf.mxu0
    %v3125 = vadd.f32 %v3053, %v3124
    %v3126 = vpop.f32.mrf.mxu0
    %3127 = vdwg.mxu0
    %v3128 = vmul.f32 %v3125, 0.5
    %v3129 = vtanh.pop %v3128
    %v3130 = vadd.f32 %v3129, 1.0
    %v3131 = vmul.f32 %v3130, 0.5
    %3133 = vrot.lane.b32.xlu0 %v3125, 32
    %v3134 = vpop.permute.xlu0 %3133
    %v3136 = vmul.f32 %v3131, %v3134
    %3138 = vrot.lane.b32.xlu0 %v3136, 64
    %v3139 = vpop.permute.xlu0 %3138
    %v3141 = vadd.f32 %v3125, %v3139
    %v3142 = vtanh.pop %v3141
    %v3143 = vsub.f32 1.0, %v3131
    %3145 = vrot.lane.b32.xlu0 %v3142, 96
    %v3146 = vpop.permute.xlu0 %3145
    %v3148 = vmul.f32 %v3143, %v3146
    %v3149 = vmul.f32 %v3131, %v2806
    %v3150 = vadd.f32 %v3148, %v3149
    %3152 = vrot.lane.b32.xlu0 %v3150, 96
    %v3153 = vpop.permute.xlu0 %3152
    %3155 = vst.msk [vmem:[#allocation2 + $0x38] sm:$0xff] %vm227, %v3153
    %v3156 = vld [vmem:[#allocation2] sm:$0xff]
    %v3157 = vld [vmem:[#allocation2 + $0x8] sm:$0xff]
    %v3158 = vld [vmem:[#allocation2 + $0x10] sm:$0xff]
    %v3159 = vld [vmem:[#allocation2 + $0x18] sm:$0xff]
    %v3160 = vld [vmem:[#allocation2 + $0x20] sm:$0xff]
    %v3161 = vld [vmem:[#allocation2 + $0x28] sm:$0xff]
    %v3162 = vld [vmem:[#allocation2 + $0x30] sm:$0xff]
    %v3163 = vld [vmem:[#allocation2 + $0x38] sm:$0xff]
    %v3164 = vld [vmem:[%s13] sm:$0xff]
    %v3165 = vld [vmem:[%s13 + $0x8] sm:$0xff]
    %v3166 = vld [vmem:[%s13 + $0x10] sm:$0xff]
    %v3167 = vld [vmem:[%s13 + $0x18] sm:$0xff]
    %v3168 = vld [vmem:[%s14] sm:$0x1]
    %v3170 = vlaneseq
    %v3171 = vshrl.u32 %v3170, 7
    %v3172 = vsub.s32 0, %v3171
    %v3173 = vrot.slane %v3168, %v3172
    %v3176 = vsel %vm227, %v3156, 0
    %v3179 = vsel %vm227, %v3157, 0
    %v3182 = vsel %vm227, %v3158, 0
    %v3185 = vsel %vm227, %v3159, 0
    %v3188 = vsel %vm227, %v3160, 0
    %v3191 = vsel %vm227, %v3161, 0
    %v3194 = vsel %vm227, %v3162, 0
    %v3197 = vsel %vm227, %v3163, 0
    %3199 = vmatprep.subr.mxu0 0.0
    %3200 = vmatpush1.msra.mxu0 0.0
    %3201 = vmatprep.subr.mxu0 0.0
    %3202 = vmatpush1.msra.mxu0 0.0
    %3203 = vmatprep.subr.mxu0 0.0
    %3204 = vmatpush1.msra.mxu0 0.0
    %3205 = vmatprep.subr.mxu0 0.0
    %3206 = vmatpush1.msra.mxu0 0.0
    %3207 = vmatprep.subr.mxu0 0.0
    %3208 = vmatpush1.msra.mxu0 0.0
    %3209 = vmatprep.subr.mxu0 0.0
    %3210 = vmatpush1.msra.mxu0 0.0
    %3211 = vmatprep.subr.mxu0 0.0
    %3212 = vmatpush1.msra.mxu0 0.0
    %3213 = vmatprep.subr.mxu0 0.0
    %3214 = vmatpush1.msra.mxu0 0.0
    %3215 = vmatprep.subr.mxu0 0.0
    %3216 = vmatpush1.msra.mxu0 0.0
    %3217 = vmatprep.subr.mxu0 0.0
    %3218 = vmatpush1.msra.mxu0 0.0
    %3219 = vmatprep.subr.mxu0 0.0
    %3220 = vmatpush1.msra.mxu0 0.0
    %3221 = vmatprep.subr.mxu0 0.0
    %3222 = vmatpush1.msra.mxu0 0.0
    %3223 = vmatprep.subr.mxu0 0.0
    %3224 = vmatpush1.msra.mxu0 %v3167
    %3225 = vmatprep.subr.mxu0 0.0
    %3226 = vmatpush1.msra.mxu0 %v3166
    %3227 = vmatprep.subr.mxu0 0.0
    %3228 = vmatpush1.msra.mxu0 %v3165
    %3229 = vmatprep.subr.mxu0 0.0
    %3230 = vmatpush1.msra.mxu0 %v3164
    %3231 = vmatprep.subr.mxu0 0.0
    %3232 = vmatpush2.msra.mxu0 0.0
    %3233 = vmatprep.subr.mxu0 0.0
    %3234 = vmatpush2.msra.mxu0 0.0
    %3235 = vmatprep.subr.mxu0 0.0
    %3236 = vmatpush2.msra.mxu0 0.0
    %3237 = vmatprep.subr.mxu0 0.0
    %3238 = vmatpush2.msra.mxu0 0.0
    %3239 = vmatprep.subr.mxu0 0.0
    %3240 = vmatpush2.msra.mxu0 0.0
    %3241 = vmatprep.subr.mxu0 0.0
    %3242 = vmatpush2.msra.mxu0 0.0
    %3243 = vmatprep.subr.mxu0 0.0
    %3244 = vmatpush2.msra.mxu0 0.0
    %3245 = vmatprep.subr.mxu0 0.0
    %3246 = vmatpush2.msra.mxu0 0.0
    %3247 = vmatprep.subr.mxu0 0.0
    %3248 = vmatpush2.msra.mxu0 0.0
    %3249 = vmatprep.subr.mxu0 0.0
    %3250 = vmatpush2.msra.mxu0 0.0
    %3251 = vmatprep.subr.mxu0 0.0
    %3252 = vmatpush2.msra.mxu0 0.0
    %3253 = vmatprep.subr.mxu0 0.0
    %3254 = vmatpush2.msra.mxu0 0.0
    %3255 = vmatprep.subr.mxu0 0.0
    %3256 = vmatpush2.msra.mxu0 0.0
    %3257 = vmatprep.subr.mxu0 0.0
    %3258 = vmatpush2.msra.mxu0 0.0
    %3259 = vmatprep.subr.mxu0 0.0
    %3260 = vmatpush2.msra.mxu0 0.0
    %3261 = vmatprep.subr.mxu0 0.0
    %3262 = vmatpush2.msra.mxu0 0.0
    %3263 = vmatprep.mubr.f32.mxu0 0.0
    %3264 = vmatmul.mubr.f32.gmra.mxu0 %v3176
    %v3265 = vpop.f32.mrf.mxu0
    %v3266 = vadd.f32 %v3173, %v3265
    %v3267 = vpop.f32.mrf.mxu0
    %3268 = vmatprep.mubr.f32.mxu0 0.0
    %3269 = vmatmul.mubr.f32.gmra.mxu0 %v3179
    %v3270 = vpop.f32.mrf.mxu0
    %v3271 = vadd.f32 %v3173, %v3270
    %v3272 = vpop.f32.mrf.mxu0
    %3273 = vmatprep.mubr.f32.mxu0 0.0
    %3274 = vmatmul.mubr.f32.gmra.mxu0 %v3182
    %v3275 = vpop.f32.mrf.mxu0
    %v3276 = vadd.f32 %v3173, %v3275
    %v3277 = vpop.f32.mrf.mxu0
    %3278 = vmatprep.mubr.f32.mxu0 0.0
    %3279 = vmatmul.mubr.f32.gmra.mxu0 %v3185
    %v3280 = vpop.f32.mrf.mxu0
    %v3281 = vadd.f32 %v3173, %v3280
    %v3282 = vpop.f32.mrf.mxu0
    %3283 = vmatprep.mubr.f32.mxu0 0.0
    %3284 = vmatmul.mubr.f32.gmra.mxu0 %v3188
    %v3285 = vpop.f32.mrf.mxu0
    %v3286 = vadd.f32 %v3173, %v3285
    %v3287 = vpop.f32.mrf.mxu0
    %3288 = vmatprep.mubr.f32.mxu0 0.0
    %3289 = vmatmul.mubr.f32.gmra.mxu0 %v3191
    %v3290 = vpop.f32.mrf.mxu0
    %v3291 = vadd.f32 %v3173, %v3290
    %v3292 = vpop.f32.mrf.mxu0
    %3293 = vmatprep.mubr.f32.mxu0 0.0
    %3294 = vmatmul.mubr.f32.gmra.mxu0 %v3194
    %v3295 = vpop.f32.mrf.mxu0
    %v3296 = vadd.f32 %v3173, %v3295
    %v3297 = vpop.f32.mrf.mxu0
    %3298 = vmatprep.mubr.f32.mxu0 0.0
    %3299 = vmatmul.mubr.f32.gmra.mxu0 %v3197
    %v3300 = vpop.f32.mrf.mxu0
    %v3301 = vadd.f32 %v3173, %v3300
    %v3302 = vpop.f32.mrf.mxu0
    %3303 = vdwg.mxu0
    %vm3304 = vcmask 97280
    %v3305 = vsel %vm3304, %v3266, -inf
    %3306 = vmax.xlane.f32.xlu0 %v3305
    %v3307 = vpop.xlane.xlu0 %3306
    %v3308 = vsel %vm3304, %v3271, -inf
    %3309 = vmax.xlane.f32.xlu0 %v3308
    %v3310 = vpop.xlane.xlu0 %3309
    %v3311 = vsel %vm3304, %v3276, -inf
    %3312 = vmax.xlane.f32.xlu0 %v3311
    %v3313 = vpop.xlane.xlu0 %3312
    %v3314 = vsel %vm3304, %v3281, -inf
    %3315 = vmax.xlane.f32.xlu0 %v3314
    %v3316 = vpop.xlane.xlu0 %3315
    %v3317 = vsel %vm3304, %v3286, -inf
    %3318 = vmax.xlane.f32.xlu0 %v3317
    %v3319 = vpop.xlane.xlu0 %3318
    %v3320 = vsel %vm3304, %v3291, -inf
    %3321 = vmax.xlane.f32.xlu0 %v3320
    %v3322 = vpop.xlane.xlu0 %3321
    %v3323 = vsel %vm3304, %v3296, -inf
    %3324 = vmax.xlane.f32.xlu0 %v3323
    %v3325 = vpop.xlane.xlu0 %3324
    %v3326 = vsel %vm3304, %v3301, -inf
    %3327 = vmax.xlane.f32.xlu0 %v3326
    %v3328 = vpop.xlane.xlu0 %3327
    %v3329 = vsub.f32 %v3266, %v3307
    %v3330 = vsub.f32 %v3271, %v3310
    %v3331 = vsub.f32 %v3276, %v3313
    %v3332 = vsub.f32 %v3281, %v3316
    %v3333 = vsub.f32 %v3286, %v3319
    %v3334 = vsub.f32 %v3291, %v3322
    %v3335 = vsub.f32 %v3296, %v3325
    %v3336 = vsub.f32 %v3301, %v3328
    %v3337 = vmul.f32 %v3329, 1.442695
    %v3338 = vpow.pop %v3337
    %v3339 = vmul.f32 %v3330, 1.442695
    %v3340 = vpow.pop %v3339
    %v3341 = vmul.f32 %v3331, 1.442695
    %v3342 = vpow.pop %v3341
    %v3343 = vmul.f32 %v3332, 1.442695
    %v3344 = vpow.pop %v3343
    %v3345 = vmul.f32 %v3333, 1.442695
    %v3346 = vpow.pop %v3345
    %v3347 = vmul.f32 %v3334, 1.442695
    %v3348 = vpow.pop %v3347
    %v3349 = vmul.f32 %v3335, 1.442695
    %v3350 = vpow.pop %v3349
    %v3351 = vmul.f32 %v3336, 1.442695
    %v3352 = vpow.pop %v3351
    %v3353 = vsel %vm3304, %v3338, 0.0
    %3354 = vadd.xlane.f32.xlu0 %v3353
    %v3355 = vpop.xlane.xlu0 %3354
    %v3356 = vsel %vm3304, %v3340, 0.0
    %3357 = vadd.xlane.f32.xlu0 %v3356
    %v3358 = vpop.xlane.xlu0 %3357
    %v3359 = vsel %vm3304, %v3342, 0.0
    %3360 = vadd.xlane.f32.xlu0 %v3359
    %v3361 = vpop.xlane.xlu0 %3360
    %v3362 = vsel %vm3304, %v3344, 0.0
    %3363 = vadd.xlane.f32.xlu0 %v3362
    %v3364 = vpop.xlane.xlu0 %3363
    %v3365 = vsel %vm3304, %v3346, 0.0
    %3366 = vadd.xlane.f32.xlu0 %v3365
    %v3367 = vpop.xlane.xlu0 %3366
    %v3368 = vsel %vm3304, %v3348, 0.0
    %3369 = vadd.xlane.f32.xlu0 %v3368
    %v3370 = vpop.xlane.xlu0 %3369
    %v3371 = vsel %vm3304, %v3350, 0.0
    %3372 = vadd.xlane.f32.xlu0 %v3371
    %v3373 = vpop.xlane.xlu0 %3372
    %v3374 = vsel %vm3304, %v3352, 0.0
    %3375 = vadd.xlane.f32.xlu0 %v3374
    %v3376 = vpop.xlane.xlu0 %3375
    %v3377 = vrcp.pop %v3355
    %v3378 = vmul.f32 %v3338, %v3377
    %v3379 = vrcp.pop %v3358
    %v3380 = vmul.f32 %v3340, %v3379
    %v3381 = vrcp.pop %v3361
    %v3382 = vmul.f32 %v3342, %v3381
    %v3383 = vrcp.pop %v3364
    %v3384 = vmul.f32 %v3344, %v3383
    %v3385 = vrcp.pop %v3367
    %v3386 = vmul.f32 %v3346, %v3385
    %v3387 = vrcp.pop %v3370
    %v3388 = vmul.f32 %v3348, %v3387
    %v3389 = vrcp.pop %v3373
    %v3390 = vmul.f32 %v3350, %v3389
    %v3391 = vrcp.pop %v3376
    %v3392 = vmul.f32 %v3352, %v3391
    %3393 = vst.msk [vmem:[%s15] sm:$0xff] %vm3304, %v3378
    %3394 = vst.msk [vmem:[%s15 + $0x8] sm:$0xff] %vm3304, %v3380
    %3395 = vst.msk [vmem:[%s15 + $0x10] sm:$0xff] %vm3304, %v3382
    %3396 = vst.msk [vmem:[%s15 + $0x18] sm:$0xff] %vm3304, %v3384
    %3397 = vst.msk [vmem:[%s15 + $0x20] sm:$0xff] %vm3304, %v3386
    %3398 = vst.msk [vmem:[%s15 + $0x28] sm:$0xff] %vm3304, %v3388
    %3399 = vst.msk [vmem:[%s15 + $0x30] sm:$0xff] %vm3304, %v3390
    %3400 = vst.msk [vmem:[%s15 + $0x38] sm:$0xff] %vm3304, %v3392
    %3401 = vst.msk [vmem:[#allocation20] sm:$0xff] %vm227, %v2921
    %3402 = vst.msk [vmem:[#allocation21] sm:$0xff] %vm227, %v3037
    %3403 = vst.msk [vmem:[#allocation23] sm:$0xff] %vm227, %v3153
    // Predicated region
    $region102: #{tpu_custom_call.1} parent=1 // pred_check
      _
    $region103: #{tpu_custom_call.1} parent=1 // pred_check_branch
      %3405 = sbr.rel (0) target = $region105
    $region104: #{tpu_custom_call.1} parent=1 // pred_region
      _
    $region105: #{tpu_custom_call.1} parent=1 // pred_fallthru
      _
    // Predicated region
    $region106: #{tpu_custom_call.1} parent=1 // pred_check
      _
    $region107: #{tpu_custom_call.1} parent=1 // pred_check_branch
      %3407 = sbr.rel (0) target = $region109
    $region108: #{tpu_custom_call.1} parent=1 // pred_region
      %s3409 = ssub.s32 128, 128
      %3410 = vsyncadd [#allocation5], %s3409
      %s3412 = sshll.u32 [#allocation20], 4
      %s3413 = int_to_ptr.vmem [resolvable:$true] %s3412
      %3415 = dma.vmem_to_hbm [thread:$0]  %s3413, 128, %s16, [#allocation5]
    $region109: #{tpu_custom_call.1} parent=1 // pred_fallthru
      _
    // Predicated region
    $region110: #{tpu_custom_call.1} parent=1 // pred_check
      _
    $region111: #{tpu_custom_call.1} parent=1 // pred_check_branch
      %3417 = sbr.rel (0) target = $region113
    $region112: #{tpu_custom_call.1} parent=1 // pred_region
      %s3419 = ssub.s32 128, 128
      %3420 = vsyncadd [#allocation22], %s3419
      %s3422 = sshll.u32 [#allocation21], 4
      %s3423 = int_to_ptr.vmem [resolvable:$true] %s3422
      %3425 = dma.vmem_to_hbm [thread:$0]  %s3423, 128, %s17, [#allocation22]
    $region113: #{tpu_custom_call.1} parent=1 // pred_fallthru
      _
    // Predicated region
    $region114: #{tpu_custom_call.1} parent=1 // pred_check
      _
    $region115: #{tpu_custom_call.1} parent=1 // pred_check_branch
      %3427 = sbr.rel (0) target = $region117
    $region116: #{tpu_custom_call.1} parent=1 // pred_region
      %s3429 = ssub.s32 128, 128
      %3430 = vsyncadd [#allocation22], %s3429
      %s3432 = sshll.u32 [#allocation23], 4
      %s3433 = int_to_ptr.vmem [resolvable:$true] %s3432
      %3435 = dma.vmem_to_hbm [thread:$0]  %s3433, 128, %s18, [#allocation22]
    $region117: #{tpu_custom_call.1} parent=1 // pred_fallthru
      _
    // Predicated region
    $region118: #{tpu_custom_call.1} parent=1 // pred_check
      _
    $region119: #{tpu_custom_call.1} parent=1 // pred_check_branch
      %3437 = sbr.rel (0) target = $region121
    $region120: #{tpu_custom_call.1} parent=1 // pred_region
      _
    $region121: #{tpu_custom_call.1} parent=1 // pred_fallthru
      _
    // Predicated region
    $region122: #{tpu_custom_call.1} parent=1 // pred_check
      _
    $region123: #{tpu_custom_call.1} parent=1 // pred_check_branch
      %3439 = sbr.rel (0) target = $region125
    $region124: #{tpu_custom_call.1} parent=1 // pred_region
      %3440 = dma.done [#allocation5], 128
    $region125: #{tpu_custom_call.1} parent=1 // pred_fallthru
      _
    // Predicated region
    $region126: #{tpu_custom_call.1} parent=1 // pred_check
      _
    $region127: #{tpu_custom_call.1} parent=1 // pred_check_branch
      %3442 = sbr.rel (0) target = $region129
    $region128: #{tpu_custom_call.1} parent=1 // pred_region
      %3443 = dma.done [#allocation22], 128
    $region129: #{tpu_custom_call.1} parent=1 // pred_fallthru
      _
    // Predicated region
    $region130: #{tpu_custom_call.1} parent=1 // pred_check
      _
    $region131: #{tpu_custom_call.1} parent=1 // pred_check_branch
      %3445 = sbr.rel (0) target = $region133
    $region132: #{tpu_custom_call.1} parent=1 // pred_region
      %3446 = dma.done [#allocation22], 128
    $region133: #{tpu_custom_call.1} parent=1 // pred_fallthru
      _
    %3447 = vsyncpa [#allocation4], 1
    %3448 = vsyncpa [#allocation7], 1
    %3449 = vsyncpa [#allocation10], 1
    %3450 = vsyncpa [#allocation13], 1
    %3451 = vsyncpa [#allocation16], 1
    %3452 = vsyncpa [#allocation19], 1
    %3453 = vsyncpa [#allocation5], 1
    %3454 = vsyncpa [#allocation22], 1

</llo_original>
